<compile_context>
chip_gen: v6e
topology: v6e:2x2x1
jax: 0.10.0
libtpu: 0.0.40
codegen_flags: <defaults>
</compile_context>

<pallas_src>
import math

import jax
import jax.numpy as jnp
from jax import lax
from jax.experimental import pallas as pl
from jax.experimental.pallas import tpu as pltpu

# ---------------- small test hyper-parameters ----------------
VOCAB = 256
D_MODEL = 32
NUM_LAYERS = 2
DIM_FF = 64
D_STATE = 16
D_CONV = 4
EXPAND = 2
D_INNER = EXPAND * D_MODEL           # 64
DT_RANK = math.ceil(D_MODEL / 16)    # 2
BATCH = 2
SEQ = 8
BS = BATCH * SEQ                     # 16
TAU = 1.0


def _sigmoid(x):
    return 1.0 / (1.0 + jnp.exp(-x))


# ---------------------------------------------------------------------------
# Single fused kernel: embedding -> NUM_LAYERS x (gumbel-softmax -> Mamba block
# residual) -> MLP head.  One grid step; everything resident in VMEM.
# ---------------------------------------------------------------------------
def _fused_forward_kernel(tok_ref, u_ref, emb_ref,
                          ln_w_ref, ln_b_ref, w_in_ref, w_conv_ref, b_conv_ref,
                          wx_ref, w_dt_ref, b_dt_ref, a_log_t_ref, d_ref,
                          w_out_ref, fc_w1_ref, fc_b1_ref, fc_w2_ref, fc_b2_ref,
                          o_ref):
    f32 = jnp.float32
    eps = 1e-20

    # ---- embedding gather as a one-hot MXU matmul (keeps the gather fused) ----
    tok = tok_ref[...]                                            # (BS, 1) int32
    vocab_iota = lax.broadcasted_iota(jnp.int32, (BS, VOCAB), 1)
    onehot = (vocab_iota == tok).astype(f32)                      # (BS, VOCAB)
    x = jnp.dot(onehot, emb_ref[...], preferred_element_type=f32)  # (BS, D_MODEL)

    for l in range(NUM_LAYERS):
        # ---- BinarySoftmax: gumbel noise (from uniforms) + softmax(dim=-1) ----
        u = u_ref[l * BS:(l + 1) * BS, :]                         # (BS, D)
        g = -jnp.log(-jnp.log(u + eps) + eps)
        logits = (x + g) / TAU
        m = jnp.max(logits, axis=-1, keepdims=True)
        e = jnp.exp(logits - m)
        x2 = e / jnp.sum(e, axis=-1, keepdims=True)               # (BS, D)

        # ---- Block pre-norm (LayerNorm) ----
        mu = jnp.mean(x2, axis=-1, keepdims=True)
        xc = x2 - mu
        var = jnp.mean(xc * xc, axis=-1, keepdims=True)
        h = xc * lax.rsqrt(var + 1e-5) * ln_w_ref[l:l + 1, :] + ln_b_ref[l:l + 1, :]

        # ---- Mamba in_proj (no bias): (BS, D) @ (D, 2*D_INNER) ----
        xz = jnp.dot(h, w_in_ref[l], preferred_element_type=f32)  # (BS, 2*D_INNER)
        x_in = xz[:, :D_INNER]
        z = xz[:, D_INNER:]

        # ---- causal depthwise conv (k=D_CONV) + SiLU via in-vreg shifted windows
        #      (per-batch zero padding, no VMEM scratch, no cross-batch leakage) ----
        w_conv = w_conv_ref[l]                                    # (D_CONV, D_INNER)
        acc = b_conv_ref[l:l + 1, :] + w_conv[D_CONV - 1:D_CONV, :] * x_in
        for j in range(D_CONV - 1):
            sh = D_CONV - 1 - j
            pieces = []
            for b in range(BATCH):
                pieces.append(jnp.zeros((sh, D_INNER), f32))
                pieces.append(x_in[b * SEQ:(b + 1) * SEQ - sh, :])
            shifted = jnp.concatenate(pieces, axis=0)             # (BS, D_INNER)
            acc = acc + w_conv[j:j + 1, :] * shifted
        xconv = acc * _sigmoid(acc)                               # (BS, D_INNER)

        # ---- merged x_proj (dt | B | C) as ONE matmul, sliced in VMEM ----
        dbc = jnp.dot(xconv, wx_ref[l], preferred_element_type=f32)  # (BS, 34)
        dt_in = dbc[:, :DT_RANK]
        bmat = dbc[:, DT_RANK:DT_RANK + D_STATE]                  # (BS, D_STATE)
        cmat = dbc[:, DT_RANK + D_STATE:DT_RANK + 2 * D_STATE]    # (BS, D_STATE)

        # ---- dt_proj as VPU broadcasts (DT_RANK == 2) + stable softplus ----
        w_dt = w_dt_ref[l]                                        # (DT_RANK, D_INNER)
        dt_pre = b_dt_ref[l:l + 1, :]
        for r in range(DT_RANK):
            dt_pre = dt_pre + dt_in[:, r:r + 1] * w_dt[r:r + 1, :]
        dt = jnp.log(1.0 + jnp.exp(-jnp.abs(dt_pre))) + jnp.maximum(dt_pre, 0.0)

        # ---- selective SSM scan: B independent chains, fully unrolled (S = 8).
        #      exp(dt*A), dt*u, silu(z) and the D-skip are hoisted off the chain;
        #      the readout is a VPU multiply + sublane reduce (no in-loop MXU). ----
        a_t = -jnp.exp(a_log_t_ref[l])                            # (D_STATE, D_INNER)
        d_row = d_ref[l:l + 1, :]                                 # (1, D_INNER)
        gate = z * _sigmoid(z)                                    # (BS, D_INNER)
        dtu = dt * xconv                                          # (BS, D_INNER)
        y_blocks = []
        for b in range(BATCH):
            lo, hi = b * SEQ, (b + 1) * SEQ
            dt_b = dt[lo:hi, :]
            dtu_b = dtu[lo:hi, :]
            bT = jnp.transpose(bmat[lo:hi, :])                    # (D_STATE, SEQ)
            cT = jnp.transpose(cmat[lo:hi, :])                    # (D_STATE, SEQ)
            dA = [jnp.exp(a_t * dt_b[t:t + 1, :]) for t in range(SEQ)]     # hoisted EUP
            inj = [dtu_b[t:t + 1, :] * bT[:, t:t + 1] for t in range(SEQ)]  # (D_STATE, D_INNER)
            state = jnp.zeros((D_STATE, D_INNER), f32)
            ys = []
            for t in range(SEQ):
                state = dA[t] * state + inj[t]                    # recurrent chain (VPU only)
                ys.append(jnp.sum(state * cT[:, t:t + 1], axis=0, keepdims=True))
            y_blocks.append(jnp.concatenate(ys, axis=0))          # (SEQ, D_INNER)
        y = jnp.concatenate(y_blocks, axis=0)                     # (BS, D_INNER)
        y = (y + d_row * xconv) * gate                            # D-skip + z-gate (vectorized)

        # ---- out_proj (no bias) + residual with gumbel-softmax output ----
        out = jnp.dot(y, w_out_ref[l], preferred_element_type=f32)
        x = x2 + out                                              # (BS, D_MODEL)

    # ---- MLP head: fc1 + ReLU + fc2, single lane-dense (BS, VOCAB) store ----
    hid = jnp.dot(x, fc_w1_ref[...], preferred_element_type=f32) + fc_b1_ref[...]
    hid = jnp.maximum(hid, 0.0)
    o_ref[...] = jnp.dot(hid, fc_w2_ref[...], preferred_element_type=f32) + fc_b2_ref[...]


def _full_spec(shape):
    nd = len(shape)
    return pl.BlockSpec(shape, lambda i, _nd=nd: (0,) * _nd)


def transformer_model_forward(tokens, params, key):
    bsz, s = tokens.shape
    assert bsz == BATCH and s == SEQ
    bs = bsz * s
    noise = jax.random.uniform(key, (NUM_LAYERS * bs, D_MODEL), jnp.float32)
    tok2 = tokens.reshape(bs, 1).astype(jnp.int32)
    inputs = [
        tok2, noise, params["embedding"],
        params["ln_w"], params["ln_b"], params["w_in"], params["w_conv"],
        params["b_conv"], params["wx"], params["w_dt"], params["b_dt"],
        params["a_log_t"], params["d"], params["w_out"],
        params["fc_w1"], params["fc_b1"], params["fc_w2"], params["fc_b2"],
    ]
    logits = pl.pallas_call(
        _fused_forward_kernel,
        out_shape=jax.ShapeDtypeStruct((bs, VOCAB), jnp.float32),
        grid=(1,),
        in_specs=[_full_spec(a.shape) for a in inputs],
        out_specs=pl.BlockSpec((bs, VOCAB), lambda i: (0, 0)),
        compiler_params=pltpu.CompilerParams(dimension_semantics=("arbitrary",)),
    )(*inputs)
    additional_loss = jnp.float32(0.0)
    return logits.reshape(bsz, s, VOCAB), additional_loss


# ---------------------------------------------------------------------------
# Parameters (per-layer weights stacked along a leading layer axis so the whole
# model is passed to the single fused kernel as a handful of arrays).
# ---------------------------------------------------------------------------
def _dense(key, shape, fan_in):
    return jax.random.normal(key, shape, jnp.float32) / jnp.sqrt(jnp.float32(fan_in))


def init_params(key):
    ks = jax.random.split(key, 3 + NUM_LAYERS)
    params = {
        "embedding": 0.02 * jax.random.normal(ks[0], (VOCAB, D_MODEL), jnp.float32),
        "fc_w1": _dense(ks[1], (D_MODEL, DIM_FF), D_MODEL),
        "fc_b1": jnp.zeros((1, DIM_FF), jnp.float32),
        "fc_w2": _dense(ks[2], (DIM_FF, VOCAB), DIM_FF),
        "fc_b2": jnp.zeros((1, VOCAB), jnp.float32),
    }
    names = ["ln_w", "ln_b", "w_in", "w_conv", "b_conv", "wx", "w_dt", "b_dt",
             "a_log_t", "d", "w_out"]
    fields = {n: [] for n in names}
    for i in range(NUM_LAYERS):
        lk = jax.random.split(ks[3 + i], 7)
        fields["ln_w"].append(jnp.ones((D_MODEL,), jnp.float32))
        fields["ln_b"].append(jnp.zeros((D_MODEL,), jnp.float32))
        fields["w_in"].append(_dense(lk[0], (D_MODEL, 2 * D_INNER), D_MODEL))
        fields["w_conv"].append(_dense(lk[1], (D_CONV, D_INNER), D_CONV))
        fields["b_conv"].append(jnp.zeros((D_INNER,), jnp.float32))
        # merged x_proj weight: [dt | B | C] along the output dim -> one MXU push
        fields["wx"].append(jnp.concatenate(
            [_dense(lk[2], (D_INNER, DT_RANK), D_INNER),
             _dense(lk[3], (D_INNER, D_STATE), D_INNER),
             _dense(lk[4], (D_INNER, D_STATE), D_INNER)], axis=1))
        fields["w_dt"].append(_dense(lk[5], (DT_RANK, D_INNER), DT_RANK))
        fields["b_dt"].append(jnp.log(jnp.expm1(jnp.full((D_INNER,), 0.01, jnp.float32))))
        # A stored transposed: (D_STATE, D_INNER), A_T[n, i] = n + 1
        fields["a_log_t"].append(jnp.log(jnp.tile(
            jnp.arange(1, D_STATE + 1, dtype=jnp.float32)[:, None], (1, D_INNER))))
        fields["d"].append(jnp.ones((D_INNER,), jnp.float32))
        fields["w_out"].append(_dense(lk[6], (D_INNER, D_MODEL), D_INNER))
    for n in names:
        params[n] = jnp.stack(fields[n], axis=0)
    return params


if __name__ == "__main__":
    key = jax.random.PRNGKey(0)
    pkey, dkey, nkey = jax.random.split(key, 3)
    params = init_params(pkey)
    tokens = jax.random.randint(dkey, (BATCH, SEQ), 0, VOCAB, dtype=jnp.int32)

    fwd = jax.jit(transformer_model_forward)
    logits, add_loss = fwd(tokens, params, nkey)
    jax.block_until_ready(logits)

    assert logits.shape == (BATCH, SEQ, VOCAB)
    assert logits.dtype == jnp.float32
    assert bool(jnp.all(jnp.isfinite(logits)))
    print("KERNEL_OK")
</pallas_src>

<mosaic_0001>
module attributes {stable_mosaic.version = 11 : i64} {
  func.func @_fused_forward_kernel(%arg0: i32, %arg1: memref<16x1xi32, #tpu.memory_space<vmem>>, %arg2: memref<32x32xf32, #tpu.memory_space<vmem>>, %arg3: memref<256x32xf32, #tpu.memory_space<vmem>>, %arg4: memref<2x32xf32, #tpu.memory_space<vmem>>, %arg5: memref<2x32xf32, #tpu.memory_space<vmem>>, %arg6: memref<2x32x128xf32, #tpu.memory_space<vmem>>, %arg7: memref<2x4x64xf32, #tpu.memory_space<vmem>>, %arg8: memref<2x64xf32, #tpu.memory_space<vmem>>, %arg9: memref<2x64x34xf32, #tpu.memory_space<vmem>>, %arg10: memref<2x2x64xf32, #tpu.memory_space<vmem>>, %arg11: memref<2x64xf32, #tpu.memory_space<vmem>>, %arg12: memref<2x16x64xf32, #tpu.memory_space<vmem>>, %arg13: memref<2x64xf32, #tpu.memory_space<vmem>>, %arg14: memref<2x64x32xf32, #tpu.memory_space<vmem>>, %arg15: memref<32x64xf32, #tpu.memory_space<vmem>>, %arg16: memref<1x64xf32, #tpu.memory_space<vmem>>, %arg17: memref<64x256xf32, #tpu.memory_space<vmem>>, %arg18: memref<1x256xf32, #tpu.memory_space<vmem>>, %arg19: memref<16x256xf32, #tpu.memory_space<vmem>>) attributes {dimension_semantics = [#tpu.dimension_semantics<arbitrary>], iteration_bounds = array<i64: 1>, scalar_prefetch = 0 : i64, scratch_operands = 0 : i64, tpu.core_type = #tpu.core_type<tc>, window_params = [{pipeline_mode = #tpu.pipeline_mode<synchronous>, transform_indices = @transform_0, window_bounds = array<i64: 16, 1>}, {pipeline_mode = #tpu.pipeline_mode<synchronous>, transform_indices = @transform_1, window_bounds = array<i64: 32, 32>}, {pipeline_mode = #tpu.pipeline_mode<synchronous>, transform_indices = @transform_2, window_bounds = array<i64: 256, 32>}, {pipeline_mode = #tpu.pipeline_mode<synchronous>, transform_indices = @transform_3, window_bounds = array<i64: 2, 32>}, {pipeline_mode = #tpu.pipeline_mode<synchronous>, transform_indices = @transform_4, window_bounds = array<i64: 2, 32>}, {pipeline_mode = #tpu.pipeline_mode<synchronous>, transform_indices = @transform_5, window_bounds = array<i64: 2, 32, 128>}, {pipeline_mode = #tpu.pipeline_mode<synchronous>, transform_indices = @transform_6, window_bounds = array<i64: 2, 4, 64>}, {pipeline_mode = #tpu.pipeline_mode<synchronous>, transform_indices = @transform_7, window_bounds = array<i64: 2, 64>}, {pipeline_mode = #tpu.pipeline_mode<synchronous>, transform_indices = @transform_8, window_bounds = array<i64: 2, 64, 34>}, {pipeline_mode = #tpu.pipeline_mode<synchronous>, transform_indices = @transform_9, window_bounds = array<i64: 2, 2, 64>}, {pipeline_mode = #tpu.pipeline_mode<synchronous>, transform_indices = @transform_10, window_bounds = array<i64: 2, 64>}, {pipeline_mode = #tpu.pipeline_mode<synchronous>, transform_indices = @transform_11, window_bounds = array<i64: 2, 16, 64>}, {pipeline_mode = #tpu.pipeline_mode<synchronous>, transform_indices = @transform_12, window_bounds = array<i64: 2, 64>}, {pipeline_mode = #tpu.pipeline_mode<synchronous>, transform_indices = @transform_13, window_bounds = array<i64: 2, 64, 32>}, {pipeline_mode = #tpu.pipeline_mode<synchronous>, transform_indices = @transform_14, window_bounds = array<i64: 32, 64>}, {pipeline_mode = #tpu.pipeline_mode<synchronous>, transform_indices = @transform_15, window_bounds = array<i64: 1, 64>}, {pipeline_mode = #tpu.pipeline_mode<synchronous>, transform_indices = @transform_16, window_bounds = array<i64: 64, 256>}, {pipeline_mode = #tpu.pipeline_mode<synchronous>, transform_indices = @transform_17, window_bounds = array<i64: 1, 256>}, {pipeline_mode = #tpu.pipeline_mode<synchronous>, transform_indices = @transform_18, window_bounds = array<i64: 16, 256>}]} {
    %c0 = arith.constant 0 : index
    %c0_0 = arith.constant 0 : index
    %0 = vector.load %arg1[%c0, %c0_0] : memref<16x1xi32, #tpu.memory_space<vmem>>, vector<16x1xi32>
    %1 = tpu.iota {dimensions = array<i32: 1>} : vector<16x256xi32>
    %2 = vector.broadcast %0 : vector<16x1xi32> to vector<16x256xi32>
    %3 = arith.cmpi eq, %1, %2 : vector<16x256xi32>
    %4 = arith.extui %3 : vector<16x256xi1> to vector<16x256xi32>
    %5 = arith.sitofp %4 : vector<16x256xi32> to vector<16x256xf32>
    %c0_1 = arith.constant 0 : index
    %c0_2 = arith.constant 0 : index
    %6 = vector.load %arg3[%c0_1, %c0_2] : memref<256x32xf32, #tpu.memory_space<vmem>>, vector<256x32xf32>
    %cst = arith.constant dense<0.000000e+00> : vector<16x32xf32>
    %7 = tpu.matmul %5, %6, %cst {dimension_numbers = #tpu.dot_dimension_numbers<[1], [0], [0], [1], [0, 0, 1, 1], [], []>} : vector<16x256xf32>, vector<256x32xf32>, vector<16x32xf32> -> vector<16x32xf32>
    %c0_3 = arith.constant 0 : index
    %c0_4 = arith.constant 0 : index
    %8 = vector.load %arg2[%c0_3, %c0_4] : memref<32x32xf32, #tpu.memory_space<vmem>>, vector<16x32xf32>
    %cst_5 = arith.constant 9.99999968E-21 : f32
    %9 = vector.broadcast %cst_5 : f32 to vector<16x32xf32>
    %10 = arith.addf %8, %9 : vector<16x32xf32>
    %11 = math.log %10 : vector<16x32xf32>
    %cst_6 = arith.constant 0.000000e+00 : f32
    %12 = vector.broadcast %cst_6 : f32 to vector<16x32xf32>
    %13 = arith.subf %12, %11 : vector<16x32xf32>
    %cst_7 = arith.constant 9.99999968E-21 : f32
    %14 = vector.broadcast %cst_7 : f32 to vector<16x32xf32>
    %15 = arith.addf %13, %14 : vector<16x32xf32>
    %16 = math.log %15 : vector<16x32xf32>
    %cst_8 = arith.constant 0.000000e+00 : f32
    %17 = vector.broadcast %cst_8 : f32 to vector<16x32xf32>
    %18 = arith.subf %17, %16 : vector<16x32xf32>
    %19 = arith.addf %7, %18 : vector<16x32xf32>
    %cst_9 = arith.constant 1.000000e+00 : f32
    %20 = vector.broadcast %cst_9 : f32 to vector<16x32xf32>
    %21 = arith.divf %19, %20 : vector<16x32xf32>
    %cst_10 = arith.constant dense<0xFF800000> : vector<16xf32>
    %22 = vector.multi_reduction <maximumf>, %21, %cst_10 [1] : vector<16x32xf32> to vector<16xf32>
    %23 = vector.shape_cast %22 : vector<16xf32> to vector<16x1xf32>
    %24 = vector.broadcast %23 : vector<16x1xf32> to vector<16x32xf32>
    %25 = arith.subf %21, %24 : vector<16x32xf32>
    %26 = math.exp %25 : vector<16x32xf32>
    %cst_11 = arith.constant dense<0.000000e+00> : vector<16xf32>
    %27 = vector.multi_reduction <add>, %26, %cst_11 [1] : vector<16x32xf32> to vector<16xf32>
    %28 = vector.shape_cast %27 : vector<16xf32> to vector<16x1xf32>
    %29 = vector.broadcast %28 : vector<16x1xf32> to vector<16x32xf32>
    %30 = arith.divf %26, %29 : vector<16x32xf32>
    %cst_12 = arith.constant dense<0.000000e+00> : vector<16xf32>
    %31 = vector.multi_reduction <add>, %30, %cst_12 [1] : vector<16x32xf32> to vector<16xf32>
    %32 = vector.shape_cast %31 : vector<16xf32> to vector<16x1xf32>
    %cst_13 = arith.constant 3.200000e+01 : f32
    %33 = vector.broadcast %cst_13 : f32 to vector<16x1xf32>
    %34 = arith.divf %32, %33 : vector<16x1xf32>
    %35 = vector.broadcast %34 : vector<16x1xf32> to vector<16x32xf32>
    %36 = arith.subf %30, %35 : vector<16x32xf32>
    %37 = arith.mulf %36, %36 : vector<16x32xf32>
    %cst_14 = arith.constant dense<0.000000e+00> : vector<16xf32>
    %38 = vector.multi_reduction <add>, %37, %cst_14 [1] : vector<16x32xf32> to vector<16xf32>
    %39 = vector.shape_cast %38 : vector<16xf32> to vector<16x1xf32>
    %cst_15 = arith.constant 3.200000e+01 : f32
    %40 = vector.broadcast %cst_15 : f32 to vector<16x1xf32>
    %41 = arith.divf %39, %40 : vector<16x1xf32>
    %cst_16 = arith.constant 9.99999974E-6 : f32
    %42 = vector.broadcast %cst_16 : f32 to vector<16x1xf32>
    %43 = arith.addf %41, %42 : vector<16x1xf32>
    %44 = math.rsqrt %43 : vector<16x1xf32>
    %45 = vector.broadcast %44 : vector<16x1xf32> to vector<16x32xf32>
    %46 = arith.mulf %36, %45 : vector<16x32xf32>
    %c0_17 = arith.constant 0 : index
    %c0_18 = arith.constant 0 : index
    %47 = vector.load %arg4[%c0_17, %c0_18] : memref<2x32xf32, #tpu.memory_space<vmem>>, vector<1x32xf32>
    %48 = vector.broadcast %47 : vector<1x32xf32> to vector<16x32xf32>
    %49 = arith.mulf %46, %48 : vector<16x32xf32>
    %c0_19 = arith.constant 0 : index
    %c0_20 = arith.constant 0 : index
    %50 = vector.load %arg5[%c0_19, %c0_20] : memref<2x32xf32, #tpu.memory_space<vmem>>, vector<1x32xf32>
    %51 = vector.broadcast %50 : vector<1x32xf32> to vector<16x32xf32>
    %52 = arith.addf %49, %51 : vector<16x32xf32>
    %c0_21 = arith.constant 0 : index
    %c0_22 = arith.constant 0 : index
    %c0_23 = arith.constant 0 : index
    %53 = vector.load %arg6[%c0_21, %c0_22, %c0_23] : memref<2x32x128xf32, #tpu.memory_space<vmem>>, vector<1x32x128xf32>
    %54 = vector.shape_cast %53 : vector<1x32x128xf32> to vector<32x128xf32>
    %cst_24 = arith.constant dense<0.000000e+00> : vector<16x128xf32>
    %55 = tpu.matmul %52, %54, %cst_24 {dimension_numbers = #tpu.dot_dimension_numbers<[1], [0], [0], [1], [0, 0, 1, 1], [], []>} : vector<16x32xf32>, vector<32x128xf32>, vector<16x128xf32> -> vector<16x128xf32>
    %56 = vector.extract_strided_slice %55 {offsets = [0, 0], sizes = [16, 64], strides = [1, 1]} : vector<16x128xf32> to vector<16x64xf32>
    %57 = vector.extract_strided_slice %55 {offsets = [0, 64], sizes = [16, 64], strides = [1, 1]} : vector<16x128xf32> to vector<16x64xf32>
    %c0_25 = arith.constant 0 : index
    %c0_26 = arith.constant 0 : index
    %c0_27 = arith.constant 0 : index
    %58 = vector.load %arg7[%c0_25, %c0_26, %c0_27] : memref<2x4x64xf32, #tpu.memory_space<vmem>>, vector<1x4x64xf32>
    %59 = vector.shape_cast %58 : vector<1x4x64xf32> to vector<4x64xf32>
    %c0_28 = arith.constant 0 : index
    %c0_29 = arith.constant 0 : index
    %60 = vector.load %arg8[%c0_28, %c0_29] : memref<2x64xf32, #tpu.memory_space<vmem>>, vector<1x64xf32>
    %61 = vector.extract_strided_slice %59 {offsets = [3, 0], sizes = [1, 64], strides = [1, 1]} : vector<4x64xf32> to vector<1x64xf32>
    %62 = vector.broadcast %61 : vector<1x64xf32> to vector<16x64xf32>
    %63 = arith.mulf %62, %56 : vector<16x64xf32>
    %64 = vector.broadcast %60 : vector<1x64xf32> to vector<16x64xf32>
    %65 = arith.addf %64, %63 : vector<16x64xf32>
    %cst_30 = arith.constant 0.000000e+00 : f32
    %66 = vector.broadcast %cst_30 : f32 to vector<3x64xf32>
    %67 = vector.extract_strided_slice %56 {offsets = [0, 0], sizes = [5, 64], strides = [1, 1]} : vector<16x64xf32> to vector<5x64xf32>
    %cst_31 = arith.constant 0.000000e+00 : f32
    %68 = vector.broadcast %cst_31 : f32 to vector<3x64xf32>
    %69 = vector.extract_strided_slice %56 {offsets = [8, 0], sizes = [5, 64], strides = [1, 1]} : vector<16x64xf32> to vector<5x64xf32>
    %70 = tpu.concatenate %66, %67, %68, %69 in 0 : vector<3x64xf32>, vector<5x64xf32>, vector<3x64xf32>, vector<5x64xf32> -> vector<16x64xf32>
    %71 = vector.extract_strided_slice %59 {offsets = [0, 0], sizes = [1, 64], strides = [1, 1]} : vector<4x64xf32> to vector<1x64xf32>
    %72 = vector.broadcast %71 : vector<1x64xf32> to vector<16x64xf32>
    %73 = arith.mulf %72, %70 : vector<16x64xf32>
    %74 = arith.addf %65, %73 : vector<16x64xf32>
    %cst_32 = arith.constant 0.000000e+00 : f32
    %75 = vector.broadcast %cst_32 : f32 to vector<2x64xf32>
    %76 = vector.extract_strided_slice %56 {offsets = [0, 0], sizes = [6, 64], strides = [1, 1]} : vector<16x64xf32> to vector<6x64xf32>
    %cst_33 = arith.constant 0.000000e+00 : f32
    %77 = vector.broadcast %cst_33 : f32 to vector<2x64xf32>
    %78 = vector.extract_strided_slice %56 {offsets = [8, 0], sizes = [6, 64], strides = [1, 1]} : vector<16x64xf32> to vector<6x64xf32>
    %79 = tpu.concatenate %75, %76, %77, %78 in 0 : vector<2x64xf32>, vector<6x64xf32>, vector<2x64xf32>, vector<6x64xf32> -> vector<16x64xf32>
    %80 = vector.extract_strided_slice %59 {offsets = [1, 0], sizes = [1, 64], strides = [1, 1]} : vector<4x64xf32> to vector<1x64xf32>
    %81 = vector.broadcast %80 : vector<1x64xf32> to vector<16x64xf32>
    %82 = arith.mulf %81, %79 : vector<16x64xf32>
    %83 = arith.addf %74, %82 : vector<16x64xf32>
    %cst_34 = arith.constant 0.000000e+00 : f32
    %84 = vector.broadcast %cst_34 : f32 to vector<1x64xf32>
    %85 = vector.extract_strided_slice %56 {offsets = [0, 0], sizes = [7, 64], strides = [1, 1]} : vector<16x64xf32> to vector<7x64xf32>
    %cst_35 = arith.constant 0.000000e+00 : f32
    %86 = vector.broadcast %cst_35 : f32 to vector<1x64xf32>
    %87 = vector.extract_strided_slice %56 {offsets = [8, 0], sizes = [7, 64], strides = [1, 1]} : vector<16x64xf32> to vector<7x64xf32>
    %88 = tpu.concatenate %84, %85, %86, %87 in 0 : vector<1x64xf32>, vector<7x64xf32>, vector<1x64xf32>, vector<7x64xf32> -> vector<16x64xf32>
    %89 = vector.extract_strided_slice %59 {offsets = [2, 0], sizes = [1, 64], strides = [1, 1]} : vector<4x64xf32> to vector<1x64xf32>
    %90 = vector.broadcast %89 : vector<1x64xf32> to vector<16x64xf32>
    %91 = arith.mulf %90, %88 : vector<16x64xf32>
    %92 = arith.addf %83, %91 : vector<16x64xf32>
    %cst_36 = arith.constant 0.000000e+00 : f32
    %93 = vector.broadcast %cst_36 : f32 to vector<16x64xf32>
    %94 = arith.subf %93, %92 : vector<16x64xf32>
    %95 = math.exp %94 : vector<16x64xf32>
    %cst_37 = arith.constant 1.000000e+00 : f32
    %96 = vector.broadcast %cst_37 : f32 to vector<16x64xf32>
    %97 = arith.addf %96, %95 : vector<16x64xf32>
    %cst_38 = arith.constant 1.000000e+00 : f32
    %98 = vector.broadcast %cst_38 : f32 to vector<16x64xf32>
    %99 = arith.divf %98, %97 : vector<16x64xf32>
    %100 = arith.mulf %92, %99 : vector<16x64xf32>
    %c0_39 = arith.constant 0 : index
    %c0_40 = arith.constant 0 : index
    %c0_41 = arith.constant 0 : index
    %101 = vector.load %arg9[%c0_39, %c0_40, %c0_41] : memref<2x64x34xf32, #tpu.memory_space<vmem>>, vector<1x64x34xf32>
    %102 = vector.shape_cast %101 : vector<1x64x34xf32> to vector<64x34xf32>
    %cst_42 = arith.constant dense<0.000000e+00> : vector<16x34xf32>
    %103 = tpu.matmul %100, %102, %cst_42 {dimension_numbers = #tpu.dot_dimension_numbers<[1], [0], [0], [1], [0, 0, 1, 1], [], []>} : vector<16x64xf32>, vector<64x34xf32>, vector<16x34xf32> -> vector<16x34xf32>
    %104 = vector.extract_strided_slice %103 {offsets = [0, 0], sizes = [16, 2], strides = [1, 1]} : vector<16x34xf32> to vector<16x2xf32>
    %105 = vector.extract_strided_slice %103 {offsets = [0, 2], sizes = [16, 16], strides = [1, 1]} : vector<16x34xf32> to vector<16x16xf32>
    %106 = vector.extract_strided_slice %103 {offsets = [0, 18], sizes = [16, 16], strides = [1, 1]} : vector<16x34xf32> to vector<16x16xf32>
    %c0_43 = arith.constant 0 : index
    %c0_44 = arith.constant 0 : index
    %c0_45 = arith.constant 0 : index
    %107 = vector.load %arg10[%c0_43, %c0_44, %c0_45] : memref<2x2x64xf32, #tpu.memory_space<vmem>>, vector<1x2x64xf32>
    %108 = vector.shape_cast %107 : vector<1x2x64xf32> to vector<2x64xf32>
    %c0_46 = arith.constant 0 : index
    %c0_47 = arith.constant 0 : index
    %109 = vector.load %arg11[%c0_46, %c0_47] : memref<2x64xf32, #tpu.memory_space<vmem>>, vector<1x64xf32>
    %110 = vector.extract_strided_slice %104 {offsets = [0, 0], sizes = [16, 1], strides = [1, 1]} : vector<16x2xf32> to vector<16x1xf32>
    %111 = vector.extract_strided_slice %108 {offsets = [0, 0], sizes = [1, 64], strides = [1, 1]} : vector<2x64xf32> to vector<1x64xf32>
    %112 = vector.broadcast %110 : vector<16x1xf32> to vector<16x64xf32>
    %113 = vector.broadcast %111 : vector<1x64xf32> to vector<16x64xf32>
    %114 = arith.mulf %112, %113 : vector<16x64xf32>
    %115 = vector.broadcast %109 : vector<1x64xf32> to vector<16x64xf32>
    %116 = arith.addf %115, %114 : vector<16x64xf32>
    %117 = vector.extract_strided_slice %104 {offsets = [0, 1], sizes = [16, 1], strides = [1, 1]} : vector<16x2xf32> to vector<16x1xf32>
    %118 = vector.extract_strided_slice %108 {offsets = [1, 0], sizes = [1, 64], strides = [1, 1]} : vector<2x64xf32> to vector<1x64xf32>
    %119 = vector.broadcast %117 : vector<16x1xf32> to vector<16x64xf32>
    %120 = vector.broadcast %118 : vector<1x64xf32> to vector<16x64xf32>
    %121 = arith.mulf %119, %120 : vector<16x64xf32>
    %122 = arith.addf %116, %121 : vector<16x64xf32>
    %123 = math.absf %122 : vector<16x64xf32>
    %cst_48 = arith.constant 0.000000e+00 : f32
    %124 = vector.broadcast %cst_48 : f32 to vector<16x64xf32>
    %125 = arith.subf %124, %123 : vector<16x64xf32>
    %126 = math.exp %125 : vector<16x64xf32>
    %cst_49 = arith.constant 1.000000e+00 : f32
    %127 = vector.broadcast %cst_49 : f32 to vector<16x64xf32>
    %128 = arith.addf %127, %126 : vector<16x64xf32>
    %129 = math.log %128 : vector<16x64xf32>
    %cst_50 = arith.constant 0.000000e+00 : f32
    %130 = vector.broadcast %cst_50 : f32 to vector<16x64xf32>
    %131 = arith.maximumf %122, %130 : vector<16x64xf32>
    %132 = arith.addf %129, %131 : vector<16x64xf32>
    %c0_51 = arith.constant 0 : index
    %c0_52 = arith.constant 0 : index
    %c0_53 = arith.constant 0 : index
    %133 = vector.load %arg12[%c0_51, %c0_52, %c0_53] : memref<2x16x64xf32, #tpu.memory_space<vmem>>, vector<1x16x64xf32>
    %134 = vector.shape_cast %133 : vector<1x16x64xf32> to vector<16x64xf32>
    %135 = math.exp %134 : vector<16x64xf32>
    %cst_54 = arith.constant 0.000000e+00 : f32
    %136 = vector.broadcast %cst_54 : f32 to vector<16x64xf32>
    %137 = arith.subf %136, %135 : vector<16x64xf32>
    %c0_55 = arith.constant 0 : index
    %c0_56 = arith.constant 0 : index
    %138 = vector.load %arg13[%c0_55, %c0_56] : memref<2x64xf32, #tpu.memory_space<vmem>>, vector<1x64xf32>
    %cst_57 = arith.constant 0.000000e+00 : f32
    %139 = vector.broadcast %cst_57 : f32 to vector<16x64xf32>
    %140 = arith.subf %139, %57 : vector<16x64xf32>
    %141 = math.exp %140 : vector<16x64xf32>
    %cst_58 = arith.constant 1.000000e+00 : f32
    %142 = vector.broadcast %cst_58 : f32 to vector<16x64xf32>
    %143 = arith.addf %142, %141 : vector<16x64xf32>
    %cst_59 = arith.constant 1.000000e+00 : f32
    %144 = vector.broadcast %cst_59 : f32 to vector<16x64xf32>
    %145 = arith.divf %144, %143 : vector<16x64xf32>
    %146 = arith.mulf %57, %145 : vector<16x64xf32>
    %147 = arith.mulf %132, %100 : vector<16x64xf32>
    %148 = vector.extract_strided_slice %132 {offsets = [0, 0], sizes = [8, 64], strides = [1, 1]} : vector<16x64xf32> to vector<8x64xf32>
    %149 = vector.extract_strided_slice %147 {offsets = [0, 0], sizes = [8, 64], strides = [1, 1]} : vector<16x64xf32> to vector<8x64xf32>
    %150 = vector.extract_strided_slice %105 {offsets = [0, 0], sizes = [8, 16], strides = [1, 1]} : vector<16x16xf32> to vector<8x16xf32>
    %151 = tpu.transpose %150, [1, 0] : vector<8x16xf32> -> vector<16x8xf32>
    %152 = vector.extract_strided_slice %106 {offsets = [0, 0], sizes = [8, 16], strides = [1, 1]} : vector<16x16xf32> to vector<8x16xf32>
    %153 = tpu.transpose %152, [1, 0] : vector<8x16xf32> -> vector<16x8xf32>
    %154 = vector.extract_strided_slice %148 {offsets = [0, 0], sizes = [1, 64], strides = [1, 1]} : vector<8x64xf32> to vector<1x64xf32>
    %155 = vector.broadcast %154 : vector<1x64xf32> to vector<16x64xf32>
    %156 = arith.mulf %137, %155 : vector<16x64xf32>
    %157 = math.exp %156 : vector<16x64xf32>
    %158 = vector.extract_strided_slice %148 {offsets = [1, 0], sizes = [1, 64], strides = [1, 1]} : vector<8x64xf32> to vector<1x64xf32>
    %159 = vector.broadcast %158 : vector<1x64xf32> to vector<16x64xf32>
    %160 = arith.mulf %137, %159 : vector<16x64xf32>
    %161 = math.exp %160 : vector<16x64xf32>
    %162 = vector.extract_strided_slice %148 {offsets = [2, 0], sizes = [1, 64], strides = [1, 1]} : vector<8x64xf32> to vector<1x64xf32>
    %163 = vector.broadcast %162 : vector<1x64xf32> to vector<16x64xf32>
    %164 = arith.mulf %137, %163 : vector<16x64xf32>
    %165 = math.exp %164 : vector<16x64xf32>
    %166 = vector.extract_strided_slice %148 {offsets = [3, 0], sizes = [1, 64], strides = [1, 1]} : vector<8x64xf32> to vector<1x64xf32>
    %167 = vector.broadcast %166 : vector<1x64xf32> to vector<16x64xf32>
    %168 = arith.mulf %137, %167 : vector<16x64xf32>
    %169 = math.exp %168 : vector<16x64xf32>
    %170 = vector.extract_strided_slice %148 {offsets = [4, 0], sizes = [1, 64], strides = [1, 1]} : vector<8x64xf32> to vector<1x64xf32>
    %171 = vector.broadcast %170 : vector<1x64xf32> to vector<16x64xf32>
    %172 = arith.mulf %137, %171 : vector<16x64xf32>
    %173 = math.exp %172 : vector<16x64xf32>
    %174 = vector.extract_strided_slice %148 {offsets = [5, 0], sizes = [1, 64], strides = [1, 1]} : vector<8x64xf32> to vector<1x64xf32>
    %175 = vector.broadcast %174 : vector<1x64xf32> to vector<16x64xf32>
    %176 = arith.mulf %137, %175 : vector<16x64xf32>
    %177 = math.exp %176 : vector<16x64xf32>
    %178 = vector.extract_strided_slice %148 {offsets = [6, 0], sizes = [1, 64], strides = [1, 1]} : vector<8x64xf32> to vector<1x64xf32>
    %179 = vector.broadcast %178 : vector<1x64xf32> to vector<16x64xf32>
    %180 = arith.mulf %137, %179 : vector<16x64xf32>
    %181 = math.exp %180 : vector<16x64xf32>
    %182 = vector.extract_strided_slice %148 {offsets = [7, 0], sizes = [1, 64], strides = [1, 1]} : vector<8x64xf32> to vector<1x64xf32>
    %183 = vector.broadcast %182 : vector<1x64xf32> to vector<16x64xf32>
    %184 = arith.mulf %137, %183 : vector<16x64xf32>
    %185 = math.exp %184 : vector<16x64xf32>
    %186 = vector.extract_strided_slice %149 {offsets = [0, 0], sizes = [1, 64], strides = [1, 1]} : vector<8x64xf32> to vector<1x64xf32>
    %187 = vector.extract_strided_slice %151 {offsets = [0, 0], sizes = [16, 1], strides = [1, 1]} : vector<16x8xf32> to vector<16x1xf32>
    %188 = vector.broadcast %186 : vector<1x64xf32> to vector<16x64xf32>
    %189 = vector.broadcast %187 : vector<16x1xf32> to vector<16x64xf32>
    %190 = arith.mulf %188, %189 : vector<16x64xf32>
    %191 = vector.extract_strided_slice %149 {offsets = [1, 0], sizes = [1, 64], strides = [1, 1]} : vector<8x64xf32> to vector<1x64xf32>
    %192 = vector.extract_strided_slice %151 {offsets = [0, 1], sizes = [16, 1], strides = [1, 1]} : vector<16x8xf32> to vector<16x1xf32>
    %193 = vector.broadcast %191 : vector<1x64xf32> to vector<16x64xf32>
    %194 = vector.broadcast %192 : vector<16x1xf32> to vector<16x64xf32>
    %195 = arith.mulf %193, %194 : vector<16x64xf32>
    %196 = vector.extract_strided_slice %149 {offsets = [2, 0], sizes = [1, 64], strides = [1, 1]} : vector<8x64xf32> to vector<1x64xf32>
    %197 = vector.extract_strided_slice %151 {offsets = [0, 2], sizes = [16, 1], strides = [1, 1]} : vector<16x8xf32> to vector<16x1xf32>
    %198 = vector.broadcast %196 : vector<1x64xf32> to vector<16x64xf32>
    %199 = vector.broadcast %197 : vector<16x1xf32> to vector<16x64xf32>
    %200 = arith.mulf %198, %199 : vector<16x64xf32>
    %201 = vector.extract_strided_slice %149 {offsets = [3, 0], sizes = [1, 64], strides = [1, 1]} : vector<8x64xf32> to vector<1x64xf32>
    %202 = vector.extract_strided_slice %151 {offsets = [0, 3], sizes = [16, 1], strides = [1, 1]} : vector<16x8xf32> to vector<16x1xf32>
    %203 = vector.broadcast %201 : vector<1x64xf32> to vector<16x64xf32>
    %204 = vector.broadcast %202 : vector<16x1xf32> to vector<16x64xf32>
    %205 = arith.mulf %203, %204 : vector<16x64xf32>
    %206 = vector.extract_strided_slice %149 {offsets = [4, 0], sizes = [1, 64], strides = [1, 1]} : vector<8x64xf32> to vector<1x64xf32>
    %207 = vector.extract_strided_slice %151 {offsets = [0, 4], sizes = [16, 1], strides = [1, 1]} : vector<16x8xf32> to vector<16x1xf32>
    %208 = vector.broadcast %206 : vector<1x64xf32> to vector<16x64xf32>
    %209 = vector.broadcast %207 : vector<16x1xf32> to vector<16x64xf32>
    %210 = arith.mulf %208, %209 : vector<16x64xf32>
    %211 = vector.extract_strided_slice %149 {offsets = [5, 0], sizes = [1, 64], strides = [1, 1]} : vector<8x64xf32> to vector<1x64xf32>
    %212 = vector.extract_strided_slice %151 {offsets = [0, 5], sizes = [16, 1], strides = [1, 1]} : vector<16x8xf32> to vector<16x1xf32>
    %213 = vector.broadcast %211 : vector<1x64xf32> to vector<16x64xf32>
    %214 = vector.broadcast %212 : vector<16x1xf32> to vector<16x64xf32>
    %215 = arith.mulf %213, %214 : vector<16x64xf32>
    %216 = vector.extract_strided_slice %149 {offsets = [6, 0], sizes = [1, 64], strides = [1, 1]} : vector<8x64xf32> to vector<1x64xf32>
    %217 = vector.extract_strided_slice %151 {offsets = [0, 6], sizes = [16, 1], strides = [1, 1]} : vector<16x8xf32> to vector<16x1xf32>
    %218 = vector.broadcast %216 : vector<1x64xf32> to vector<16x64xf32>
    %219 = vector.broadcast %217 : vector<16x1xf32> to vector<16x64xf32>
    %220 = arith.mulf %218, %219 : vector<16x64xf32>
    %221 = vector.extract_strided_slice %149 {offsets = [7, 0], sizes = [1, 64], strides = [1, 1]} : vector<8x64xf32> to vector<1x64xf32>
    %222 = vector.extract_strided_slice %151 {offsets = [0, 7], sizes = [16, 1], strides = [1, 1]} : vector<16x8xf32> to vector<16x1xf32>
    %223 = vector.broadcast %221 : vector<1x64xf32> to vector<16x64xf32>
    %224 = vector.broadcast %222 : vector<16x1xf32> to vector<16x64xf32>
    %225 = arith.mulf %223, %224 : vector<16x64xf32>
    %cst_60 = arith.constant 0.000000e+00 : f32
    %226 = vector.broadcast %cst_60 : f32 to vector<16x64xf32>
    %227 = arith.mulf %157, %226 : vector<16x64xf32>
    %228 = arith.addf %227, %190 : vector<16x64xf32>
    %229 = vector.extract_strided_slice %153 {offsets = [0, 0], sizes = [16, 1], strides = [1, 1]} : vector<16x8xf32> to vector<16x1xf32>
    %230 = vector.broadcast %229 : vector<16x1xf32> to vector<16x64xf32>
    %231 = arith.mulf %228, %230 : vector<16x64xf32>
    %cst_61 = arith.constant dense<0.000000e+00> : vector<64xf32>
    %232 = vector.multi_reduction <add>, %231, %cst_61 [0] : vector<16x64xf32> to vector<64xf32>
    %233 = vector.shape_cast %232 : vector<64xf32> to vector<1x64xf32>
    %234 = arith.mulf %161, %228 : vector<16x64xf32>
    %235 = arith.addf %234, %195 : vector<16x64xf32>
    %236 = vector.extract_strided_slice %153 {offsets = [0, 1], sizes = [16, 1], strides = [1, 1]} : vector<16x8xf32> to vector<16x1xf32>
    %237 = vector.broadcast %236 : vector<16x1xf32> to vector<16x64xf32>
    %238 = arith.mulf %235, %237 : vector<16x64xf32>
    %cst_62 = arith.constant dense<0.000000e+00> : vector<64xf32>
    %239 = vector.multi_reduction <add>, %238, %cst_62 [0] : vector<16x64xf32> to vector<64xf32>
    %240 = vector.shape_cast %239 : vector<64xf32> to vector<1x64xf32>
    %241 = arith.mulf %165, %235 : vector<16x64xf32>
    %242 = arith.addf %241, %200 : vector<16x64xf32>
    %243 = vector.extract_strided_slice %153 {offsets = [0, 2], sizes = [16, 1], strides = [1, 1]} : vector<16x8xf32> to vector<16x1xf32>
    %244 = vector.broadcast %243 : vector<16x1xf32> to vector<16x64xf32>
    %245 = arith.mulf %242, %244 : vector<16x64xf32>
    %cst_63 = arith.constant dense<0.000000e+00> : vector<64xf32>
    %246 = vector.multi_reduction <add>, %245, %cst_63 [0] : vector<16x64xf32> to vector<64xf32>
    %247 = vector.shape_cast %246 : vector<64xf32> to vector<1x64xf32>
    %248 = arith.mulf %169, %242 : vector<16x64xf32>
    %249 = arith.addf %248, %205 : vector<16x64xf32>
    %250 = vector.extract_strided_slice %153 {offsets = [0, 3], sizes = [16, 1], strides = [1, 1]} : vector<16x8xf32> to vector<16x1xf32>
    %251 = vector.broadcast %250 : vector<16x1xf32> to vector<16x64xf32>
    %252 = arith.mulf %249, %251 : vector<16x64xf32>
    %cst_64 = arith.constant dense<0.000000e+00> : vector<64xf32>
    %253 = vector.multi_reduction <add>, %252, %cst_64 [0] : vector<16x64xf32> to vector<64xf32>
    %254 = vector.shape_cast %253 : vector<64xf32> to vector<1x64xf32>
    %255 = arith.mulf %173, %249 : vector<16x64xf32>
    %256 = arith.addf %255, %210 : vector<16x64xf32>
    %257 = vector.extract_strided_slice %153 {offsets = [0, 4], sizes = [16, 1], strides = [1, 1]} : vector<16x8xf32> to vector<16x1xf32>
    %258 = vector.broadcast %257 : vector<16x1xf32> to vector<16x64xf32>
    %259 = arith.mulf %256, %258 : vector<16x64xf32>
    %cst_65 = arith.constant dense<0.000000e+00> : vector<64xf32>
    %260 = vector.multi_reduction <add>, %259, %cst_65 [0] : vector<16x64xf32> to vector<64xf32>
    %261 = vector.shape_cast %260 : vector<64xf32> to vector<1x64xf32>
    %262 = arith.mulf %177, %256 : vector<16x64xf32>
    %263 = arith.addf %262, %215 : vector<16x64xf32>
    %264 = vector.extract_strided_slice %153 {offsets = [0, 5], sizes = [16, 1], strides = [1, 1]} : vector<16x8xf32> to vector<16x1xf32>
    %265 = vector.broadcast %264 : vector<16x1xf32> to vector<16x64xf32>
    %266 = arith.mulf %263, %265 : vector<16x64xf32>
    %cst_66 = arith.constant dense<0.000000e+00> : vector<64xf32>
    %267 = vector.multi_reduction <add>, %266, %cst_66 [0] : vector<16x64xf32> to vector<64xf32>
    %268 = vector.shape_cast %267 : vector<64xf32> to vector<1x64xf32>
    %269 = arith.mulf %181, %263 : vector<16x64xf32>
    %270 = arith.addf %269, %220 : vector<16x64xf32>
    %271 = vector.extract_strided_slice %153 {offsets = [0, 6], sizes = [16, 1], strides = [1, 1]} : vector<16x8xf32> to vector<16x1xf32>
    %272 = vector.broadcast %271 : vector<16x1xf32> to vector<16x64xf32>
    %273 = arith.mulf %270, %272 : vector<16x64xf32>
    %cst_67 = arith.constant dense<0.000000e+00> : vector<64xf32>
    %274 = vector.multi_reduction <add>, %273, %cst_67 [0] : vector<16x64xf32> to vector<64xf32>
    %275 = vector.shape_cast %274 : vector<64xf32> to vector<1x64xf32>
    %276 = arith.mulf %185, %270 : vector<16x64xf32>
    %277 = arith.addf %276, %225 : vector<16x64xf32>
    %278 = vector.extract_strided_slice %153 {offsets = [0, 7], sizes = [16, 1], strides = [1, 1]} : vector<16x8xf32> to vector<16x1xf32>
    %279 = vector.broadcast %278 : vector<16x1xf32> to vector<16x64xf32>
    %280 = arith.mulf %277, %279 : vector<16x64xf32>
    %cst_68 = arith.constant dense<0.000000e+00> : vector<64xf32>
    %281 = vector.multi_reduction <add>, %280, %cst_68 [0] : vector<16x64xf32> to vector<64xf32>
    %282 = vector.shape_cast %281 : vector<64xf32> to vector<1x64xf32>
    %283 = tpu.concatenate %233, %240, %247, %254, %261, %268, %275, %282 in 0 : vector<1x64xf32>, vector<1x64xf32>, vector<1x64xf32>, vector<1x64xf32>, vector<1x64xf32>, vector<1x64xf32>, vector<1x64xf32>, vector<1x64xf32> -> vector<8x64xf32>
    %284 = vector.extract_strided_slice %132 {offsets = [8, 0], sizes = [8, 64], strides = [1, 1]} : vector<16x64xf32> to vector<8x64xf32>
    %285 = vector.extract_strided_slice %147 {offsets = [8, 0], sizes = [8, 64], strides = [1, 1]} : vector<16x64xf32> to vector<8x64xf32>
    %286 = vector.extract_strided_slice %105 {offsets = [8, 0], sizes = [8, 16], strides = [1, 1]} : vector<16x16xf32> to vector<8x16xf32>
    %287 = tpu.transpose %286, [1, 0] : vector<8x16xf32> -> vector<16x8xf32>
    %288 = vector.extract_strided_slice %106 {offsets = [8, 0], sizes = [8, 16], strides = [1, 1]} : vector<16x16xf32> to vector<8x16xf32>
    %289 = tpu.transpose %288, [1, 0] : vector<8x16xf32> -> vector<16x8xf32>
    %290 = vector.extract_strided_slice %284 {offsets = [0, 0], sizes = [1, 64], strides = [1, 1]} : vector<8x64xf32> to vector<1x64xf32>
    %291 = vector.broadcast %290 : vector<1x64xf32> to vector<16x64xf32>
    %292 = arith.mulf %137, %291 : vector<16x64xf32>
    %293 = math.exp %292 : vector<16x64xf32>
    %294 = vector.extract_strided_slice %284 {offsets = [1, 0], sizes = [1, 64], strides = [1, 1]} : vector<8x64xf32> to vector<1x64xf32>
    %295 = vector.broadcast %294 : vector<1x64xf32> to vector<16x64xf32>
    %296 = arith.mulf %137, %295 : vector<16x64xf32>
    %297 = math.exp %296 : vector<16x64xf32>
    %298 = vector.extract_strided_slice %284 {offsets = [2, 0], sizes = [1, 64], strides = [1, 1]} : vector<8x64xf32> to vector<1x64xf32>
    %299 = vector.broadcast %298 : vector<1x64xf32> to vector<16x64xf32>
    %300 = arith.mulf %137, %299 : vector<16x64xf32>
    %301 = math.exp %300 : vector<16x64xf32>
    %302 = vector.extract_strided_slice %284 {offsets = [3, 0], sizes = [1, 64], strides = [1, 1]} : vector<8x64xf32> to vector<1x64xf32>
    %303 = vector.broadcast %302 : vector<1x64xf32> to vector<16x64xf32>
    %304 = arith.mulf %137, %303 : vector<16x64xf32>
    %305 = math.exp %304 : vector<16x64xf32>
    %306 = vector.extract_strided_slice %284 {offsets = [4, 0], sizes = [1, 64], strides = [1, 1]} : vector<8x64xf32> to vector<1x64xf32>
    %307 = vector.broadcast %306 : vector<1x64xf32> to vector<16x64xf32>
    %308 = arith.mulf %137, %307 : vector<16x64xf32>
    %309 = math.exp %308 : vector<16x64xf32>
    %310 = vector.extract_strided_slice %284 {offsets = [5, 0], sizes = [1, 64], strides = [1, 1]} : vector<8x64xf32> to vector<1x64xf32>
    %311 = vector.broadcast %310 : vector<1x64xf32> to vector<16x64xf32>
    %312 = arith.mulf %137, %311 : vector<16x64xf32>
    %313 = math.exp %312 : vector<16x64xf32>
    %314 = vector.extract_strided_slice %284 {offsets = [6, 0], sizes = [1, 64], strides = [1, 1]} : vector<8x64xf32> to vector<1x64xf32>
    %315 = vector.broadcast %314 : vector<1x64xf32> to vector<16x64xf32>
    %316 = arith.mulf %137, %315 : vector<16x64xf32>
    %317 = math.exp %316 : vector<16x64xf32>
    %318 = vector.extract_strided_slice %284 {offsets = [7, 0], sizes = [1, 64], strides = [1, 1]} : vector<8x64xf32> to vector<1x64xf32>
    %319 = vector.broadcast %318 : vector<1x64xf32> to vector<16x64xf32>
    %320 = arith.mulf %137, %319 : vector<16x64xf32>
    %321 = math.exp %320 : vector<16x64xf32>
    %322 = vector.extract_strided_slice %285 {offsets = [0, 0], sizes = [1, 64], strides = [1, 1]} : vector<8x64xf32> to vector<1x64xf32>
    %323 = vector.extract_strided_slice %287 {offsets = [0, 0], sizes = [16, 1], strides = [1, 1]} : vector<16x8xf32> to vector<16x1xf32>
    %324 = vector.broadcast %322 : vector<1x64xf32> to vector<16x64xf32>
    %325 = vector.broadcast %323 : vector<16x1xf32> to vector<16x64xf32>
    %326 = arith.mulf %324, %325 : vector<16x64xf32>
    %327 = vector.extract_strided_slice %285 {offsets = [1, 0], sizes = [1, 64], strides = [1, 1]} : vector<8x64xf32> to vector<1x64xf32>
    %328 = vector.extract_strided_slice %287 {offsets = [0, 1], sizes = [16, 1], strides = [1, 1]} : vector<16x8xf32> to vector<16x1xf32>
    %329 = vector.broadcast %327 : vector<1x64xf32> to vector<16x64xf32>
    %330 = vector.broadcast %328 : vector<16x1xf32> to vector<16x64xf32>
    %331 = arith.mulf %329, %330 : vector<16x64xf32>
    %332 = vector.extract_strided_slice %285 {offsets = [2, 0], sizes = [1, 64], strides = [1, 1]} : vector<8x64xf32> to vector<1x64xf32>
    %333 = vector.extract_strided_slice %287 {offsets = [0, 2], sizes = [16, 1], strides = [1, 1]} : vector<16x8xf32> to vector<16x1xf32>
    %334 = vector.broadcast %332 : vector<1x64xf32> to vector<16x64xf32>
    %335 = vector.broadcast %333 : vector<16x1xf32> to vector<16x64xf32>
    %336 = arith.mulf %334, %335 : vector<16x64xf32>
    %337 = vector.extract_strided_slice %285 {offsets = [3, 0], sizes = [1, 64], strides = [1, 1]} : vector<8x64xf32> to vector<1x64xf32>
    %338 = vector.extract_strided_slice %287 {offsets = [0, 3], sizes = [16, 1], strides = [1, 1]} : vector<16x8xf32> to vector<16x1xf32>
    %339 = vector.broadcast %337 : vector<1x64xf32> to vector<16x64xf32>
    %340 = vector.broadcast %338 : vector<16x1xf32> to vector<16x64xf32>
    %341 = arith.mulf %339, %340 : vector<16x64xf32>
    %342 = vector.extract_strided_slice %285 {offsets = [4, 0], sizes = [1, 64], strides = [1, 1]} : vector<8x64xf32> to vector<1x64xf32>
    %343 = vector.extract_strided_slice %287 {offsets = [0, 4], sizes = [16, 1], strides = [1, 1]} : vector<16x8xf32> to vector<16x1xf32>
    %344 = vector.broadcast %342 : vector<1x64xf32> to vector<16x64xf32>
    %345 = vector.broadcast %343 : vector<16x1xf32> to vector<16x64xf32>
    %346 = arith.mulf %344, %345 : vector<16x64xf32>
    %347 = vector.extract_strided_slice %285 {offsets = [5, 0], sizes = [1, 64], strides = [1, 1]} : vector<8x64xf32> to vector<1x64xf32>
    %348 = vector.extract_strided_slice %287 {offsets = [0, 5], sizes = [16, 1], strides = [1, 1]} : vector<16x8xf32> to vector<16x1xf32>
    %349 = vector.broadcast %347 : vector<1x64xf32> to vector<16x64xf32>
    %350 = vector.broadcast %348 : vector<16x1xf32> to vector<16x64xf32>
    %351 = arith.mulf %349, %350 : vector<16x64xf32>
    %352 = vector.extract_strided_slice %285 {offsets = [6, 0], sizes = [1, 64], strides = [1, 1]} : vector<8x64xf32> to vector<1x64xf32>
    %353 = vector.extract_strided_slice %287 {offsets = [0, 6], sizes = [16, 1], strides = [1, 1]} : vector<16x8xf32> to vector<16x1xf32>
    %354 = vector.broadcast %352 : vector<1x64xf32> to vector<16x64xf32>
    %355 = vector.broadcast %353 : vector<16x1xf32> to vector<16x64xf32>
    %356 = arith.mulf %354, %355 : vector<16x64xf32>
    %357 = vector.extract_strided_slice %285 {offsets = [7, 0], sizes = [1, 64], strides = [1, 1]} : vector<8x64xf32> to vector<1x64xf32>
    %358 = vector.extract_strided_slice %287 {offsets = [0, 7], sizes = [16, 1], strides = [1, 1]} : vector<16x8xf32> to vector<16x1xf32>
    %359 = vector.broadcast %357 : vector<1x64xf32> to vector<16x64xf32>
    %360 = vector.broadcast %358 : vector<16x1xf32> to vector<16x64xf32>
    %361 = arith.mulf %359, %360 : vector<16x64xf32>
    %cst_69 = arith.constant 0.000000e+00 : f32
    %362 = vector.broadcast %cst_69 : f32 to vector<16x64xf32>
    %363 = arith.mulf %293, %362 : vector<16x64xf32>
    %364 = arith.addf %363, %326 : vector<16x64xf32>
    %365 = vector.extract_strided_slice %289 {offsets = [0, 0], sizes = [16, 1], strides = [1, 1]} : vector<16x8xf32> to vector<16x1xf32>
    %366 = vector.broadcast %365 : vector<16x1xf32> to vector<16x64xf32>
    %367 = arith.mulf %364, %366 : vector<16x64xf32>
    %cst_70 = arith.constant dense<0.000000e+00> : vector<64xf32>
    %368 = vector.multi_reduction <add>, %367, %cst_70 [0] : vector<16x64xf32> to vector<64xf32>
    %369 = vector.shape_cast %368 : vector<64xf32> to vector<1x64xf32>
    %370 = arith.mulf %297, %364 : vector<16x64xf32>
    %371 = arith.addf %370, %331 : vector<16x64xf32>
    %372 = vector.extract_strided_slice %289 {offsets = [0, 1], sizes = [16, 1], strides = [1, 1]} : vector<16x8xf32> to vector<16x1xf32>
    %373 = vector.broadcast %372 : vector<16x1xf32> to vector<16x64xf32>
    %374 = arith.mulf %371, %373 : vector<16x64xf32>
    %cst_71 = arith.constant dense<0.000000e+00> : vector<64xf32>
    %375 = vector.multi_reduction <add>, %374, %cst_71 [0] : vector<16x64xf32> to vector<64xf32>
    %376 = vector.shape_cast %375 : vector<64xf32> to vector<1x64xf32>
    %377 = arith.mulf %301, %371 : vector<16x64xf32>
    %378 = arith.addf %377, %336 : vector<16x64xf32>
    %379 = vector.extract_strided_slice %289 {offsets = [0, 2], sizes = [16, 1], strides = [1, 1]} : vector<16x8xf32> to vector<16x1xf32>
    %380 = vector.broadcast %379 : vector<16x1xf32> to vector<16x64xf32>
    %381 = arith.mulf %378, %380 : vector<16x64xf32>
    %cst_72 = arith.constant dense<0.000000e+00> : vector<64xf32>
    %382 = vector.multi_reduction <add>, %381, %cst_72 [0] : vector<16x64xf32> to vector<64xf32>
    %383 = vector.shape_cast %382 : vector<64xf32> to vector<1x64xf32>
    %384 = arith.mulf %305, %378 : vector<16x64xf32>
    %385 = arith.addf %384, %341 : vector<16x64xf32>
    %386 = vector.extract_strided_slice %289 {offsets = [0, 3], sizes = [16, 1], strides = [1, 1]} : vector<16x8xf32> to vector<16x1xf32>
    %387 = vector.broadcast %386 : vector<16x1xf32> to vector<16x64xf32>
    %388 = arith.mulf %385, %387 : vector<16x64xf32>
    %cst_73 = arith.constant dense<0.000000e+00> : vector<64xf32>
    %389 = vector.multi_reduction <add>, %388, %cst_73 [0] : vector<16x64xf32> to vector<64xf32>
    %390 = vector.shape_cast %389 : vector<64xf32> to vector<1x64xf32>
    %391 = arith.mulf %309, %385 : vector<16x64xf32>
    %392 = arith.addf %391, %346 : vector<16x64xf32>
    %393 = vector.extract_strided_slice %289 {offsets = [0, 4], sizes = [16, 1], strides = [1, 1]} : vector<16x8xf32> to vector<16x1xf32>
    %394 = vector.broadcast %393 : vector<16x1xf32> to vector<16x64xf32>
    %395 = arith.mulf %392, %394 : vector<16x64xf32>
    %cst_74 = arith.constant dense<0.000000e+00> : vector<64xf32>
    %396 = vector.multi_reduction <add>, %395, %cst_74 [0] : vector<16x64xf32> to vector<64xf32>
    %397 = vector.shape_cast %396 : vector<64xf32> to vector<1x64xf32>
    %398 = arith.mulf %313, %392 : vector<16x64xf32>
    %399 = arith.addf %398, %351 : vector<16x64xf32>
    %400 = vector.extract_strided_slice %289 {offsets = [0, 5], sizes = [16, 1], strides = [1, 1]} : vector<16x8xf32> to vector<16x1xf32>
    %401 = vector.broadcast %400 : vector<16x1xf32> to vector<16x64xf32>
    %402 = arith.mulf %399, %401 : vector<16x64xf32>
    %cst_75 = arith.constant dense<0.000000e+00> : vector<64xf32>
    %403 = vector.multi_reduction <add>, %402, %cst_75 [0] : vector<16x64xf32> to vector<64xf32>
    %404 = vector.shape_cast %403 : vector<64xf32> to vector<1x64xf32>
    %405 = arith.mulf %317, %399 : vector<16x64xf32>
    %406 = arith.addf %405, %356 : vector<16x64xf32>
    %407 = vector.extract_strided_slice %289 {offsets = [0, 6], sizes = [16, 1], strides = [1, 1]} : vector<16x8xf32> to vector<16x1xf32>
    %408 = vector.broadcast %407 : vector<16x1xf32> to vector<16x64xf32>
    %409 = arith.mulf %406, %408 : vector<16x64xf32>
    %cst_76 = arith.constant dense<0.000000e+00> : vector<64xf32>
    %410 = vector.multi_reduction <add>, %409, %cst_76 [0] : vector<16x64xf32> to vector<64xf32>
    %411 = vector.shape_cast %410 : vector<64xf32> to vector<1x64xf32>
    %412 = arith.mulf %321, %406 : vector<16x64xf32>
    %413 = arith.addf %412, %361 : vector<16x64xf32>
    %414 = vector.extract_strided_slice %289 {offsets = [0, 7], sizes = [16, 1], strides = [1, 1]} : vector<16x8xf32> to vector<16x1xf32>
    %415 = vector.broadcast %414 : vector<16x1xf32> to vector<16x64xf32>
    %416 = arith.mulf %413, %415 : vector<16x64xf32>
    %cst_77 = arith.constant dense<0.000000e+00> : vector<64xf32>
    %417 = vector.multi_reduction <add>, %416, %cst_77 [0] : vector<16x64xf32> to vector<64xf32>
    %418 = vector.shape_cast %417 : vector<64xf32> to vector<1x64xf32>
    %419 = tpu.concatenate %369, %376, %383, %390, %397, %404, %411, %418 in 0 : vector<1x64xf32>, vector<1x64xf32>, vector<1x64xf32>, vector<1x64xf32>, vector<1x64xf32>, vector<1x64xf32>, vector<1x64xf32>, vector<1x64xf32> -> vector<8x64xf32>
    %420 = tpu.concatenate %283, %419 in 0 : vector<8x64xf32>, vector<8x64xf32> -> vector<16x64xf32>
    %421 = vector.broadcast %138 : vector<1x64xf32> to vector<16x64xf32>
    %422 = arith.mulf %421, %100 : vector<16x64xf32>
    %423 = arith.addf %420, %422 : vector<16x64xf32>
    %424 = arith.mulf %423, %146 : vector<16x64xf32>
    %c0_78 = arith.constant 0 : index
    %c0_79 = arith.constant 0 : index
    %c0_80 = arith.constant 0 : index
    %425 = vector.load %arg14[%c0_78, %c0_79, %c0_80] : memref<2x64x32xf32, #tpu.memory_space<vmem>>, vector<1x64x32xf32>
    %426 = vector.shape_cast %425 : vector<1x64x32xf32> to vector<64x32xf32>
    %cst_81 = arith.constant dense<0.000000e+00> : vector<16x32xf32>
    %427 = tpu.matmul %424, %426, %cst_81 {dimension_numbers = #tpu.dot_dimension_numbers<[1], [0], [0], [1], [0, 0, 1, 1], [], []>} : vector<16x64xf32>, vector<64x32xf32>, vector<16x32xf32> -> vector<16x32xf32>
    %428 = arith.addf %30, %427 : vector<16x32xf32>
    %c16 = arith.constant 16 : index
    %c0_82 = arith.constant 0 : index
    %429 = vector.load %arg2[%c16, %c0_82] : memref<32x32xf32, #tpu.memory_space<vmem>>, vector<16x32xf32>
    %cst_83 = arith.constant 9.99999968E-21 : f32
    %430 = vector.broadcast %cst_83 : f32 to vector<16x32xf32>
    %431 = arith.addf %429, %430 : vector<16x32xf32>
    %432 = math.log %431 : vector<16x32xf32>
    %cst_84 = arith.constant 0.000000e+00 : f32
    %433 = vector.broadcast %cst_84 : f32 to vector<16x32xf32>
    %434 = arith.subf %433, %432 : vector<16x32xf32>
    %cst_85 = arith.constant 9.99999968E-21 : f32
    %435 = vector.broadcast %cst_85 : f32 to vector<16x32xf32>
    %436 = arith.addf %434, %435 : vector<16x32xf32>
    %437 = math.log %436 : vector<16x32xf32>
    %cst_86 = arith.constant 0.000000e+00 : f32
    %438 = vector.broadcast %cst_86 : f32 to vector<16x32xf32>
    %439 = arith.subf %438, %437 : vector<16x32xf32>
    %440 = arith.addf %428, %439 : vector<16x32xf32>
    %cst_87 = arith.constant 1.000000e+00 : f32
    %441 = vector.broadcast %cst_87 : f32 to vector<16x32xf32>
    %442 = arith.divf %440, %441 : vector<16x32xf32>
    %cst_88 = arith.constant dense<0xFF800000> : vector<16xf32>
    %443 = vector.multi_reduction <maximumf>, %442, %cst_88 [1] : vector<16x32xf32> to vector<16xf32>
    %444 = vector.shape_cast %443 : vector<16xf32> to vector<16x1xf32>
    %445 = vector.broadcast %444 : vector<16x1xf32> to vector<16x32xf32>
    %446 = arith.subf %442, %445 : vector<16x32xf32>
    %447 = math.exp %446 : vector<16x32xf32>
    %cst_89 = arith.constant dense<0.000000e+00> : vector<16xf32>
    %448 = vector.multi_reduction <add>, %447, %cst_89 [1] : vector<16x32xf32> to vector<16xf32>
    %449 = vector.shape_cast %448 : vector<16xf32> to vector<16x1xf32>
    %450 = vector.broadcast %449 : vector<16x1xf32> to vector<16x32xf32>
    %451 = arith.divf %447, %450 : vector<16x32xf32>
    %cst_90 = arith.constant dense<0.000000e+00> : vector<16xf32>
    %452 = vector.multi_reduction <add>, %451, %cst_90 [1] : vector<16x32xf32> to vector<16xf32>
    %453 = vector.shape_cast %452 : vector<16xf32> to vector<16x1xf32>
    %cst_91 = arith.constant 3.200000e+01 : f32
    %454 = vector.broadcast %cst_91 : f32 to vector<16x1xf32>
    %455 = arith.divf %453, %454 : vector<16x1xf32>
    %456 = vector.broadcast %455 : vector<16x1xf32> to vector<16x32xf32>
    %457 = arith.subf %451, %456 : vector<16x32xf32>
    %458 = arith.mulf %457, %457 : vector<16x32xf32>
    %cst_92 = arith.constant dense<0.000000e+00> : vector<16xf32>
    %459 = vector.multi_reduction <add>, %458, %cst_92 [1] : vector<16x32xf32> to vector<16xf32>
    %460 = vector.shape_cast %459 : vector<16xf32> to vector<16x1xf32>
    %cst_93 = arith.constant 3.200000e+01 : f32
    %461 = vector.broadcast %cst_93 : f32 to vector<16x1xf32>
    %462 = arith.divf %460, %461 : vector<16x1xf32>
    %cst_94 = arith.constant 9.99999974E-6 : f32
    %463 = vector.broadcast %cst_94 : f32 to vector<16x1xf32>
    %464 = arith.addf %462, %463 : vector<16x1xf32>
    %465 = math.rsqrt %464 : vector<16x1xf32>
    %466 = vector.broadcast %465 : vector<16x1xf32> to vector<16x32xf32>
    %467 = arith.mulf %457, %466 : vector<16x32xf32>
    %c1 = arith.constant 1 : index
    %c0_95 = arith.constant 0 : index
    %468 = vector.load %arg4[%c1, %c0_95] : memref<2x32xf32, #tpu.memory_space<vmem>>, vector<1x32xf32>
    %469 = vector.broadcast %468 : vector<1x32xf32> to vector<16x32xf32>
    %470 = arith.mulf %467, %469 : vector<16x32xf32>
    %c1_96 = arith.constant 1 : index
    %c0_97 = arith.constant 0 : index
    %471 = vector.load %arg5[%c1_96, %c0_97] : memref<2x32xf32, #tpu.memory_space<vmem>>, vector<1x32xf32>
    %472 = vector.broadcast %471 : vector<1x32xf32> to vector<16x32xf32>
    %473 = arith.addf %470, %472 : vector<16x32xf32>
    %c1_98 = arith.constant 1 : index
    %c0_99 = arith.constant 0 : index
    %c0_100 = arith.constant 0 : index
    %474 = vector.load %arg6[%c1_98, %c0_99, %c0_100] : memref<2x32x128xf32, #tpu.memory_space<vmem>>, vector<1x32x128xf32>
    %475 = vector.shape_cast %474 : vector<1x32x128xf32> to vector<32x128xf32>
    %cst_101 = arith.constant dense<0.000000e+00> : vector<16x128xf32>
    %476 = tpu.matmul %473, %475, %cst_101 {dimension_numbers = #tpu.dot_dimension_numbers<[1], [0], [0], [1], [0, 0, 1, 1], [], []>} : vector<16x32xf32>, vector<32x128xf32>, vector<16x128xf32> -> vector<16x128xf32>
    %477 = vector.extract_strided_slice %476 {offsets = [0, 0], sizes = [16, 64], strides = [1, 1]} : vector<16x128xf32> to vector<16x64xf32>
    %478 = vector.extract_strided_slice %476 {offsets = [0, 64], sizes = [16, 64], strides = [1, 1]} : vector<16x128xf32> to vector<16x64xf32>
    %c1_102 = arith.constant 1 : index
    %c0_103 = arith.constant 0 : index
    %c0_104 = arith.constant 0 : index
    %479 = vector.load %arg7[%c1_102, %c0_103, %c0_104] : memref<2x4x64xf32, #tpu.memory_space<vmem>>, vector<1x4x64xf32>
    %480 = vector.shape_cast %479 : vector<1x4x64xf32> to vector<4x64xf32>
    %c1_105 = arith.constant 1 : index
    %c0_106 = arith.constant 0 : index
    %481 = vector.load %arg8[%c1_105, %c0_106] : memref<2x64xf32, #tpu.memory_space<vmem>>, vector<1x64xf32>
    %482 = vector.extract_strided_slice %480 {offsets = [3, 0], sizes = [1, 64], strides = [1, 1]} : vector<4x64xf32> to vector<1x64xf32>
    %483 = vector.broadcast %482 : vector<1x64xf32> to vector<16x64xf32>
    %484 = arith.mulf %483, %477 : vector<16x64xf32>
    %485 = vector.broadcast %481 : vector<1x64xf32> to vector<16x64xf32>
    %486 = arith.addf %485, %484 : vector<16x64xf32>
    %cst_107 = arith.constant 0.000000e+00 : f32
    %487 = vector.broadcast %cst_107 : f32 to vector<3x64xf32>
    %488 = vector.extract_strided_slice %477 {offsets = [0, 0], sizes = [5, 64], strides = [1, 1]} : vector<16x64xf32> to vector<5x64xf32>
    %cst_108 = arith.constant 0.000000e+00 : f32
    %489 = vector.broadcast %cst_108 : f32 to vector<3x64xf32>
    %490 = vector.extract_strided_slice %477 {offsets = [8, 0], sizes = [5, 64], strides = [1, 1]} : vector<16x64xf32> to vector<5x64xf32>
    %491 = tpu.concatenate %487, %488, %489, %490 in 0 : vector<3x64xf32>, vector<5x64xf32>, vector<3x64xf32>, vector<5x64xf32> -> vector<16x64xf32>
    %492 = vector.extract_strided_slice %480 {offsets = [0, 0], sizes = [1, 64], strides = [1, 1]} : vector<4x64xf32> to vector<1x64xf32>
    %493 = vector.broadcast %492 : vector<1x64xf32> to vector<16x64xf32>
    %494 = arith.mulf %493, %491 : vector<16x64xf32>
    %495 = arith.addf %486, %494 : vector<16x64xf32>
    %cst_109 = arith.constant 0.000000e+00 : f32
    %496 = vector.broadcast %cst_109 : f32 to vector<2x64xf32>
    %497 = vector.extract_strided_slice %477 {offsets = [0, 0], sizes = [6, 64], strides = [1, 1]} : vector<16x64xf32> to vector<6x64xf32>
    %cst_110 = arith.constant 0.000000e+00 : f32
    %498 = vector.broadcast %cst_110 : f32 to vector<2x64xf32>
    %499 = vector.extract_strided_slice %477 {offsets = [8, 0], sizes = [6, 64], strides = [1, 1]} : vector<16x64xf32> to vector<6x64xf32>
    %500 = tpu.concatenate %496, %497, %498, %499 in 0 : vector<2x64xf32>, vector<6x64xf32>, vector<2x64xf32>, vector<6x64xf32> -> vector<16x64xf32>
    %501 = vector.extract_strided_slice %480 {offsets = [1, 0], sizes = [1, 64], strides = [1, 1]} : vector<4x64xf32> to vector<1x64xf32>
    %502 = vector.broadcast %501 : vector<1x64xf32> to vector<16x64xf32>
    %503 = arith.mulf %502, %500 : vector<16x64xf32>
    %504 = arith.addf %495, %503 : vector<16x64xf32>
    %cst_111 = arith.constant 0.000000e+00 : f32
    %505 = vector.broadcast %cst_111 : f32 to vector<1x64xf32>
    %506 = vector.extract_strided_slice %477 {offsets = [0, 0], sizes = [7, 64], strides = [1, 1]} : vector<16x64xf32> to vector<7x64xf32>
    %cst_112 = arith.constant 0.000000e+00 : f32
    %507 = vector.broadcast %cst_112 : f32 to vector<1x64xf32>
    %508 = vector.extract_strided_slice %477 {offsets = [8, 0], sizes = [7, 64], strides = [1, 1]} : vector<16x64xf32> to vector<7x64xf32>
    %509 = tpu.concatenate %505, %506, %507, %508 in 0 : vector<1x64xf32>, vector<7x64xf32>, vector<1x64xf32>, vector<7x64xf32> -> vector<16x64xf32>
    %510 = vector.extract_strided_slice %480 {offsets = [2, 0], sizes = [1, 64], strides = [1, 1]} : vector<4x64xf32> to vector<1x64xf32>
    %511 = vector.broadcast %510 : vector<1x64xf32> to vector<16x64xf32>
    %512 = arith.mulf %511, %509 : vector<16x64xf32>
    %513 = arith.addf %504, %512 : vector<16x64xf32>
    %cst_113 = arith.constant 0.000000e+00 : f32
    %514 = vector.broadcast %cst_113 : f32 to vector<16x64xf32>
    %515 = arith.subf %514, %513 : vector<16x64xf32>
    %516 = math.exp %515 : vector<16x64xf32>
    %cst_114 = arith.constant 1.000000e+00 : f32
    %517 = vector.broadcast %cst_114 : f32 to vector<16x64xf32>
    %518 = arith.addf %517, %516 : vector<16x64xf32>
    %cst_115 = arith.constant 1.000000e+00 : f32
    %519 = vector.broadcast %cst_115 : f32 to vector<16x64xf32>
    %520 = arith.divf %519, %518 : vector<16x64xf32>
    %521 = arith.mulf %513, %520 : vector<16x64xf32>
    %c1_116 = arith.constant 1 : index
    %c0_117 = arith.constant 0 : index
    %c0_118 = arith.constant 0 : index
    %522 = vector.load %arg9[%c1_116, %c0_117, %c0_118] : memref<2x64x34xf32, #tpu.memory_space<vmem>>, vector<1x64x34xf32>
    %523 = vector.shape_cast %522 : vector<1x64x34xf32> to vector<64x34xf32>
    %cst_119 = arith.constant dense<0.000000e+00> : vector<16x34xf32>
    %524 = tpu.matmul %521, %523, %cst_119 {dimension_numbers = #tpu.dot_dimension_numbers<[1], [0], [0], [1], [0, 0, 1, 1], [], []>} : vector<16x64xf32>, vector<64x34xf32>, vector<16x34xf32> -> vector<16x34xf32>
    %525 = vector.extract_strided_slice %524 {offsets = [0, 0], sizes = [16, 2], strides = [1, 1]} : vector<16x34xf32> to vector<16x2xf32>
    %526 = vector.extract_strided_slice %524 {offsets = [0, 2], sizes = [16, 16], strides = [1, 1]} : vector<16x34xf32> to vector<16x16xf32>
    %527 = vector.extract_strided_slice %524 {offsets = [0, 18], sizes = [16, 16], strides = [1, 1]} : vector<16x34xf32> to vector<16x16xf32>
    %c1_120 = arith.constant 1 : index
    %c0_121 = arith.constant 0 : index
    %c0_122 = arith.constant 0 : index
    %528 = vector.load %arg10[%c1_120, %c0_121, %c0_122] : memref<2x2x64xf32, #tpu.memory_space<vmem>>, vector<1x2x64xf32>
    %529 = vector.shape_cast %528 : vector<1x2x64xf32> to vector<2x64xf32>
    %c1_123 = arith.constant 1 : index
    %c0_124 = arith.constant 0 : index
    %530 = vector.load %arg11[%c1_123, %c0_124] : memref<2x64xf32, #tpu.memory_space<vmem>>, vector<1x64xf32>
    %531 = vector.extract_strided_slice %525 {offsets = [0, 0], sizes = [16, 1], strides = [1, 1]} : vector<16x2xf32> to vector<16x1xf32>
    %532 = vector.extract_strided_slice %529 {offsets = [0, 0], sizes = [1, 64], strides = [1, 1]} : vector<2x64xf32> to vector<1x64xf32>
    %533 = vector.broadcast %531 : vector<16x1xf32> to vector<16x64xf32>
    %534 = vector.broadcast %532 : vector<1x64xf32> to vector<16x64xf32>
    %535 = arith.mulf %533, %534 : vector<16x64xf32>
    %536 = vector.broadcast %530 : vector<1x64xf32> to vector<16x64xf32>
    %537 = arith.addf %536, %535 : vector<16x64xf32>
    %538 = vector.extract_strided_slice %525 {offsets = [0, 1], sizes = [16, 1], strides = [1, 1]} : vector<16x2xf32> to vector<16x1xf32>
    %539 = vector.extract_strided_slice %529 {offsets = [1, 0], sizes = [1, 64], strides = [1, 1]} : vector<2x64xf32> to vector<1x64xf32>
    %540 = vector.broadcast %538 : vector<16x1xf32> to vector<16x64xf32>
    %541 = vector.broadcast %539 : vector<1x64xf32> to vector<16x64xf32>
    %542 = arith.mulf %540, %541 : vector<16x64xf32>
    %543 = arith.addf %537, %542 : vector<16x64xf32>
    %544 = math.absf %543 : vector<16x64xf32>
    %cst_125 = arith.constant 0.000000e+00 : f32
    %545 = vector.broadcast %cst_125 : f32 to vector<16x64xf32>
    %546 = arith.subf %545, %544 : vector<16x64xf32>
    %547 = math.exp %546 : vector<16x64xf32>
    %cst_126 = arith.constant 1.000000e+00 : f32
    %548 = vector.broadcast %cst_126 : f32 to vector<16x64xf32>
    %549 = arith.addf %548, %547 : vector<16x64xf32>
    %550 = math.log %549 : vector<16x64xf32>
    %cst_127 = arith.constant 0.000000e+00 : f32
    %551 = vector.broadcast %cst_127 : f32 to vector<16x64xf32>
    %552 = arith.maximumf %543, %551 : vector<16x64xf32>
    %553 = arith.addf %550, %552 : vector<16x64xf32>
    %c1_128 = arith.constant 1 : index
    %c0_129 = arith.constant 0 : index
    %c0_130 = arith.constant 0 : index
    %554 = vector.load %arg12[%c1_128, %c0_129, %c0_130] : memref<2x16x64xf32, #tpu.memory_space<vmem>>, vector<1x16x64xf32>
    %555 = vector.shape_cast %554 : vector<1x16x64xf32> to vector<16x64xf32>
    %556 = math.exp %555 : vector<16x64xf32>
    %cst_131 = arith.constant 0.000000e+00 : f32
    %557 = vector.broadcast %cst_131 : f32 to vector<16x64xf32>
    %558 = arith.subf %557, %556 : vector<16x64xf32>
    %c1_132 = arith.constant 1 : index
    %c0_133 = arith.constant 0 : index
    %559 = vector.load %arg13[%c1_132, %c0_133] : memref<2x64xf32, #tpu.memory_space<vmem>>, vector<1x64xf32>
    %cst_134 = arith.constant 0.000000e+00 : f32
    %560 = vector.broadcast %cst_134 : f32 to vector<16x64xf32>
    %561 = arith.subf %560, %478 : vector<16x64xf32>
    %562 = math.exp %561 : vector<16x64xf32>
    %cst_135 = arith.constant 1.000000e+00 : f32
    %563 = vector.broadcast %cst_135 : f32 to vector<16x64xf32>
    %564 = arith.addf %563, %562 : vector<16x64xf32>
    %cst_136 = arith.constant 1.000000e+00 : f32
    %565 = vector.broadcast %cst_136 : f32 to vector<16x64xf32>
    %566 = arith.divf %565, %564 : vector<16x64xf32>
    %567 = arith.mulf %478, %566 : vector<16x64xf32>
    %568 = arith.mulf %553, %521 : vector<16x64xf32>
    %569 = vector.extract_strided_slice %553 {offsets = [0, 0], sizes = [8, 64], strides = [1, 1]} : vector<16x64xf32> to vector<8x64xf32>
    %570 = vector.extract_strided_slice %568 {offsets = [0, 0], sizes = [8, 64], strides = [1, 1]} : vector<16x64xf32> to vector<8x64xf32>
    %571 = vector.extract_strided_slice %526 {offsets = [0, 0], sizes = [8, 16], strides = [1, 1]} : vector<16x16xf32> to vector<8x16xf32>
    %572 = tpu.transpose %571, [1, 0] : vector<8x16xf32> -> vector<16x8xf32>
    %573 = vector.extract_strided_slice %527 {offsets = [0, 0], sizes = [8, 16], strides = [1, 1]} : vector<16x16xf32> to vector<8x16xf32>
    %574 = tpu.transpose %573, [1, 0] : vector<8x16xf32> -> vector<16x8xf32>
    %575 = vector.extract_strided_slice %569 {offsets = [0, 0], sizes = [1, 64], strides = [1, 1]} : vector<8x64xf32> to vector<1x64xf32>
    %576 = vector.broadcast %575 : vector<1x64xf32> to vector<16x64xf32>
    %577 = arith.mulf %558, %576 : vector<16x64xf32>
    %578 = math.exp %577 : vector<16x64xf32>
    %579 = vector.extract_strided_slice %569 {offsets = [1, 0], sizes = [1, 64], strides = [1, 1]} : vector<8x64xf32> to vector<1x64xf32>
    %580 = vector.broadcast %579 : vector<1x64xf32> to vector<16x64xf32>
    %581 = arith.mulf %558, %580 : vector<16x64xf32>
    %582 = math.exp %581 : vector<16x64xf32>
    %583 = vector.extract_strided_slice %569 {offsets = [2, 0], sizes = [1, 64], strides = [1, 1]} : vector<8x64xf32> to vector<1x64xf32>
    %584 = vector.broadcast %583 : vector<1x64xf32> to vector<16x64xf32>
    %585 = arith.mulf %558, %584 : vector<16x64xf32>
    %586 = math.exp %585 : vector<16x64xf32>
    %587 = vector.extract_strided_slice %569 {offsets = [3, 0], sizes = [1, 64], strides = [1, 1]} : vector<8x64xf32> to vector<1x64xf32>
    %588 = vector.broadcast %587 : vector<1x64xf32> to vector<16x64xf32>
    %589 = arith.mulf %558, %588 : vector<16x64xf32>
    %590 = math.exp %589 : vector<16x64xf32>
    %591 = vector.extract_strided_slice %569 {offsets = [4, 0], sizes = [1, 64], strides = [1, 1]} : vector<8x64xf32> to vector<1x64xf32>
    %592 = vector.broadcast %591 : vector<1x64xf32> to vector<16x64xf32>
    %593 = arith.mulf %558, %592 : vector<16x64xf32>
    %594 = math.exp %593 : vector<16x64xf32>
    %595 = vector.extract_strided_slice %569 {offsets = [5, 0], sizes = [1, 64], strides = [1, 1]} : vector<8x64xf32> to vector<1x64xf32>
    %596 = vector.broadcast %595 : vector<1x64xf32> to vector<16x64xf32>
    %597 = arith.mulf %558, %596 : vector<16x64xf32>
    %598 = math.exp %597 : vector<16x64xf32>
    %599 = vector.extract_strided_slice %569 {offsets = [6, 0], sizes = [1, 64], strides = [1, 1]} : vector<8x64xf32> to vector<1x64xf32>
    %600 = vector.broadcast %599 : vector<1x64xf32> to vector<16x64xf32>
    %601 = arith.mulf %558, %600 : vector<16x64xf32>
    %602 = math.exp %601 : vector<16x64xf32>
    %603 = vector.extract_strided_slice %569 {offsets = [7, 0], sizes = [1, 64], strides = [1, 1]} : vector<8x64xf32> to vector<1x64xf32>
    %604 = vector.broadcast %603 : vector<1x64xf32> to vector<16x64xf32>
    %605 = arith.mulf %558, %604 : vector<16x64xf32>
    %606 = math.exp %605 : vector<16x64xf32>
    %607 = vector.extract_strided_slice %570 {offsets = [0, 0], sizes = [1, 64], strides = [1, 1]} : vector<8x64xf32> to vector<1x64xf32>
    %608 = vector.extract_strided_slice %572 {offsets = [0, 0], sizes = [16, 1], strides = [1, 1]} : vector<16x8xf32> to vector<16x1xf32>
    %609 = vector.broadcast %607 : vector<1x64xf32> to vector<16x64xf32>
    %610 = vector.broadcast %608 : vector<16x1xf32> to vector<16x64xf32>
    %611 = arith.mulf %609, %610 : vector<16x64xf32>
    %612 = vector.extract_strided_slice %570 {offsets = [1, 0], sizes = [1, 64], strides = [1, 1]} : vector<8x64xf32> to vector<1x64xf32>
    %613 = vector.extract_strided_slice %572 {offsets = [0, 1], sizes = [16, 1], strides = [1, 1]} : vector<16x8xf32> to vector<16x1xf32>
    %614 = vector.broadcast %612 : vector<1x64xf32> to vector<16x64xf32>
    %615 = vector.broadcast %613 : vector<16x1xf32> to vector<16x64xf32>
    %616 = arith.mulf %614, %615 : vector<16x64xf32>
    %617 = vector.extract_strided_slice %570 {offsets = [2, 0], sizes = [1, 64], strides = [1, 1]} : vector<8x64xf32> to vector<1x64xf32>
    %618 = vector.extract_strided_slice %572 {offsets = [0, 2], sizes = [16, 1], strides = [1, 1]} : vector<16x8xf32> to vector<16x1xf32>
    %619 = vector.broadcast %617 : vector<1x64xf32> to vector<16x64xf32>
    %620 = vector.broadcast %618 : vector<16x1xf32> to vector<16x64xf32>
    %621 = arith.mulf %619, %620 : vector<16x64xf32>
    %622 = vector.extract_strided_slice %570 {offsets = [3, 0], sizes = [1, 64], strides = [1, 1]} : vector<8x64xf32> to vector<1x64xf32>
    %623 = vector.extract_strided_slice %572 {offsets = [0, 3], sizes = [16, 1], strides = [1, 1]} : vector<16x8xf32> to vector<16x1xf32>
    %624 = vector.broadcast %622 : vector<1x64xf32> to vector<16x64xf32>
    %625 = vector.broadcast %623 : vector<16x1xf32> to vector<16x64xf32>
    %626 = arith.mulf %624, %625 : vector<16x64xf32>
    %627 = vector.extract_strided_slice %570 {offsets = [4, 0], sizes = [1, 64], strides = [1, 1]} : vector<8x64xf32> to vector<1x64xf32>
    %628 = vector.extract_strided_slice %572 {offsets = [0, 4], sizes = [16, 1], strides = [1, 1]} : vector<16x8xf32> to vector<16x1xf32>
    %629 = vector.broadcast %627 : vector<1x64xf32> to vector<16x64xf32>
    %630 = vector.broadcast %628 : vector<16x1xf32> to vector<16x64xf32>
    %631 = arith.mulf %629, %630 : vector<16x64xf32>
    %632 = vector.extract_strided_slice %570 {offsets = [5, 0], sizes = [1, 64], strides = [1, 1]} : vector<8x64xf32> to vector<1x64xf32>
    %633 = vector.extract_strided_slice %572 {offsets = [0, 5], sizes = [16, 1], strides = [1, 1]} : vector<16x8xf32> to vector<16x1xf32>
    %634 = vector.broadcast %632 : vector<1x64xf32> to vector<16x64xf32>
    %635 = vector.broadcast %633 : vector<16x1xf32> to vector<16x64xf32>
    %636 = arith.mulf %634, %635 : vector<16x64xf32>
    %637 = vector.extract_strided_slice %570 {offsets = [6, 0], sizes = [1, 64], strides = [1, 1]} : vector<8x64xf32> to vector<1x64xf32>
    %638 = vector.extract_strided_slice %572 {offsets = [0, 6], sizes = [16, 1], strides = [1, 1]} : vector<16x8xf32> to vector<16x1xf32>
    %639 = vector.broadcast %637 : vector<1x64xf32> to vector<16x64xf32>
    %640 = vector.broadcast %638 : vector<16x1xf32> to vector<16x64xf32>
    %641 = arith.mulf %639, %640 : vector<16x64xf32>
    %642 = vector.extract_strided_slice %570 {offsets = [7, 0], sizes = [1, 64], strides = [1, 1]} : vector<8x64xf32> to vector<1x64xf32>
    %643 = vector.extract_strided_slice %572 {offsets = [0, 7], sizes = [16, 1], strides = [1, 1]} : vector<16x8xf32> to vector<16x1xf32>
    %644 = vector.broadcast %642 : vector<1x64xf32> to vector<16x64xf32>
    %645 = vector.broadcast %643 : vector<16x1xf32> to vector<16x64xf32>
    %646 = arith.mulf %644, %645 : vector<16x64xf32>
    %cst_137 = arith.constant 0.000000e+00 : f32
    %647 = vector.broadcast %cst_137 : f32 to vector<16x64xf32>
    %648 = arith.mulf %578, %647 : vector<16x64xf32>
    %649 = arith.addf %648, %611 : vector<16x64xf32>
    %650 = vector.extract_strided_slice %574 {offsets = [0, 0], sizes = [16, 1], strides = [1, 1]} : vector<16x8xf32> to vector<16x1xf32>
    %651 = vector.broadcast %650 : vector<16x1xf32> to vector<16x64xf32>
    %652 = arith.mulf %649, %651 : vector<16x64xf32>
    %cst_138 = arith.constant dense<0.000000e+00> : vector<64xf32>
    %653 = vector.multi_reduction <add>, %652, %cst_138 [0] : vector<16x64xf32> to vector<64xf32>
    %654 = vector.shape_cast %653 : vector<64xf32> to vector<1x64xf32>
    %655 = arith.mulf %582, %649 : vector<16x64xf32>
    %656 = arith.addf %655, %616 : vector<16x64xf32>
    %657 = vector.extract_strided_slice %574 {offsets = [0, 1], sizes = [16, 1], strides = [1, 1]} : vector<16x8xf32> to vector<16x1xf32>
    %658 = vector.broadcast %657 : vector<16x1xf32> to vector<16x64xf32>
    %659 = arith.mulf %656, %658 : vector<16x64xf32>
    %cst_139 = arith.constant dense<0.000000e+00> : vector<64xf32>
    %660 = vector.multi_reduction <add>, %659, %cst_139 [0] : vector<16x64xf32> to vector<64xf32>
    %661 = vector.shape_cast %660 : vector<64xf32> to vector<1x64xf32>
    %662 = arith.mulf %586, %656 : vector<16x64xf32>
    %663 = arith.addf %662, %621 : vector<16x64xf32>
    %664 = vector.extract_strided_slice %574 {offsets = [0, 2], sizes = [16, 1], strides = [1, 1]} : vector<16x8xf32> to vector<16x1xf32>
    %665 = vector.broadcast %664 : vector<16x1xf32> to vector<16x64xf32>
    %666 = arith.mulf %663, %665 : vector<16x64xf32>
    %cst_140 = arith.constant dense<0.000000e+00> : vector<64xf32>
    %667 = vector.multi_reduction <add>, %666, %cst_140 [0] : vector<16x64xf32> to vector<64xf32>
    %668 = vector.shape_cast %667 : vector<64xf32> to vector<1x64xf32>
    %669 = arith.mulf %590, %663 : vector<16x64xf32>
    %670 = arith.addf %669, %626 : vector<16x64xf32>
    %671 = vector.extract_strided_slice %574 {offsets = [0, 3], sizes = [16, 1], strides = [1, 1]} : vector<16x8xf32> to vector<16x1xf32>
    %672 = vector.broadcast %671 : vector<16x1xf32> to vector<16x64xf32>
    %673 = arith.mulf %670, %672 : vector<16x64xf32>
    %cst_141 = arith.constant dense<0.000000e+00> : vector<64xf32>
    %674 = vector.multi_reduction <add>, %673, %cst_141 [0] : vector<16x64xf32> to vector<64xf32>
    %675 = vector.shape_cast %674 : vector<64xf32> to vector<1x64xf32>
    %676 = arith.mulf %594, %670 : vector<16x64xf32>
    %677 = arith.addf %676, %631 : vector<16x64xf32>
    %678 = vector.extract_strided_slice %574 {offsets = [0, 4], sizes = [16, 1], strides = [1, 1]} : vector<16x8xf32> to vector<16x1xf32>
    %679 = vector.broadcast %678 : vector<16x1xf32> to vector<16x64xf32>
    %680 = arith.mulf %677, %679 : vector<16x64xf32>
    %cst_142 = arith.constant dense<0.000000e+00> : vector<64xf32>
    %681 = vector.multi_reduction <add>, %680, %cst_142 [0] : vector<16x64xf32> to vector<64xf32>
    %682 = vector.shape_cast %681 : vector<64xf32> to vector<1x64xf32>
    %683 = arith.mulf %598, %677 : vector<16x64xf32>
    %684 = arith.addf %683, %636 : vector<16x64xf32>
    %685 = vector.extract_strided_slice %574 {offsets = [0, 5], sizes = [16, 1], strides = [1, 1]} : vector<16x8xf32> to vector<16x1xf32>
    %686 = vector.broadcast %685 : vector<16x1xf32> to vector<16x64xf32>
    %687 = arith.mulf %684, %686 : vector<16x64xf32>
    %cst_143 = arith.constant dense<0.000000e+00> : vector<64xf32>
    %688 = vector.multi_reduction <add>, %687, %cst_143 [0] : vector<16x64xf32> to vector<64xf32>
    %689 = vector.shape_cast %688 : vector<64xf32> to vector<1x64xf32>
    %690 = arith.mulf %602, %684 : vector<16x64xf32>
    %691 = arith.addf %690, %641 : vector<16x64xf32>
    %692 = vector.extract_strided_slice %574 {offsets = [0, 6], sizes = [16, 1], strides = [1, 1]} : vector<16x8xf32> to vector<16x1xf32>
    %693 = vector.broadcast %692 : vector<16x1xf32> to vector<16x64xf32>
    %694 = arith.mulf %691, %693 : vector<16x64xf32>
    %cst_144 = arith.constant dense<0.000000e+00> : vector<64xf32>
    %695 = vector.multi_reduction <add>, %694, %cst_144 [0] : vector<16x64xf32> to vector<64xf32>
    %696 = vector.shape_cast %695 : vector<64xf32> to vector<1x64xf32>
    %697 = arith.mulf %606, %691 : vector<16x64xf32>
    %698 = arith.addf %697, %646 : vector<16x64xf32>
    %699 = vector.extract_strided_slice %574 {offsets = [0, 7], sizes = [16, 1], strides = [1, 1]} : vector<16x8xf32> to vector<16x1xf32>
    %700 = vector.broadcast %699 : vector<16x1xf32> to vector<16x64xf32>
    %701 = arith.mulf %698, %700 : vector<16x64xf32>
    %cst_145 = arith.constant dense<0.000000e+00> : vector<64xf32>
    %702 = vector.multi_reduction <add>, %701, %cst_145 [0] : vector<16x64xf32> to vector<64xf32>
    %703 = vector.shape_cast %702 : vector<64xf32> to vector<1x64xf32>
    %704 = tpu.concatenate %654, %661, %668, %675, %682, %689, %696, %703 in 0 : vector<1x64xf32>, vector<1x64xf32>, vector<1x64xf32>, vector<1x64xf32>, vector<1x64xf32>, vector<1x64xf32>, vector<1x64xf32>, vector<1x64xf32> -> vector<8x64xf32>
    %705 = vector.extract_strided_slice %553 {offsets = [8, 0], sizes = [8, 64], strides = [1, 1]} : vector<16x64xf32> to vector<8x64xf32>
    %706 = vector.extract_strided_slice %568 {offsets = [8, 0], sizes = [8, 64], strides = [1, 1]} : vector<16x64xf32> to vector<8x64xf32>
    %707 = vector.extract_strided_slice %526 {offsets = [8, 0], sizes = [8, 16], strides = [1, 1]} : vector<16x16xf32> to vector<8x16xf32>
    %708 = tpu.transpose %707, [1, 0] : vector<8x16xf32> -> vector<16x8xf32>
    %709 = vector.extract_strided_slice %527 {offsets = [8, 0], sizes = [8, 16], strides = [1, 1]} : vector<16x16xf32> to vector<8x16xf32>
    %710 = tpu.transpose %709, [1, 0] : vector<8x16xf32> -> vector<16x8xf32>
    %711 = vector.extract_strided_slice %705 {offsets = [0, 0], sizes = [1, 64], strides = [1, 1]} : vector<8x64xf32> to vector<1x64xf32>
    %712 = vector.broadcast %711 : vector<1x64xf32> to vector<16x64xf32>
    %713 = arith.mulf %558, %712 : vector<16x64xf32>
    %714 = math.exp %713 : vector<16x64xf32>
    %715 = vector.extract_strided_slice %705 {offsets = [1, 0], sizes = [1, 64], strides = [1, 1]} : vector<8x64xf32> to vector<1x64xf32>
    %716 = vector.broadcast %715 : vector<1x64xf32> to vector<16x64xf32>
    %717 = arith.mulf %558, %716 : vector<16x64xf32>
    %718 = math.exp %717 : vector<16x64xf32>
    %719 = vector.extract_strided_slice %705 {offsets = [2, 0], sizes = [1, 64], strides = [1, 1]} : vector<8x64xf32> to vector<1x64xf32>
    %720 = vector.broadcast %719 : vector<1x64xf32> to vector<16x64xf32>
    %721 = arith.mulf %558, %720 : vector<16x64xf32>
    %722 = math.exp %721 : vector<16x64xf32>
    %723 = vector.extract_strided_slice %705 {offsets = [3, 0], sizes = [1, 64], strides = [1, 1]} : vector<8x64xf32> to vector<1x64xf32>
    %724 = vector.broadcast %723 : vector<1x64xf32> to vector<16x64xf32>
    %725 = arith.mulf %558, %724 : vector<16x64xf32>
    %726 = math.exp %725 : vector<16x64xf32>
    %727 = vector.extract_strided_slice %705 {offsets = [4, 0], sizes = [1, 64], strides = [1, 1]} : vector<8x64xf32> to vector<1x64xf32>
    %728 = vector.broadcast %727 : vector<1x64xf32> to vector<16x64xf32>
    %729 = arith.mulf %558, %728 : vector<16x64xf32>
    %730 = math.exp %729 : vector<16x64xf32>
    %731 = vector.extract_strided_slice %705 {offsets = [5, 0], sizes = [1, 64], strides = [1, 1]} : vector<8x64xf32> to vector<1x64xf32>
    %732 = vector.broadcast %731 : vector<1x64xf32> to vector<16x64xf32>
    %733 = arith.mulf %558, %732 : vector<16x64xf32>
    %734 = math.exp %733 : vector<16x64xf32>
    %735 = vector.extract_strided_slice %705 {offsets = [6, 0], sizes = [1, 64], strides = [1, 1]} : vector<8x64xf32> to vector<1x64xf32>
    %736 = vector.broadcast %735 : vector<1x64xf32> to vector<16x64xf32>
    %737 = arith.mulf %558, %736 : vector<16x64xf32>
    %738 = math.exp %737 : vector<16x64xf32>
    %739 = vector.extract_strided_slice %705 {offsets = [7, 0], sizes = [1, 64], strides = [1, 1]} : vector<8x64xf32> to vector<1x64xf32>
    %740 = vector.broadcast %739 : vector<1x64xf32> to vector<16x64xf32>
    %741 = arith.mulf %558, %740 : vector<16x64xf32>
    %742 = math.exp %741 : vector<16x64xf32>
    %743 = vector.extract_strided_slice %706 {offsets = [0, 0], sizes = [1, 64], strides = [1, 1]} : vector<8x64xf32> to vector<1x64xf32>
    %744 = vector.extract_strided_slice %708 {offsets = [0, 0], sizes = [16, 1], strides = [1, 1]} : vector<16x8xf32> to vector<16x1xf32>
    %745 = vector.broadcast %743 : vector<1x64xf32> to vector<16x64xf32>
    %746 = vector.broadcast %744 : vector<16x1xf32> to vector<16x64xf32>
    %747 = arith.mulf %745, %746 : vector<16x64xf32>
    %748 = vector.extract_strided_slice %706 {offsets = [1, 0], sizes = [1, 64], strides = [1, 1]} : vector<8x64xf32> to vector<1x64xf32>
    %749 = vector.extract_strided_slice %708 {offsets = [0, 1], sizes = [16, 1], strides = [1, 1]} : vector<16x8xf32> to vector<16x1xf32>
    %750 = vector.broadcast %748 : vector<1x64xf32> to vector<16x64xf32>
    %751 = vector.broadcast %749 : vector<16x1xf32> to vector<16x64xf32>
    %752 = arith.mulf %750, %751 : vector<16x64xf32>
    %753 = vector.extract_strided_slice %706 {offsets = [2, 0], sizes = [1, 64], strides = [1, 1]} : vector<8x64xf32> to vector<1x64xf32>
    %754 = vector.extract_strided_slice %708 {offsets = [0, 2], sizes = [16, 1], strides = [1, 1]} : vector<16x8xf32> to vector<16x1xf32>
    %755 = vector.broadcast %753 : vector<1x64xf32> to vector<16x64xf32>
    %756 = vector.broadcast %754 : vector<16x1xf32> to vector<16x64xf32>
    %757 = arith.mulf %755, %756 : vector<16x64xf32>
    %758 = vector.extract_strided_slice %706 {offsets = [3, 0], sizes = [1, 64], strides = [1, 1]} : vector<8x64xf32> to vector<1x64xf32>
    %759 = vector.extract_strided_slice %708 {offsets = [0, 3], sizes = [16, 1], strides = [1, 1]} : vector<16x8xf32> to vector<16x1xf32>
    %760 = vector.broadcast %758 : vector<1x64xf32> to vector<16x64xf32>
    %761 = vector.broadcast %759 : vector<16x1xf32> to vector<16x64xf32>
    %762 = arith.mulf %760, %761 : vector<16x64xf32>
    %763 = vector.extract_strided_slice %706 {offsets = [4, 0], sizes = [1, 64], strides = [1, 1]} : vector<8x64xf32> to vector<1x64xf32>
    %764 = vector.extract_strided_slice %708 {offsets = [0, 4], sizes = [16, 1], strides = [1, 1]} : vector<16x8xf32> to vector<16x1xf32>
    %765 = vector.broadcast %763 : vector<1x64xf32> to vector<16x64xf32>
    %766 = vector.broadcast %764 : vector<16x1xf32> to vector<16x64xf32>
    %767 = arith.mulf %765, %766 : vector<16x64xf32>
    %768 = vector.extract_strided_slice %706 {offsets = [5, 0], sizes = [1, 64], strides = [1, 1]} : vector<8x64xf32> to vector<1x64xf32>
    %769 = vector.extract_strided_slice %708 {offsets = [0, 5], sizes = [16, 1], strides = [1, 1]} : vector<16x8xf32> to vector<16x1xf32>
    %770 = vector.broadcast %768 : vector<1x64xf32> to vector<16x64xf32>
    %771 = vector.broadcast %769 : vector<16x1xf32> to vector<16x64xf32>
    %772 = arith.mulf %770, %771 : vector<16x64xf32>
    %773 = vector.extract_strided_slice %706 {offsets = [6, 0], sizes = [1, 64], strides = [1, 1]} : vector<8x64xf32> to vector<1x64xf32>
    %774 = vector.extract_strided_slice %708 {offsets = [0, 6], sizes = [16, 1], strides = [1, 1]} : vector<16x8xf32> to vector<16x1xf32>
    %775 = vector.broadcast %773 : vector<1x64xf32> to vector<16x64xf32>
    %776 = vector.broadcast %774 : vector<16x1xf32> to vector<16x64xf32>
    %777 = arith.mulf %775, %776 : vector<16x64xf32>
    %778 = vector.extract_strided_slice %706 {offsets = [7, 0], sizes = [1, 64], strides = [1, 1]} : vector<8x64xf32> to vector<1x64xf32>
    %779 = vector.extract_strided_slice %708 {offsets = [0, 7], sizes = [16, 1], strides = [1, 1]} : vector<16x8xf32> to vector<16x1xf32>
    %780 = vector.broadcast %778 : vector<1x64xf32> to vector<16x64xf32>
    %781 = vector.broadcast %779 : vector<16x1xf32> to vector<16x64xf32>
    %782 = arith.mulf %780, %781 : vector<16x64xf32>
    %cst_146 = arith.constant 0.000000e+00 : f32
    %783 = vector.broadcast %cst_146 : f32 to vector<16x64xf32>
    %784 = arith.mulf %714, %783 : vector<16x64xf32>
    %785 = arith.addf %784, %747 : vector<16x64xf32>
    %786 = vector.extract_strided_slice %710 {offsets = [0, 0], sizes = [16, 1], strides = [1, 1]} : vector<16x8xf32> to vector<16x1xf32>
    %787 = vector.broadcast %786 : vector<16x1xf32> to vector<16x64xf32>
    %788 = arith.mulf %785, %787 : vector<16x64xf32>
    %cst_147 = arith.constant dense<0.000000e+00> : vector<64xf32>
    %789 = vector.multi_reduction <add>, %788, %cst_147 [0] : vector<16x64xf32> to vector<64xf32>
    %790 = vector.shape_cast %789 : vector<64xf32> to vector<1x64xf32>
    %791 = arith.mulf %718, %785 : vector<16x64xf32>
    %792 = arith.addf %791, %752 : vector<16x64xf32>
    %793 = vector.extract_strided_slice %710 {offsets = [0, 1], sizes = [16, 1], strides = [1, 1]} : vector<16x8xf32> to vector<16x1xf32>
    %794 = vector.broadcast %793 : vector<16x1xf32> to vector<16x64xf32>
    %795 = arith.mulf %792, %794 : vector<16x64xf32>
    %cst_148 = arith.constant dense<0.000000e+00> : vector<64xf32>
    %796 = vector.multi_reduction <add>, %795, %cst_148 [0] : vector<16x64xf32> to vector<64xf32>
    %797 = vector.shape_cast %796 : vector<64xf32> to vector<1x64xf32>
    %798 = arith.mulf %722, %792 : vector<16x64xf32>
    %799 = arith.addf %798, %757 : vector<16x64xf32>
    %800 = vector.extract_strided_slice %710 {offsets = [0, 2], sizes = [16, 1], strides = [1, 1]} : vector<16x8xf32> to vector<16x1xf32>
    %801 = vector.broadcast %800 : vector<16x1xf32> to vector<16x64xf32>
    %802 = arith.mulf %799, %801 : vector<16x64xf32>
    %cst_149 = arith.constant dense<0.000000e+00> : vector<64xf32>
    %803 = vector.multi_reduction <add>, %802, %cst_149 [0] : vector<16x64xf32> to vector<64xf32>
    %804 = vector.shape_cast %803 : vector<64xf32> to vector<1x64xf32>
    %805 = arith.mulf %726, %799 : vector<16x64xf32>
    %806 = arith.addf %805, %762 : vector<16x64xf32>
    %807 = vector.extract_strided_slice %710 {offsets = [0, 3], sizes = [16, 1], strides = [1, 1]} : vector<16x8xf32> to vector<16x1xf32>
    %808 = vector.broadcast %807 : vector<16x1xf32> to vector<16x64xf32>
    %809 = arith.mulf %806, %808 : vector<16x64xf32>
    %cst_150 = arith.constant dense<0.000000e+00> : vector<64xf32>
    %810 = vector.multi_reduction <add>, %809, %cst_150 [0] : vector<16x64xf32> to vector<64xf32>
    %811 = vector.shape_cast %810 : vector<64xf32> to vector<1x64xf32>
    %812 = arith.mulf %730, %806 : vector<16x64xf32>
    %813 = arith.addf %812, %767 : vector<16x64xf32>
    %814 = vector.extract_strided_slice %710 {offsets = [0, 4], sizes = [16, 1], strides = [1, 1]} : vector<16x8xf32> to vector<16x1xf32>
    %815 = vector.broadcast %814 : vector<16x1xf32> to vector<16x64xf32>
    %816 = arith.mulf %813, %815 : vector<16x64xf32>
    %cst_151 = arith.constant dense<0.000000e+00> : vector<64xf32>
    %817 = vector.multi_reduction <add>, %816, %cst_151 [0] : vector<16x64xf32> to vector<64xf32>
    %818 = vector.shape_cast %817 : vector<64xf32> to vector<1x64xf32>
    %819 = arith.mulf %734, %813 : vector<16x64xf32>
    %820 = arith.addf %819, %772 : vector<16x64xf32>
    %821 = vector.extract_strided_slice %710 {offsets = [0, 5], sizes = [16, 1], strides = [1, 1]} : vector<16x8xf32> to vector<16x1xf32>
    %822 = vector.broadcast %821 : vector<16x1xf32> to vector<16x64xf32>
    %823 = arith.mulf %820, %822 : vector<16x64xf32>
    %cst_152 = arith.constant dense<0.000000e+00> : vector<64xf32>
    %824 = vector.multi_reduction <add>, %823, %cst_152 [0] : vector<16x64xf32> to vector<64xf32>
    %825 = vector.shape_cast %824 : vector<64xf32> to vector<1x64xf32>
    %826 = arith.mulf %738, %820 : vector<16x64xf32>
    %827 = arith.addf %826, %777 : vector<16x64xf32>
    %828 = vector.extract_strided_slice %710 {offsets = [0, 6], sizes = [16, 1], strides = [1, 1]} : vector<16x8xf32> to vector<16x1xf32>
    %829 = vector.broadcast %828 : vector<16x1xf32> to vector<16x64xf32>
    %830 = arith.mulf %827, %829 : vector<16x64xf32>
    %cst_153 = arith.constant dense<0.000000e+00> : vector<64xf32>
    %831 = vector.multi_reduction <add>, %830, %cst_153 [0] : vector<16x64xf32> to vector<64xf32>
    %832 = vector.shape_cast %831 : vector<64xf32> to vector<1x64xf32>
    %833 = arith.mulf %742, %827 : vector<16x64xf32>
    %834 = arith.addf %833, %782 : vector<16x64xf32>
    %835 = vector.extract_strided_slice %710 {offsets = [0, 7], sizes = [16, 1], strides = [1, 1]} : vector<16x8xf32> to vector<16x1xf32>
    %836 = vector.broadcast %835 : vector<16x1xf32> to vector<16x64xf32>
    %837 = arith.mulf %834, %836 : vector<16x64xf32>
    %cst_154 = arith.constant dense<0.000000e+00> : vector<64xf32>
    %838 = vector.multi_reduction <add>, %837, %cst_154 [0] : vector<16x64xf32> to vector<64xf32>
    %839 = vector.shape_cast %838 : vector<64xf32> to vector<1x64xf32>
    %840 = tpu.concatenate %790, %797, %804, %811, %818, %825, %832, %839 in 0 : vector<1x64xf32>, vector<1x64xf32>, vector<1x64xf32>, vector<1x64xf32>, vector<1x64xf32>, vector<1x64xf32>, vector<1x64xf32>, vector<1x64xf32> -> vector<8x64xf32>
    %841 = tpu.concatenate %704, %840 in 0 : vector<8x64xf32>, vector<8x64xf32> -> vector<16x64xf32>
    %842 = vector.broadcast %559 : vector<1x64xf32> to vector<16x64xf32>
    %843 = arith.mulf %842, %521 : vector<16x64xf32>
    %844 = arith.addf %841, %843 : vector<16x64xf32>
    %845 = arith.mulf %844, %567 : vector<16x64xf32>
    %c1_155 = arith.constant 1 : index
    %c0_156 = arith.constant 0 : index
    %c0_157 = arith.constant 0 : index
    %846 = vector.load %arg14[%c1_155, %c0_156, %c0_157] : memref<2x64x32xf32, #tpu.memory_space<vmem>>, vector<1x64x32xf32>
    %847 = vector.shape_cast %846 : vector<1x64x32xf32> to vector<64x32xf32>
    %cst_158 = arith.constant dense<0.000000e+00> : vector<16x32xf32>
    %848 = tpu.matmul %845, %847, %cst_158 {dimension_numbers = #tpu.dot_dimension_numbers<[1], [0], [0], [1], [0, 0, 1, 1], [], []>} : vector<16x64xf32>, vector<64x32xf32>, vector<16x32xf32> -> vector<16x32xf32>
    %849 = arith.addf %451, %848 : vector<16x32xf32>
    %c0_159 = arith.constant 0 : index
    %c0_160 = arith.constant 0 : index
    %850 = vector.load %arg15[%c0_159, %c0_160] : memref<32x64xf32, #tpu.memory_space<vmem>>, vector<32x64xf32>
    %cst_161 = arith.constant dense<0.000000e+00> : vector<16x64xf32>
    %851 = tpu.matmul %849, %850, %cst_161 {dimension_numbers = #tpu.dot_dimension_numbers<[1], [0], [0], [1], [0, 0, 1, 1], [], []>} : vector<16x32xf32>, vector<32x64xf32>, vector<16x64xf32> -> vector<16x64xf32>
    %c0_162 = arith.constant 0 : index
    %c0_163 = arith.constant 0 : index
    %852 = vector.load %arg16[%c0_162, %c0_163] : memref<1x64xf32, #tpu.memory_space<vmem>>, vector<1x64xf32>
    %853 = vector.broadcast %852 : vector<1x64xf32> to vector<16x64xf32>
    %854 = arith.addf %851, %853 : vector<16x64xf32>
    %cst_164 = arith.constant 0.000000e+00 : f32
    %855 = vector.broadcast %cst_164 : f32 to vector<16x64xf32>
    %856 = arith.maximumf %854, %855 : vector<16x64xf32>
    %c0_165 = arith.constant 0 : index
    %c0_166 = arith.constant 0 : index
    %857 = vector.load %arg17[%c0_165, %c0_166] : memref<64x256xf32, #tpu.memory_space<vmem>>, vector<64x256xf32>
    %cst_167 = arith.constant dense<0.000000e+00> : vector<16x256xf32>
    %858 = tpu.matmul %856, %857, %cst_167 {dimension_numbers = #tpu.dot_dimension_numbers<[1], [0], [0], [1], [0, 0, 1, 1], [], []>} : vector<16x64xf32>, vector<64x256xf32>, vector<16x256xf32> -> vector<16x256xf32>
    %c0_168 = arith.constant 0 : index
    %c0_169 = arith.constant 0 : index
    %859 = vector.load %arg18[%c0_168, %c0_169] : memref<1x256xf32, #tpu.memory_space<vmem>>, vector<1x256xf32>
    %860 = vector.broadcast %859 : vector<1x256xf32> to vector<16x256xf32>
    %861 = arith.addf %858, %860 : vector<16x256xf32>
    %c0_170 = arith.constant 0 : index
    %c0_171 = arith.constant 0 : index
    %862 = vector.load %arg19[%c0_170, %c0_171] : memref<16x256xf32, #tpu.memory_space<vmem>>, vector<16x256xf32>
    tpu.vector_store %arg19[%c0_170, %c0_171], %861 {strides = array<i32>} : memref<16x256xf32, #tpu.memory_space<vmem>>, vector<16x256xf32>,
    return
  }
  func.func @transform_0(%arg0: i32) -> (i32, i32) {
    %c0_i32 = arith.constant 0 : i32
    %c0_i32_0 = arith.constant 0 : i32
    %c0_i32_1 = arith.constant 0 : i32
    return %c0_i32, %c0_i32_0 : i32, i32
  }
  func.func @transform_1(%arg0: i32) -> (i32, i32) {
    %c0_i32 = arith.constant 0 : i32
    %c0_i32_0 = arith.constant 0 : i32
    %c0_i32_1 = arith.constant 0 : i32
    return %c0_i32, %c0_i32_0 : i32, i32
  }
  func.func @transform_2(%arg0: i32) -> (i32, i32) {
    %c0_i32 = arith.constant 0 : i32
    %c0_i32_0 = arith.constant 0 : i32
    %c0_i32_1 = arith.constant 0 : i32
    return %c0_i32, %c0_i32_0 : i32, i32
  }
  func.func @transform_3(%arg0: i32) -> (i32, i32) {
    %c0_i32 = arith.constant 0 : i32
    %c0_i32_0 = arith.constant 0 : i32
    %c0_i32_1 = arith.constant 0 : i32
    return %c0_i32, %c0_i32_0 : i32, i32
  }
  func.func @transform_4(%arg0: i32) -> (i32, i32) {
    %c0_i32 = arith.constant 0 : i32
    %c0_i32_0 = arith.constant 0 : i32
    %c0_i32_1 = arith.constant 0 : i32
    return %c0_i32, %c0_i32_0 : i32, i32
  }
  func.func @transform_5(%arg0: i32) -> (i32, i32, i32) {
    %c0_i32 = arith.constant 0 : i32
    %c0_i32_0 = arith.constant 0 : i32
    %c0_i32_1 = arith.constant 0 : i32
    %c0_i32_2 = arith.constant 0 : i32
    return %c0_i32, %c0_i32_0, %c0_i32_1 : i32, i32, i32
  }
  func.func @transform_6(%arg0: i32) -> (i32, i32, i32) {
    %c0_i32 = arith.constant 0 : i32
    %c0_i32_0 = arith.constant 0 : i32
    %c0_i32_1 = arith.constant 0 : i32
    %c0_i32_2 = arith.constant 0 : i32
    return %c0_i32, %c0_i32_0, %c0_i32_1 : i32, i32, i32
  }
  func.func @transform_7(%arg0: i32) -> (i32, i32) {
    %c0_i32 = arith.constant 0 : i32
    %c0_i32_0 = arith.constant 0 : i32
    %c0_i32_1 = arith.constant 0 : i32
    return %c0_i32, %c0_i32_0 : i32, i32
  }
  func.func @transform_8(%arg0: i32) -> (i32, i32, i32) {
    %c0_i32 = arith.constant 0 : i32
    %c0_i32_0 = arith.constant 0 : i32
    %c0_i32_1 = arith.constant 0 : i32
    %c0_i32_2 = arith.constant 0 : i32
    return %c0_i32, %c0_i32_0, %c0_i32_1 : i32, i32, i32
  }
  func.func @transform_9(%arg0: i32) -> (i32, i32, i32) {
    %c0_i32 = arith.constant 0 : i32
    %c0_i32_0 = arith.constant 0 : i32
    %c0_i32_1 = arith.constant 0 : i32
    %c0_i32_2 = arith.constant 0 : i32
    return %c0_i32, %c0_i32_0, %c0_i32_1 : i32, i32, i32
  }
  func.func @transform_10(%arg0: i32) -> (i32, i32) {
    %c0_i32 = arith.constant 0 : i32
    %c0_i32_0 = arith.constant 0 : i32
    %c0_i32_1 = arith.constant 0 : i32
    return %c0_i32, %c0_i32_0 : i32, i32
  }
  func.func @transform_11(%arg0: i32) -> (i32, i32, i32) {
    %c0_i32 = arith.constant 0 : i32
    %c0_i32_0 = arith.constant 0 : i32
    %c0_i32_1 = arith.constant 0 : i32
    %c0_i32_2 = arith.constant 0 : i32
    return %c0_i32, %c0_i32_0, %c0_i32_1 : i32, i32, i32
  }
  func.func @transform_12(%arg0: i32) -> (i32, i32) {
    %c0_i32 = arith.constant 0 : i32
    %c0_i32_0 = arith.constant 0 : i32
    %c0_i32_1 = arith.constant 0 : i32
    return %c0_i32, %c0_i32_0 : i32, i32
  }
  func.func @transform_13(%arg0: i32) -> (i32, i32, i32) {
    %c0_i32 = arith.constant 0 : i32
    %c0_i32_0 = arith.constant 0 : i32
    %c0_i32_1 = arith.constant 0 : i32
    %c0_i32_2 = arith.constant 0 : i32
    return %c0_i32, %c0_i32_0, %c0_i32_1 : i32, i32, i32
  }
  func.func @transform_14(%arg0: i32) -> (i32, i32) {
    %c0_i32 = arith.constant 0 : i32
    %c0_i32_0 = arith.constant 0 : i32
    %c0_i32_1 = arith.constant 0 : i32
    return %c0_i32, %c0_i32_0 : i32, i32
  }
  func.func @transform_15(%arg0: i32) -> (i32, i32) {
    %c0_i32 = arith.constant 0 : i32
    %c0_i32_0 = arith.constant 0 : i32
    %c0_i32_1 = arith.constant 0 : i32
    return %c0_i32, %c0_i32_0 : i32, i32
  }
  func.func @transform_16(%arg0: i32) -> (i32, i32) {
    %c0_i32 = arith.constant 0 : i32
    %c0_i32_0 = arith.constant 0 : i32
    %c0_i32_1 = arith.constant 0 : i32
    return %c0_i32, %c0_i32_0 : i32, i32
  }
  func.func @transform_17(%arg0: i32) -> (i32, i32) {
    %c0_i32 = arith.constant 0 : i32
    %c0_i32_0 = arith.constant 0 : i32
    %c0_i32_1 = arith.constant 0 : i32
    return %c0_i32, %c0_i32_0 : i32, i32
  }
  func.func @transform_18(%arg0: i32) -> (i32, i32) {
    %c0_i32 = arith.constant 0 : i32
    %c0_i32_0 = arith.constant 0 : i32
    %c0_i32_1 = arith.constant 0 : i32
    return %c0_i32, %c0_i32_0 : i32, i32
  }
}

</mosaic_0001>

<llo_original>
// kernel: transformer_model_forward.1
$region0: #{transformer_model_forward.1}
  #allocation0 [shape = 'u32[]', space=smem, size = 0x4, offset = 0x4, fixed_abs, tag = 'smem constant byte address 0x4 - core index']
  #allocation1 [shape = 'u32[144,128]{1,0:T(1,128)}', space=vmem, size = 0x12000, scoped, tag = 'internal scratch']
  %s0 = inlined_call_operand.vmem [shape: s32[16,1], index: 0, kind: input, shape index: {}]
  %s1 = inlined_call_operand.vmem [shape: f32[32,32], index: 1, kind: input, shape index: {}]
  %s2 = inlined_call_operand.vmem [shape: f32[256,32], index: 2, kind: input, shape index: {}]
  %s3 = inlined_call_operand.vmem [shape: f32[2,32], index: 3, kind: input, shape index: {}]
  %s4 = inlined_call_operand.vmem [shape: f32[2,32], index: 4, kind: input, shape index: {}]
  %s5 = inlined_call_operand.vmem [shape: f32[2,32,128], index: 5, kind: input, shape index: {}]
  %s6 = inlined_call_operand.vmem [shape: f32[2,4,64], index: 6, kind: input, shape index: {}]
  %s7 = inlined_call_operand.vmem [shape: f32[2,64], index: 7, kind: input, shape index: {}]
  %s8 = inlined_call_operand.vmem [shape: f32[2,64,34], index: 8, kind: input, shape index: {}]
  %s9 = inlined_call_operand.vmem [shape: f32[2,2,64], index: 9, kind: input, shape index: {}]
  %s10 = inlined_call_operand.vmem [shape: f32[2,64], index: 10, kind: input, shape index: {}]
  %s11 = inlined_call_operand.vmem [shape: f32[2,16,64], index: 11, kind: input, shape index: {}]
  %s12 = inlined_call_operand.vmem [shape: f32[2,64], index: 12, kind: input, shape index: {}]
  %s13 = inlined_call_operand.vmem [shape: f32[2,64,32], index: 13, kind: input, shape index: {}]
  %s14 = inlined_call_operand.vmem [shape: f32[32,64], index: 14, kind: input, shape index: {}]
  %s15 = inlined_call_operand.vmem [shape: f32[1,64], index: 15, kind: input, shape index: {}]
  %s16 = inlined_call_operand.vmem [shape: f32[64,256], index: 16, kind: input, shape index: {}]
  %s17 = inlined_call_operand.vmem [shape: f32[1,256], index: 17, kind: input, shape index: {}]
  %s18 = inlined_call_operand.hbm [shape: f32[16,256], index: 18, kind: output, shape index: {}]
  %s19 = sld [smem:[#allocation0]]
  $region82: #{transformer_model_forward.1} parent=0
    _
  %s21 = ssub.s32 1, %s19
  %s22 = scalar_select 0, %s21, %s19
  $region1: #{transformer_model_forward.1} parent=0
    #allocation2 [shape = 'u8[16384]{0}', space=vmem, size = 0x4000, scoped, tag = 'output window, operand 0, single buffered']
    #allocation3 [shape = 's32[1]{0}', space=sflag, size = 0x4, scoped, tag = 'scoped memory for transformer_model_forward.1']
    %23 = vsyncpa [#allocation3], 0
    // Predicated region
    $region2: #{transformer_model_forward.1} parent=1 // pred_check
      _
    $region3: #{transformer_model_forward.1} parent=1 // pred_check_branch
      %25 = sbr.rel (0) target = $region5
    $region4: #{transformer_model_forward.1} parent=1 // pred_region
      _
    $region5: #{transformer_model_forward.1} parent=1 // pred_fallthru
      _
    // Predicated region
    $region6: #{transformer_model_forward.1} parent=1 // pred_check
      _
    $region7: #{transformer_model_forward.1} parent=1 // pred_check_branch
      %27 = sbr.rel (0) target = $region9
    $region8: #{transformer_model_forward.1} parent=1 // pred_region
      _
    $region9: #{transformer_model_forward.1} parent=1 // pred_fallthru
      _
    // Predicated region
    $region10: #{transformer_model_forward.1} parent=1 // pred_check
      _
    $region11: #{transformer_model_forward.1} parent=1 // pred_check_branch
      %29 = sbr.rel (0) target = $region13
    $region12: #{transformer_model_forward.1} parent=1 // pred_region
      _
    $region13: #{transformer_model_forward.1} parent=1 // pred_fallthru
      _
    // Predicated region
    $region14: #{transformer_model_forward.1} parent=1 // pred_check
      _
    $region15: #{transformer_model_forward.1} parent=1 // pred_check_branch
      %31 = sbr.rel (0) target = $region17
    $region16: #{transformer_model_forward.1} parent=1 // pred_region
      _
    $region17: #{transformer_model_forward.1} parent=1 // pred_fallthru
      _
    // Predicated region
    $region18: #{transformer_model_forward.1} parent=1 // pred_check
      _
    $region19: #{transformer_model_forward.1} parent=1 // pred_check_branch
      %33 = sbr.rel (0) target = $region21
    $region20: #{transformer_model_forward.1} parent=1 // pred_region
      _
    $region21: #{transformer_model_forward.1} parent=1 // pred_fallthru
      _
    // Predicated region
    $region22: #{transformer_model_forward.1} parent=1 // pred_check
      _
    $region23: #{transformer_model_forward.1} parent=1 // pred_check_branch
      %35 = sbr.rel (0) target = $region25
    $region24: #{transformer_model_forward.1} parent=1 // pred_region
      _
    $region25: #{transformer_model_forward.1} parent=1 // pred_fallthru
      _
    // Predicated region
    $region26: #{transformer_model_forward.1} parent=1 // pred_check
      _
    $region27: #{transformer_model_forward.1} parent=1 // pred_check_branch
      %37 = sbr.rel (0) target = $region29
    $region28: #{transformer_model_forward.1} parent=1 // pred_region
      _
    $region29: #{transformer_model_forward.1} parent=1 // pred_fallthru
      _
    // Predicated region
    $region30: #{transformer_model_forward.1} parent=1 // pred_check
      _
    $region31: #{transformer_model_forward.1} parent=1 // pred_check_branch
      %39 = sbr.rel (0) target = $region33
    $region32: #{transformer_model_forward.1} parent=1 // pred_region
      _
    $region33: #{transformer_model_forward.1} parent=1 // pred_fallthru
      _
    // Predicated region
    $region34: #{transformer_model_forward.1} parent=1 // pred_check
      _
    $region35: #{transformer_model_forward.1} parent=1 // pred_check_branch
      %41 = sbr.rel (0) target = $region37
    $region36: #{transformer_model_forward.1} parent=1 // pred_region
      _
    $region37: #{transformer_model_forward.1} parent=1 // pred_fallthru
      _
    // Predicated region
    $region38: #{transformer_model_forward.1} parent=1 // pred_check
      _
    $region39: #{transformer_model_forward.1} parent=1 // pred_check_branch
      %43 = sbr.rel (0) target = $region41
    $region40: #{transformer_model_forward.1} parent=1 // pred_region
      _
    $region41: #{transformer_model_forward.1} parent=1 // pred_fallthru
      _
    // Predicated region
    $region42: #{transformer_model_forward.1} parent=1 // pred_check
      _
    $region43: #{transformer_model_forward.1} parent=1 // pred_check_branch
      %45 = sbr.rel (0) target = $region45
    $region44: #{transformer_model_forward.1} parent=1 // pred_region
      _
    $region45: #{transformer_model_forward.1} parent=1 // pred_fallthru
      _
    // Predicated region
    $region46: #{transformer_model_forward.1} parent=1 // pred_check
      _
    $region47: #{transformer_model_forward.1} parent=1 // pred_check_branch
      %47 = sbr.rel (0) target = $region49
    $region48: #{transformer_model_forward.1} parent=1 // pred_region
      _
    $region49: #{transformer_model_forward.1} parent=1 // pred_fallthru
      _
    // Predicated region
    $region50: #{transformer_model_forward.1} parent=1 // pred_check
      _
    $region51: #{transformer_model_forward.1} parent=1 // pred_check_branch
      %49 = sbr.rel (0) target = $region53
    $region52: #{transformer_model_forward.1} parent=1 // pred_region
      _
    $region53: #{transformer_model_forward.1} parent=1 // pred_fallthru
      _
    // Predicated region
    $region54: #{transformer_model_forward.1} parent=1 // pred_check
      _
    $region55: #{transformer_model_forward.1} parent=1 // pred_check_branch
      %51 = sbr.rel (0) target = $region57
    $region56: #{transformer_model_forward.1} parent=1 // pred_region
      _
    $region57: #{transformer_model_forward.1} parent=1 // pred_fallthru
      _
    // Predicated region
    $region58: #{transformer_model_forward.1} parent=1 // pred_check
      _
    $region59: #{transformer_model_forward.1} parent=1 // pred_check_branch
      %53 = sbr.rel (0) target = $region61
    $region60: #{transformer_model_forward.1} parent=1 // pred_region
      _
    $region61: #{transformer_model_forward.1} parent=1 // pred_fallthru
      _
    // Predicated region
    $region62: #{transformer_model_forward.1} parent=1 // pred_check
      _
    $region63: #{transformer_model_forward.1} parent=1 // pred_check_branch
      %55 = sbr.rel (0) target = $region65
    $region64: #{transformer_model_forward.1} parent=1 // pred_region
      _
    $region65: #{transformer_model_forward.1} parent=1 // pred_fallthru
      _
    // Predicated region
    $region66: #{transformer_model_forward.1} parent=1 // pred_check
      _
    $region67: #{transformer_model_forward.1} parent=1 // pred_check_branch
      %57 = sbr.rel (0) target = $region69
    $region68: #{transformer_model_forward.1} parent=1 // pred_region
      _
    $region69: #{transformer_model_forward.1} parent=1 // pred_fallthru
      _
    // Predicated region
    $region70: #{transformer_model_forward.1} parent=1 // pred_check
      _
    $region71: #{transformer_model_forward.1} parent=1 // pred_check_branch
      %59 = sbr.rel (0) target = $region73
    $region72: #{transformer_model_forward.1} parent=1 // pred_region
      _
    $region73: #{transformer_model_forward.1} parent=1 // pred_fallthru
      _
    %v60 = vld [vmem:[%s0] sm:$0xff]
    %v61 = vld [vmem:[%s0 + $0x8] sm:$0xff]
    %v62 = vlaneseq
    %v63 = vand.u32 %v62, 127
    %v64 = vadd.s32 %v63, 128
    %65 = vset.pattern.permute.xlu0 0
    %66 = vperm.xlu0 %65, %v60
    %v67 = vpop.permute.xlu0 %66
    %68 = vset.pattern.permute.xlu0 0
    %69 = vperm.xlu0 %68, %v61
    %v70 = vpop.permute.xlu0 %69
    %vm71 = vcmp.eq.s32.totalorder %v63, %v67
    %vm72 = vcmp.eq.s32.totalorder %v64, %v67
    %vm73 = vcmp.eq.s32.totalorder %v63, %v70
    %vm74 = vcmp.eq.s32.totalorder %v64, %v70
    %v75 = vsel %vm71, 1, 0
    %v76 = vsel %vm72, 1, 0
    %v77 = vsel %vm73, 1, 0
    %v78 = vsel %vm74, 1, 0
    %v79 = vcvt.s32.f32 %v75
    %v80 = vcvt.s32.f32 %v76
    %v81 = vcvt.s32.f32 %v77
    %v82 = vcvt.s32.f32 %v78
    %v83 = vld [vmem:[%s2] sm:$0xff]
    %v84 = vld [vmem:[%s2 + $0x8] sm:$0xff]
    %v85 = vld [vmem:[%s2 + $0x10] sm:$0xff]
    %v86 = vld [vmem:[%s2 + $0x18] sm:$0xff]
    %v87 = vld [vmem:[%s2 + $0x20] sm:$0xff]
    %v88 = vld [vmem:[%s2 + $0x28] sm:$0xff]
    %v89 = vld [vmem:[%s2 + $0x30] sm:$0xff]
    %v90 = vld [vmem:[%s2 + $0x38] sm:$0xff]
    %v91 = vld [vmem:[%s2 + $0x40] sm:$0xff]
    %v92 = vld [vmem:[%s2 + $0x48] sm:$0xff]
    %v93 = vld [vmem:[%s2 + $0x50] sm:$0xff]
    %v94 = vld [vmem:[%s2 + $0x58] sm:$0xff]
    %v95 = vld [vmem:[%s2 + $0x60] sm:$0xff]
    %v96 = vld [vmem:[%s2 + $0x68] sm:$0xff]
    %v97 = vld [vmem:[%s2 + $0x70] sm:$0xff]
    %v98 = vld [vmem:[%s2 + $0x78] sm:$0xff]
    %v99 = vld [vmem:[%s2 + $0x80] sm:$0xff]
    %v100 = vld [vmem:[%s2 + $0x88] sm:$0xff]
    %v101 = vld [vmem:[%s2 + $0x90] sm:$0xff]
    %v102 = vld [vmem:[%s2 + $0x98] sm:$0xff]
    %v103 = vld [vmem:[%s2 + $0xa0] sm:$0xff]
    %v104 = vld [vmem:[%s2 + $0xa8] sm:$0xff]
    %v105 = vld [vmem:[%s2 + $0xb0] sm:$0xff]
    %v106 = vld [vmem:[%s2 + $0xb8] sm:$0xff]
    %v107 = vld [vmem:[%s2 + $0xc0] sm:$0xff]
    %v108 = vld [vmem:[%s2 + $0xc8] sm:$0xff]
    %v109 = vld [vmem:[%s2 + $0xd0] sm:$0xff]
    %v110 = vld [vmem:[%s2 + $0xd8] sm:$0xff]
    %v111 = vld [vmem:[%s2 + $0xe0] sm:$0xff]
    %v112 = vld [vmem:[%s2 + $0xe8] sm:$0xff]
    %v113 = vld [vmem:[%s2 + $0xf0] sm:$0xff]
    %v114 = vld [vmem:[%s2 + $0xf8] sm:$0xff]
    %v115 = vld [vmem:[%s1] sm:$0xff]
    %v116 = vld [vmem:[%s1 + $0x8] sm:$0xff]
    %v117 = vadd.f32 %v115, 1e-20
    %v118 = vadd.f32 %v116, 1e-20
    %v119 = vlog2.pop %v117
    %v120 = vmul.f32 %v119, 0.6931472
    %v121 = vlog2.pop %v118
    %v122 = vmul.f32 %v121, 0.6931472
    %v123 = vsub.f32 0.0, %v120
    %v124 = vsub.f32 0.0, %v122
    %v125 = vadd.f32 %v123, 1e-20
    %v126 = vadd.f32 %v124, 1e-20
    %v127 = vlog2.pop %v125
    %v128 = vmul.f32 %v127, 0.6931472
    %v129 = vlog2.pop %v126
    %v130 = vmul.f32 %v129, 0.6931472
    %v131 = vsub.f32 0.0, %v128
    %v132 = vsub.f32 0.0, %v130
    %133 = vmatprep.subr.mxu0 0.0
    %134 = vmatpush1.msra.mxu0 %v98
    %135 = vmatprep.subr.mxu0 0.0
    %136 = vmatpush1.msra.mxu0 %v97
    %137 = vmatprep.subr.mxu0 0.0
    %138 = vmatpush1.msra.mxu0 %v96
    %139 = vmatprep.subr.mxu0 0.0
    %140 = vmatpush1.msra.mxu0 %v95
    %141 = vmatprep.subr.mxu0 0.0
    %142 = vmatpush1.msra.mxu0 %v94
    %143 = vmatprep.subr.mxu0 0.0
    %144 = vmatpush1.msra.mxu0 %v93
    %145 = vmatprep.subr.mxu0 0.0
    %146 = vmatpush1.msra.mxu0 %v92
    %147 = vmatprep.subr.mxu0 0.0
    %148 = vmatpush1.msra.mxu0 %v91
    %149 = vmatprep.subr.mxu0 0.0
    %150 = vmatpush1.msra.mxu0 %v90
    %151 = vmatprep.subr.mxu0 0.0
    %152 = vmatpush1.msra.mxu0 %v89
    %153 = vmatprep.subr.mxu0 0.0
    %154 = vmatpush1.msra.mxu0 %v88
    %155 = vmatprep.subr.mxu0 0.0
    %156 = vmatpush1.msra.mxu0 %v87
    %157 = vmatprep.subr.mxu0 0.0
    %158 = vmatpush1.msra.mxu0 %v86
    %159 = vmatprep.subr.mxu0 0.0
    %160 = vmatpush1.msra.mxu0 %v85
    %161 = vmatprep.subr.mxu0 0.0
    %162 = vmatpush1.msra.mxu0 %v84
    %163 = vmatprep.subr.mxu0 0.0
    %164 = vmatpush1.msra.mxu0 %v83
    %165 = vmatprep.subr.mxu0 0.0
    %166 = vmatpush2.msra.mxu0 %v114
    %167 = vmatprep.subr.mxu0 0.0
    %168 = vmatpush2.msra.mxu0 %v113
    %169 = vmatprep.subr.mxu0 0.0
    %170 = vmatpush2.msra.mxu0 %v112
    %171 = vmatprep.subr.mxu0 0.0
    %172 = vmatpush2.msra.mxu0 %v111
    %173 = vmatprep.subr.mxu0 0.0
    %174 = vmatpush2.msra.mxu0 %v110
    %175 = vmatprep.subr.mxu0 0.0
    %176 = vmatpush2.msra.mxu0 %v109
    %177 = vmatprep.subr.mxu0 0.0
    %178 = vmatpush2.msra.mxu0 %v108
    %179 = vmatprep.subr.mxu0 0.0
    %180 = vmatpush2.msra.mxu0 %v107
    %181 = vmatprep.subr.mxu0 0.0
    %182 = vmatpush2.msra.mxu0 %v106
    %183 = vmatprep.subr.mxu0 0.0
    %184 = vmatpush2.msra.mxu0 %v105
    %185 = vmatprep.subr.mxu0 0.0
    %186 = vmatpush2.msra.mxu0 %v104
    %187 = vmatprep.subr.mxu0 0.0
    %188 = vmatpush2.msra.mxu0 %v103
    %189 = vmatprep.subr.mxu0 0.0
    %190 = vmatpush2.msra.mxu0 %v102
    %191 = vmatprep.subr.mxu0 0.0
    %192 = vmatpush2.msra.mxu0 %v101
    %193 = vmatprep.subr.mxu0 0.0
    %194 = vmatpush2.msra.mxu0 %v100
    %195 = vmatprep.subr.mxu0 0.0
    %196 = vmatpush2.msra.mxu0 %v99
    %197 = vmatprep.mubr.f32.mxu0 %v80
    %198 = vmatmul.mubr.f32.gmra.mxu0 %v79
    %v199 = vpop.f32.mrf.mxu0
    %v200 = vadd.f32 %v131, %v199
    %v201 = vpop.f32.mrf.mxu0
    %202 = vmatprep.mubr.f32.mxu0 %v82
    %203 = vmatmul.mubr.f32.gmra.mxu0 %v81
    %v204 = vpop.f32.mrf.mxu0
    %v205 = vadd.f32 %v132, %v204
    %v206 = vpop.f32.mrf.mxu0
    %207 = vdwg.mxu0
    %vm208 = vcmask 261120
    %v209 = vsel %vm208, %v200, -inf
    %210 = vmax.xlane.f32.xlu0 %v209
    %v211 = vpop.xlane.xlu0 %210
    %v212 = vsel %vm208, %v205, -inf
    %213 = vmax.xlane.f32.xlu0 %v212
    %v214 = vpop.xlane.xlu0 %213
    %v215 = vsub.f32 %v200, %v211
    %v216 = vsub.f32 %v205, %v214
    %v217 = vmul.f32 %v215, 1.442695
    %v218 = vpow.pop %v217
    %v219 = vmul.f32 %v216, 1.442695
    %v220 = vpow.pop %v219
    %v221 = vsel %vm208, %v218, 0.0
    %222 = vadd.xlane.f32.xlu0 %v221
    %v223 = vpop.xlane.xlu0 %222
    %v224 = vsel %vm208, %v220, 0.0
    %225 = vadd.xlane.f32.xlu0 %v224
    %v226 = vpop.xlane.xlu0 %225
    %v227 = vrcp.pop %v223
    %v228 = vmul.f32 %v218, %v227
    %v229 = vrcp.pop %v226
    %v230 = vmul.f32 %v220, %v229
    %v231 = vsel %vm208, %v228, 0.0
    %232 = vadd.xlane.f32.xlu0 %v231
    %v233 = vpop.xlane.xlu0 %232
    %v234 = vsel %vm208, %v230, 0.0
    %235 = vadd.xlane.f32.xlu0 %v234
    %v236 = vpop.xlane.xlu0 %235
    %v237 = vrcp.pop 32.0
    %v238 = vmul.f32 %v233, %v237
    %v239 = vmul.f32 %v236, %v237
    %v240 = vsub.f32 %v228, %v238
    %v241 = vsub.f32 %v230, %v239
    %v242 = vmul.f32 %v240, %v240
    %v243 = vmul.f32 %v241, %v241
    %v244 = vsel %vm208, %v242, 0.0
    %245 = vadd.xlane.f32.xlu0 %v244
    %v246 = vpop.xlane.xlu0 %245
    %v247 = vsel %vm208, %v243, 0.0
    %248 = vadd.xlane.f32.xlu0 %v247
    %v249 = vpop.xlane.xlu0 %248
    %v250 = vmul.f32 %v246, %v237
    %v251 = vmul.f32 %v249, %v237
    %v252 = vadd.f32 %v250, 1e-05
    %v253 = vadd.f32 %v251, 1e-05
    %v254 = vrsqrt.pop %v252
    %v255 = vrsqrt.pop %v253
    %v256 = vmul.f32 %v240, %v254
    %v257 = vmul.f32 %v241, %v255
    %v258 = vld [vmem:[%s3] sm:$0x1]
    %v259 = vlaneseq
    %v260 = vshrl.u32 %v259, 7
    %v261 = vsub.s32 0, %v260
    %v262 = vrot.slane %v258, %v261
    %v263 = vmul.f32 %v256, %v262
    %v264 = vmul.f32 %v257, %v262
    %v265 = vld [vmem:[%s4] sm:$0x1]
    %v266 = vlaneseq
    %v267 = vshrl.u32 %v266, 7
    %v268 = vsub.s32 0, %v267
    %v269 = vrot.slane %v265, %v268
    %v270 = vadd.f32 %v263, %v269
    %v271 = vadd.f32 %v264, %v269
    %v272 = vld [vmem:[%s5] sm:$0xff]
    %v273 = vld [vmem:[%s5 + $0x8] sm:$0xff]
    %v274 = vld [vmem:[%s5 + $0x10] sm:$0xff]
    %v275 = vld [vmem:[%s5 + $0x18] sm:$0xff]
    %v277 = vsel %vm208, %v270, 0
    %v280 = vsel %vm208, %v271, 0
    %282 = vmatprep.subr.mxu0 0.0
    %283 = vmatpush1.msra.mxu0 0.0
    %284 = vmatprep.subr.mxu0 0.0
    %285 = vmatpush1.msra.mxu0 0.0
    %286 = vmatprep.subr.mxu0 0.0
    %287 = vmatpush1.msra.mxu0 0.0
    %288 = vmatprep.subr.mxu0 0.0
    %289 = vmatpush1.msra.mxu0 0.0
    %290 = vmatprep.subr.mxu0 0.0
    %291 = vmatpush1.msra.mxu0 0.0
    %292 = vmatprep.subr.mxu0 0.0
    %293 = vmatpush1.msra.mxu0 0.0
    %294 = vmatprep.subr.mxu0 0.0
    %295 = vmatpush1.msra.mxu0 0.0
    %296 = vmatprep.subr.mxu0 0.0
    %297 = vmatpush1.msra.mxu0 0.0
    %298 = vmatprep.subr.mxu0 0.0
    %299 = vmatpush1.msra.mxu0 0.0
    %300 = vmatprep.subr.mxu0 0.0
    %301 = vmatpush1.msra.mxu0 0.0
    %302 = vmatprep.subr.mxu0 0.0
    %303 = vmatpush1.msra.mxu0 0.0
    %304 = vmatprep.subr.mxu0 0.0
    %305 = vmatpush1.msra.mxu0 0.0
    %306 = vmatprep.subr.mxu0 0.0
    %307 = vmatpush1.msra.mxu0 %v275
    %308 = vmatprep.subr.mxu0 0.0
    %309 = vmatpush1.msra.mxu0 %v274
    %310 = vmatprep.subr.mxu0 0.0
    %311 = vmatpush1.msra.mxu0 %v273
    %312 = vmatprep.subr.mxu0 0.0
    %313 = vmatpush1.msra.mxu0 %v272
    %314 = vmatprep.subr.mxu0 0.0
    %315 = vmatpush2.msra.mxu0 0.0
    %316 = vmatprep.subr.mxu0 0.0
    %317 = vmatpush2.msra.mxu0 0.0
    %318 = vmatprep.subr.mxu0 0.0
    %319 = vmatpush2.msra.mxu0 0.0
    %320 = vmatprep.subr.mxu0 0.0
    %321 = vmatpush2.msra.mxu0 0.0
    %322 = vmatprep.subr.mxu0 0.0
    %323 = vmatpush2.msra.mxu0 0.0
    %324 = vmatprep.subr.mxu0 0.0
    %325 = vmatpush2.msra.mxu0 0.0
    %326 = vmatprep.subr.mxu0 0.0
    %327 = vmatpush2.msra.mxu0 0.0
    %328 = vmatprep.subr.mxu0 0.0
    %329 = vmatpush2.msra.mxu0 0.0
    %330 = vmatprep.subr.mxu0 0.0
    %331 = vmatpush2.msra.mxu0 0.0
    %332 = vmatprep.subr.mxu0 0.0
    %333 = vmatpush2.msra.mxu0 0.0
    %334 = vmatprep.subr.mxu0 0.0
    %335 = vmatpush2.msra.mxu0 0.0
    %336 = vmatprep.subr.mxu0 0.0
    %337 = vmatpush2.msra.mxu0 0.0
    %338 = vmatprep.subr.mxu0 0.0
    %339 = vmatpush2.msra.mxu0 0.0
    %340 = vmatprep.subr.mxu0 0.0
    %341 = vmatpush2.msra.mxu0 0.0
    %342 = vmatprep.subr.mxu0 0.0
    %343 = vmatpush2.msra.mxu0 0.0
    %344 = vmatprep.subr.mxu0 0.0
    %345 = vmatpush2.msra.mxu0 0.0
    %346 = vmatprep.mubr.f32.mxu0 0.0
    %347 = vmatmul.mubr.f32.gmra.mxu0 %v277
    %v348 = vpop.f32.mrf.mxu0
    %v349 = vadd.f32 0.0, %v348
    %v350 = vpop.f32.mrf.mxu0
    %351 = vmatprep.mubr.f32.mxu0 0.0
    %352 = vmatmul.mubr.f32.gmra.mxu0 %v280
    %v353 = vpop.f32.mrf.mxu0
    %v354 = vadd.f32 0.0, %v353
    %v355 = vpop.f32.mrf.mxu0
    %356 = vdwg.mxu0
    %v357 = vld [vmem:[%s6] sm:$0xf]
    %v358 = vld [vmem:[%s7] sm:$0x1]
    %v359 = vlaneseq
    %v360 = vshrl.u32 %v359, 7
    %v361 = vsub.s32 3, %v360
    %v362 = vrot.slane %v357, %v361
    %v363 = vmul.f32 %v362, %v349
    %v364 = vmul.f32 %v362, %v354
    %v365 = vlaneseq
    %v366 = vshrl.u32 %v365, 7
    %v367 = vsub.s32 0, %v366
    %v368 = vrot.slane %v358, %v367
    %v369 = vadd.f32 %v368, %v363
    %v370 = vadd.f32 %v368, %v364
    %v372 = vrot.slane %v349, 5
    %v375 = vrot.slane %v354, 5
    %vm377 = vcmask 1042432
    %v378 = vsel %vm377, 0.0, %v372
    %v379 = vsel %vm377, 0.0, %v375
    %v380 = vlaneseq
    %v381 = vshrl.u32 %v380, 7
    %v382 = vsub.s32 0, %v381
    %v383 = vrot.slane %v357, %v382
    %v384 = vmul.f32 %v383, %v378
    %v385 = vmul.f32 %v383, %v379
    %v386 = vadd.f32 %v369, %v384
    %v387 = vadd.f32 %v370, %v385
    %v388 = vrot.slane %v349, 6
    %v390 = vrot.slane %v354, 6
    %vm392 = vcmask 1041408
    %v393 = vsel %vm392, 0.0, %v388
    %v394 = vsel %vm392, 0.0, %v390
    %v395 = vlaneseq
    %v396 = vshrl.u32 %v395, 7
    %v397 = vsub.s32 1, %v396
    %v398 = vrot.slane %v357, %v397
    %v399 = vmul.f32 %v398, %v393
    %v400 = vmul.f32 %v398, %v394
    %v401 = vadd.f32 %v386, %v399
    %v402 = vadd.f32 %v387, %v400
    %v403 = vrot.slane %v349, 7
    %v405 = vrot.slane %v354, 7
    %vm407 = vcmask 1040384
    %v408 = vsel %vm407, 0.0, %v403
    %v409 = vsel %vm407, 0.0, %v405
    %v410 = vlaneseq
    %v411 = vshrl.u32 %v410, 7
    %v412 = vsub.s32 2, %v411
    %v413 = vrot.slane %v357, %v412
    %v414 = vmul.f32 %v413, %v408
    %v415 = vmul.f32 %v413, %v409
    %v416 = vadd.f32 %v401, %v414
    %v417 = vadd.f32 %v402, %v415
    %v418 = vsub.f32 0.0, %v416
    %v419 = vsub.f32 0.0, %v417
    %v420 = vmul.f32 %v418, 1.442695
    %v421 = vpow.pop %v420
    %v422 = vmul.f32 %v419, 1.442695
    %v423 = vpow.pop %v422
    %v424 = vadd.f32 %v421, 1.0
    %v425 = vadd.f32 %v423, 1.0
    %v426 = vrcp.pop %v424
    %v427 = vmul.f32 1.0, %v426
    %v428 = vrcp.pop %v425
    %v429 = vmul.f32 1.0, %v428
    %v430 = vmul.f32 %v416, %v427
    %v431 = vmul.f32 %v417, %v429
    %v432 = vld [vmem:[%s8] sm:$0xff]
    %v433 = vld [vmem:[%s8 + $0x8] sm:$0xff]
    %v434 = vld [vmem:[%s8 + $0x10] sm:$0xff]
    %v435 = vld [vmem:[%s8 + $0x18] sm:$0xff]
    %v436 = vld [vmem:[%s8 + $0x20] sm:$0xff]
    %v437 = vld [vmem:[%s8 + $0x28] sm:$0xff]
    %v438 = vld [vmem:[%s8 + $0x30] sm:$0xff]
    %v439 = vld [vmem:[%s8 + $0x38] sm:$0xff]
    %vm440 = vcmask 523264
    %v442 = vsel %vm440, %v430, 0
    %v445 = vsel %vm440, %v431, 0
    %447 = vmatprep.subr.mxu0 0.0
    %448 = vmatpush1.msra.mxu0 0.0
    %449 = vmatprep.subr.mxu0 0.0
    %450 = vmatpush1.msra.mxu0 0.0
    %451 = vmatprep.subr.mxu0 0.0
    %452 = vmatpush1.msra.mxu0 0.0
    %453 = vmatprep.subr.mxu0 0.0
    %454 = vmatpush1.msra.mxu0 0.0
    %455 = vmatprep.subr.mxu0 0.0
    %456 = vmatpush1.msra.mxu0 0.0
    %457 = vmatprep.subr.mxu0 0.0
    %458 = vmatpush1.msra.mxu0 0.0
    %459 = vmatprep.subr.mxu0 0.0
    %460 = vmatpush1.msra.mxu0 0.0
    %461 = vmatprep.subr.mxu0 0.0
    %462 = vmatpush1.msra.mxu0 0.0
    %463 = vmatprep.subr.mxu0 0.0
    %464 = vmatpush1.msra.mxu0 %v439
    %465 = vmatprep.subr.mxu0 0.0
    %466 = vmatpush1.msra.mxu0 %v438
    %467 = vmatprep.subr.mxu0 0.0
    %468 = vmatpush1.msra.mxu0 %v437
    %469 = vmatprep.subr.mxu0 0.0
    %470 = vmatpush1.msra.mxu0 %v436
    %471 = vmatprep.subr.mxu0 0.0
    %472 = vmatpush1.msra.mxu0 %v435
    %473 = vmatprep.subr.mxu0 0.0
    %474 = vmatpush1.msra.mxu0 %v434
    %475 = vmatprep.subr.mxu0 0.0
    %476 = vmatpush1.msra.mxu0 %v433
    %477 = vmatprep.subr.mxu0 0.0
    %478 = vmatpush1.msra.mxu0 %v432
    %479 = vmatprep.subr.mxu0 0.0
    %480 = vmatpush2.msra.mxu0 0.0
    %481 = vmatprep.subr.mxu0 0.0
    %482 = vmatpush2.msra.mxu0 0.0
    %483 = vmatprep.subr.mxu0 0.0
    %484 = vmatpush2.msra.mxu0 0.0
    %485 = vmatprep.subr.mxu0 0.0
    %486 = vmatpush2.msra.mxu0 0.0
    %487 = vmatprep.subr.mxu0 0.0
    %488 = vmatpush2.msra.mxu0 0.0
    %489 = vmatprep.subr.mxu0 0.0
    %490 = vmatpush2.msra.mxu0 0.0
    %491 = vmatprep.subr.mxu0 0.0
    %492 = vmatpush2.msra.mxu0 0.0
    %493 = vmatprep.subr.mxu0 0.0
    %494 = vmatpush2.msra.mxu0 0.0
    %495 = vmatprep.subr.mxu0 0.0
    %496 = vmatpush2.msra.mxu0 0.0
    %497 = vmatprep.subr.mxu0 0.0
    %498 = vmatpush2.msra.mxu0 0.0
    %499 = vmatprep.subr.mxu0 0.0
    %500 = vmatpush2.msra.mxu0 0.0
    %501 = vmatprep.subr.mxu0 0.0
    %502 = vmatpush2.msra.mxu0 0.0
    %503 = vmatprep.subr.mxu0 0.0
    %504 = vmatpush2.msra.mxu0 0.0
    %505 = vmatprep.subr.mxu0 0.0
    %506 = vmatpush2.msra.mxu0 0.0
    %507 = vmatprep.subr.mxu0 0.0
    %508 = vmatpush2.msra.mxu0 0.0
    %509 = vmatprep.subr.mxu0 0.0
    %510 = vmatpush2.msra.mxu0 0.0
    %511 = vmatprep.mubr.f32.mxu0 0.0
    %512 = vmatmul.mubr.f32.gmra.mxu0 %v442
    %v513 = vpop.f32.mrf.mxu0
    %v514 = vadd.f32 0.0, %v513
    %v515 = vpop.f32.mrf.mxu0
    %516 = vmatprep.mubr.f32.mxu0 0.0
    %517 = vmatmul.mubr.f32.gmra.mxu0 %v445
    %v518 = vpop.f32.mrf.mxu0
    %v519 = vadd.f32 0.0, %v518
    %v520 = vpop.f32.mrf.mxu0
    %521 = vdwg.mxu0
    %v522 = vld [vmem:[%s9] sm:$0x3]
    %v523 = vld [vmem:[%s10] sm:$0x1]
    %525 = vset.pattern.permute.xlu0 0
    %526 = vperm.xlu0 %525, %v514
    %v527 = vpop.permute.xlu0 %526
    %530 = vset.pattern.permute.xlu0 0
    %531 = vperm.xlu0 %530, %v519
    %v532 = vpop.permute.xlu0 %531
    %v534 = vlaneseq
    %v535 = vshrl.u32 %v534, 7
    %v536 = vsub.s32 0, %v535
    %v537 = vrot.slane %v522, %v536
    %v538 = vmul.f32 %v527, %v537
    %v539 = vmul.f32 %v532, %v537
    %v540 = vlaneseq
    %v541 = vshrl.u32 %v540, 7
    %v542 = vsub.s32 0, %v541
    %v543 = vrot.slane %v523, %v542
    %v544 = vadd.f32 %v543, %v538
    %v545 = vadd.f32 %v543, %v539
    %546 = vset.pattern.permute.xlu0 1
    %547 = vperm.xlu0 %546, %v514
    %v548 = vpop.permute.xlu0 %547
    %550 = vset.pattern.permute.xlu0 1
    %551 = vperm.xlu0 %550, %v519
    %v552 = vpop.permute.xlu0 %551
    %v554 = vlaneseq
    %v555 = vshrl.u32 %v554, 7
    %v556 = vsub.s32 1, %v555
    %v557 = vrot.slane %v522, %v556
    %v558 = vmul.f32 %v548, %v557
    %v559 = vmul.f32 %v552, %v557
    %v560 = vadd.f32 %v544, %v558
    %v561 = vadd.f32 %v545, %v559
    %v562 = vand.u32 2147483647, %v560
    %v563 = vand.u32 2147483647, %v561
    %v564 = vsub.f32 0.0, %v562
    %v565 = vsub.f32 0.0, %v563
    %v566 = vmul.f32 %v564, 1.442695
    %v567 = vpow.pop %v566
    %v568 = vmul.f32 %v565, 1.442695
    %v569 = vpow.pop %v568
    %v570 = vadd.f32 %v567, 1.0
    %v571 = vadd.f32 %v569, 1.0
    %v572 = vlog2.pop %v570
    %v573 = vmul.f32 %v572, 0.6931472
    %v574 = vlog2.pop %v571
    %v575 = vmul.f32 %v574, 0.6931472
    %v576 = vmax.f32 %v560, 0.0
    %v577 = vmax.f32 %v561, 0.0
    %v578 = vadd.f32 %v573, %v576
    %v579 = vadd.f32 %v575, %v577
    %v580 = vld [vmem:[%s11] sm:$0xff]
    %v581 = vld [vmem:[%s11 + $0x8] sm:$0xff]
    %v582 = vmul.f32 %v580, 1.442695
    %v583 = vpow.pop %v582
    %v584 = vmul.f32 %v581, 1.442695
    %v585 = vpow.pop %v584
    %v586 = vsub.f32 0.0, %v583
    %v587 = vsub.f32 0.0, %v585
    %v588 = vld [vmem:[%s12] sm:$0x1]
    %v589 = vsub.f32 0.0, %v349
    %v590 = vsub.f32 0.0, %v354
    %v591 = vmul.f32 %v589, 1.442695
    %v592 = vpow.pop %v591
    %v593 = vmul.f32 %v590, 1.442695
    %v594 = vpow.pop %v593
    %v595 = vadd.f32 %v592, 1.0
    %v596 = vadd.f32 %v594, 1.0
    %v597 = vrcp.pop %v595
    %v598 = vmul.f32 1.0, %v597
    %v599 = vrcp.pop %v596
    %v600 = vmul.f32 1.0, %v599
    %v601 = vmul.f32 %v349, %v598
    %v602 = vmul.f32 %v354, %v600
    %v603 = vmul.f32 %v578, %v430
    %v604 = vmul.f32 %v579, %v431
    %605 = vrot.lane.b32.xlu0 %v514, 126
    %v606 = vpop.permute.xlu0 %605
    %608 = vxpose.xlu0.b32.start [1/16] %v606, 128
    %609 = vxpose.xlu0.b32.cont [2/16] 0.0, 128
    %610 = vxpose.xlu0.b32.cont [3/16] 0.0, 128
    %611 = vxpose.xlu0.b32.cont [4/16] 0.0, 128
    %612 = vxpose.xlu0.b32.cont [5/16] 0.0, 128
    %613 = vxpose.xlu0.b32.cont [6/16] 0.0, 128
    %614 = vxpose.xlu0.b32.cont [7/16] 0.0, 128
    %615 = vxpose.xlu0.b32.cont [8/16] 0.0, 128
    %616 = vxpose.xlu0.b32.cont [9/16] 0.0, 128
    %617 = vxpose.xlu0.b32.cont [10/16] 0.0, 128
    %618 = vxpose.xlu0.b32.cont [11/16] 0.0, 128
    %619 = vxpose.xlu0.b32.cont [12/16] 0.0, 128
    %620 = vxpose.xlu0.b32.cont [13/16] 0.0, 128
    %621 = vxpose.xlu0.b32.cont [14/16] 0.0, 128
    %622 = vxpose.xlu0.b32.cont [15/16] 0.0, 128
    %623 = vxpose.xlu0.b32.end [16/16] 0.0, 128
    %v624 = vpop.trf.xlu0
    %v625 = vpop.trf.xlu0
    %v626 = vpop.trf.xlu0
    %v627 = vpop.trf.xlu0
    %v628 = vpop.trf.xlu0
    %v629 = vpop.trf.xlu0
    %v630 = vpop.trf.xlu0
    %v631 = vpop.trf.xlu0
    %v632 = vpop.trf.xlu0
    %v633 = vpop.trf.xlu0
    %v634 = vpop.trf.xlu0
    %v635 = vpop.trf.xlu0
    %v636 = vpop.trf.xlu0
    %v637 = vpop.trf.xlu0
    %v638 = vpop.trf.xlu0
    %v639 = vpop.trf.xlu0
    %640 = vrot.lane.b32.xlu0 %v514, 110
    %v641 = vpop.permute.xlu0 %640
    %643 = vxpose.xlu0.b32.start [1/16] %v641, 128
    %644 = vxpose.xlu0.b32.cont [2/16] 0.0, 128
    %645 = vxpose.xlu0.b32.cont [3/16] 0.0, 128
    %646 = vxpose.xlu0.b32.cont [4/16] 0.0, 128
    %647 = vxpose.xlu0.b32.cont [5/16] 0.0, 128
    %648 = vxpose.xlu0.b32.cont [6/16] 0.0, 128
    %649 = vxpose.xlu0.b32.cont [7/16] 0.0, 128
    %650 = vxpose.xlu0.b32.cont [8/16] 0.0, 128
    %651 = vxpose.xlu0.b32.cont [9/16] 0.0, 128
    %652 = vxpose.xlu0.b32.cont [10/16] 0.0, 128
    %653 = vxpose.xlu0.b32.cont [11/16] 0.0, 128
    %654 = vxpose.xlu0.b32.cont [12/16] 0.0, 128
    %655 = vxpose.xlu0.b32.cont [13/16] 0.0, 128
    %656 = vxpose.xlu0.b32.cont [14/16] 0.0, 128
    %657 = vxpose.xlu0.b32.cont [15/16] 0.0, 128
    %658 = vxpose.xlu0.b32.end [16/16] 0.0, 128
    %v659 = vpop.trf.xlu0
    %v660 = vpop.trf.xlu0
    %v661 = vpop.trf.xlu0
    %v662 = vpop.trf.xlu0
    %v663 = vpop.trf.xlu0
    %v664 = vpop.trf.xlu0
    %v665 = vpop.trf.xlu0
    %v666 = vpop.trf.xlu0
    %v667 = vpop.trf.xlu0
    %v668 = vpop.trf.xlu0
    %v669 = vpop.trf.xlu0
    %v670 = vpop.trf.xlu0
    %v671 = vpop.trf.xlu0
    %v672 = vpop.trf.xlu0
    %v673 = vpop.trf.xlu0
    %v674 = vpop.trf.xlu0
    %v675 = vlaneseq
    %v676 = vshrl.u32 %v675, 7
    %v677 = vsub.s32 0, %v676
    %v678 = vrot.slane %v578, %v677
    %v679 = vmul.f32 %v586, %v678
    %v680 = vmul.f32 %v587, %v678
    %v681 = vmul.f32 %v679, 1.442695
    %v682 = vpow.pop %v681
    %v683 = vmul.f32 %v680, 1.442695
    %v684 = vpow.pop %v683
    %v685 = vlaneseq
    %v686 = vshrl.u32 %v685, 7
    %v687 = vsub.s32 1, %v686
    %v688 = vrot.slane %v578, %v687
    %v689 = vmul.f32 %v586, %v688
    %v690 = vmul.f32 %v587, %v688
    %v691 = vmul.f32 %v689, 1.442695
    %v692 = vpow.pop %v691
    %v693 = vmul.f32 %v690, 1.442695
    %v694 = vpow.pop %v693
    %v695 = vlaneseq
    %v696 = vshrl.u32 %v695, 7
    %v697 = vsub.s32 2, %v696
    %v698 = vrot.slane %v578, %v697
    %v699 = vmul.f32 %v586, %v698
    %v700 = vmul.f32 %v587, %v698
    %v701 = vmul.f32 %v699, 1.442695
    %v702 = vpow.pop %v701
    %v703 = vmul.f32 %v700, 1.442695
    %v704 = vpow.pop %v703
    %v705 = vlaneseq
    %v706 = vshrl.u32 %v705, 7
    %v707 = vsub.s32 3, %v706
    %v708 = vrot.slane %v578, %v707
    %v709 = vmul.f32 %v586, %v708
    %v710 = vmul.f32 %v587, %v708
    %v711 = vmul.f32 %v709, 1.442695
    %v712 = vpow.pop %v711
    %v713 = vmul.f32 %v710, 1.442695
    %v714 = vpow.pop %v713
    %v715 = vlaneseq
    %v716 = vshrl.u32 %v715, 7
    %v717 = vsub.s32 4, %v716
    %v718 = vrot.slane %v578, %v717
    %v719 = vmul.f32 %v586, %v718
    %v720 = vmul.f32 %v587, %v718
    %v721 = vmul.f32 %v719, 1.442695
    %v722 = vpow.pop %v721
    %v723 = vmul.f32 %v720, 1.442695
    %v724 = vpow.pop %v723
    %v725 = vlaneseq
    %v726 = vshrl.u32 %v725, 7
    %v727 = vsub.s32 5, %v726
    %v728 = vrot.slane %v578, %v727
    %v729 = vmul.f32 %v586, %v728
    %v730 = vmul.f32 %v587, %v728
    %v731 = vmul.f32 %v729, 1.442695
    %v732 = vpow.pop %v731
    %v733 = vmul.f32 %v730, 1.442695
    %v734 = vpow.pop %v733
    %v735 = vlaneseq
    %v736 = vshrl.u32 %v735, 7
    %v737 = vsub.s32 6, %v736
    %v738 = vrot.slane %v578, %v737
    %v739 = vmul.f32 %v586, %v738
    %v740 = vmul.f32 %v587, %v738
    %v741 = vmul.f32 %v739, 1.442695
    %v742 = vpow.pop %v741
    %v743 = vmul.f32 %v740, 1.442695
    %v744 = vpow.pop %v743
    %v745 = vlaneseq
    %v746 = vshrl.u32 %v745, 7
    %v747 = vsub.s32 7, %v746
    %v748 = vrot.slane %v578, %v747
    %v749 = vmul.f32 %v586, %v748
    %v750 = vmul.f32 %v587, %v748
    %v751 = vmul.f32 %v749, 1.442695
    %v752 = vpow.pop %v751
    %v753 = vmul.f32 %v750, 1.442695
    %v754 = vpow.pop %v753
    %v755 = vlaneseq
    %v756 = vshrl.u32 %v755, 7
    %v757 = vsub.s32 0, %v756
    %v758 = vrot.slane %v603, %v757
    %760 = vset.pattern.permute.xlu0 0
    %761 = vperm.xlu0 %760, %v624
    %v762 = vpop.permute.xlu0 %761
    %765 = vset.pattern.permute.xlu0 0
    %766 = vperm.xlu0 %765, %v625
    %v767 = vpop.permute.xlu0 %766
    %v769 = vmul.f32 %v758, %v762
    %v770 = vmul.f32 %v758, %v767
    %v771 = vlaneseq
    %v772 = vshrl.u32 %v771, 7
    %v773 = vsub.s32 1, %v772
    %v774 = vrot.slane %v603, %v773
    %775 = vset.pattern.permute.xlu0 1
    %776 = vperm.xlu0 %775, %v624
    %v777 = vpop.permute.xlu0 %776
    %779 = vset.pattern.permute.xlu0 1
    %780 = vperm.xlu0 %779, %v625
    %v781 = vpop.permute.xlu0 %780
    %v783 = vmul.f32 %v774, %v777
    %v784 = vmul.f32 %v774, %v781
    %v785 = vlaneseq
    %v786 = vshrl.u32 %v785, 7
    %v787 = vsub.s32 2, %v786
    %v788 = vrot.slane %v603, %v787
    %789 = vset.pattern.permute.xlu0 2
    %790 = vperm.xlu0 %789, %v624
    %v791 = vpop.permute.xlu0 %790
    %793 = vset.pattern.permute.xlu0 2
    %794 = vperm.xlu0 %793, %v625
    %v795 = vpop.permute.xlu0 %794
    %v797 = vmul.f32 %v788, %v791
    %v798 = vmul.f32 %v788, %v795
    %v799 = vlaneseq
    %v800 = vshrl.u32 %v799, 7
    %v801 = vsub.s32 3, %v800
    %v802 = vrot.slane %v603, %v801
    %803 = vset.pattern.permute.xlu0 3
    %804 = vperm.xlu0 %803, %v624
    %v805 = vpop.permute.xlu0 %804
    %807 = vset.pattern.permute.xlu0 3
    %808 = vperm.xlu0 %807, %v625
    %v809 = vpop.permute.xlu0 %808
    %v811 = vmul.f32 %v802, %v805
    %v812 = vmul.f32 %v802, %v809
    %v813 = vlaneseq
    %v814 = vshrl.u32 %v813, 7
    %v815 = vsub.s32 4, %v814
    %v816 = vrot.slane %v603, %v815
    %817 = vset.pattern.permute.xlu0 4
    %818 = vperm.xlu0 %817, %v624
    %v819 = vpop.permute.xlu0 %818
    %821 = vset.pattern.permute.xlu0 4
    %822 = vperm.xlu0 %821, %v625
    %v823 = vpop.permute.xlu0 %822
    %v825 = vmul.f32 %v816, %v819
    %v826 = vmul.f32 %v816, %v823
    %v827 = vlaneseq
    %v828 = vshrl.u32 %v827, 7
    %v829 = vsub.s32 5, %v828
    %v830 = vrot.slane %v603, %v829
    %831 = vset.pattern.permute.xlu0 5
    %832 = vperm.xlu0 %831, %v624
    %v833 = vpop.permute.xlu0 %832
    %835 = vset.pattern.permute.xlu0 5
    %836 = vperm.xlu0 %835, %v625
    %v837 = vpop.permute.xlu0 %836
    %v839 = vmul.f32 %v830, %v833
    %v840 = vmul.f32 %v830, %v837
    %v841 = vlaneseq
    %v842 = vshrl.u32 %v841, 7
    %v843 = vsub.s32 6, %v842
    %v844 = vrot.slane %v603, %v843
    %845 = vset.pattern.permute.xlu0 6
    %846 = vperm.xlu0 %845, %v624
    %v847 = vpop.permute.xlu0 %846
    %849 = vset.pattern.permute.xlu0 6
    %850 = vperm.xlu0 %849, %v625
    %v851 = vpop.permute.xlu0 %850
    %v853 = vmul.f32 %v844, %v847
    %v854 = vmul.f32 %v844, %v851
    %v855 = vlaneseq
    %v856 = vshrl.u32 %v855, 7
    %v857 = vsub.s32 7, %v856
    %v858 = vrot.slane %v603, %v857
    %859 = vset.pattern.permute.xlu0 7
    %860 = vperm.xlu0 %859, %v624
    %v861 = vpop.permute.xlu0 %860
    %863 = vset.pattern.permute.xlu0 7
    %864 = vperm.xlu0 %863, %v625
    %v865 = vpop.permute.xlu0 %864
    %v867 = vmul.f32 %v858, %v861
    %v868 = vmul.f32 %v858, %v865
    %v869 = vmul.f32 %v682, 0.0
    %v870 = vmul.f32 %v684, 0.0
    %v871 = vadd.f32 %v869, %v769
    %v872 = vadd.f32 %v870, %v770
    %874 = vset.pattern.permute.xlu0 0
    %875 = vperm.xlu0 %874, %v659
    %v876 = vpop.permute.xlu0 %875
    %879 = vset.pattern.permute.xlu0 0
    %880 = vperm.xlu0 %879, %v660
    %v881 = vpop.permute.xlu0 %880
    %v883 = vmul.f32 %v871, %v876
    %v884 = vmul.f32 %v872, %v881
    %v885 = vsel %vm440, %v883, 0.0
    %v886 = vsel %vm440, %v884, 0.0
    %v887 = vadd.f32 %v885, %v886
    %v888 = vrot.slane %v887, 4
    %v889 = vadd.f32 %v887, %v888
    %v890 = vrot.slane %v889, 2
    %v891 = vadd.f32 %v889, %v890
    %v892 = vrot.slane %v891, 1
    %v893 = vadd.f32 %v891, %v892
    %v894 = vmul.f32 %v692, %v871
    %v895 = vmul.f32 %v694, %v872
    %v896 = vadd.f32 %v894, %v783
    %v897 = vadd.f32 %v895, %v784
    %898 = vset.pattern.permute.xlu0 1
    %899 = vperm.xlu0 %898, %v659
    %v900 = vpop.permute.xlu0 %899
    %902 = vset.pattern.permute.xlu0 1
    %903 = vperm.xlu0 %902, %v660
    %v904 = vpop.permute.xlu0 %903
    %v906 = vmul.f32 %v896, %v900
    %v907 = vmul.f32 %v897, %v904
    %v908 = vsel %vm440, %v906, 0.0
    %v909 = vsel %vm440, %v907, 0.0
    %v910 = vadd.f32 %v908, %v909
    %v911 = vrot.slane %v910, 4
    %v912 = vadd.f32 %v910, %v911
    %v913 = vrot.slane %v912, 2
    %v914 = vadd.f32 %v912, %v913
    %v915 = vrot.slane %v914, 1
    %v916 = vadd.f32 %v914, %v915
    %v917 = vmul.f32 %v702, %v896
    %v918 = vmul.f32 %v704, %v897
    %v919 = vadd.f32 %v917, %v797
    %v920 = vadd.f32 %v918, %v798
    %921 = vset.pattern.permute.xlu0 2
    %922 = vperm.xlu0 %921, %v659
    %v923 = vpop.permute.xlu0 %922
    %925 = vset.pattern.permute.xlu0 2
    %926 = vperm.xlu0 %925, %v660
    %v927 = vpop.permute.xlu0 %926
    %v929 = vmul.f32 %v919, %v923
    %v930 = vmul.f32 %v920, %v927
    %v931 = vsel %vm440, %v929, 0.0
    %v932 = vsel %vm440, %v930, 0.0
    %v933 = vadd.f32 %v931, %v932
    %v934 = vrot.slane %v933, 4
    %v935 = vadd.f32 %v933, %v934
    %v936 = vrot.slane %v935, 2
    %v937 = vadd.f32 %v935, %v936
    %v938 = vrot.slane %v937, 1
    %v939 = vadd.f32 %v937, %v938
    %v940 = vmul.f32 %v712, %v919
    %v941 = vmul.f32 %v714, %v920
    %v942 = vadd.f32 %v940, %v811
    %v943 = vadd.f32 %v941, %v812
    %944 = vset.pattern.permute.xlu0 3
    %945 = vperm.xlu0 %944, %v659
    %v946 = vpop.permute.xlu0 %945
    %948 = vset.pattern.permute.xlu0 3
    %949 = vperm.xlu0 %948, %v660
    %v950 = vpop.permute.xlu0 %949
    %v952 = vmul.f32 %v942, %v946
    %v953 = vmul.f32 %v943, %v950
    %v954 = vsel %vm440, %v952, 0.0
    %v955 = vsel %vm440, %v953, 0.0
    %v956 = vadd.f32 %v954, %v955
    %v957 = vrot.slane %v956, 4
    %v958 = vadd.f32 %v956, %v957
    %v959 = vrot.slane %v958, 2
    %v960 = vadd.f32 %v958, %v959
    %v961 = vrot.slane %v960, 1
    %v962 = vadd.f32 %v960, %v961
    %v963 = vmul.f32 %v722, %v942
    %v964 = vmul.f32 %v724, %v943
    %v965 = vadd.f32 %v963, %v825
    %v966 = vadd.f32 %v964, %v826
    %967 = vset.pattern.permute.xlu0 4
    %968 = vperm.xlu0 %967, %v659
    %v969 = vpop.permute.xlu0 %968
    %971 = vset.pattern.permute.xlu0 4
    %972 = vperm.xlu0 %971, %v660
    %v973 = vpop.permute.xlu0 %972
    %v975 = vmul.f32 %v965, %v969
    %v976 = vmul.f32 %v966, %v973
    %v977 = vsel %vm440, %v975, 0.0
    %v978 = vsel %vm440, %v976, 0.0
    %v979 = vadd.f32 %v977, %v978
    %v980 = vrot.slane %v979, 4
    %v981 = vadd.f32 %v979, %v980
    %v982 = vrot.slane %v981, 2
    %v983 = vadd.f32 %v981, %v982
    %v984 = vrot.slane %v983, 1
    %v985 = vadd.f32 %v983, %v984
    %v986 = vmul.f32 %v732, %v965
    %v987 = vmul.f32 %v734, %v966
    %v988 = vadd.f32 %v986, %v839
    %v989 = vadd.f32 %v987, %v840
    %990 = vset.pattern.permute.xlu0 5
    %991 = vperm.xlu0 %990, %v659
    %v992 = vpop.permute.xlu0 %991
    %994 = vset.pattern.permute.xlu0 5
    %995 = vperm.xlu0 %994, %v660
    %v996 = vpop.permute.xlu0 %995
    %v998 = vmul.f32 %v988, %v992
    %v999 = vmul.f32 %v989, %v996
    %v1000 = vsel %vm440, %v998, 0.0
    %v1001 = vsel %vm440, %v999, 0.0
    %v1002 = vadd.f32 %v1000, %v1001
    %v1003 = vrot.slane %v1002, 4
    %v1004 = vadd.f32 %v1002, %v1003
    %v1005 = vrot.slane %v1004, 2
    %v1006 = vadd.f32 %v1004, %v1005
    %v1007 = vrot.slane %v1006, 1
    %v1008 = vadd.f32 %v1006, %v1007
    %v1009 = vmul.f32 %v742, %v988
    %v1010 = vmul.f32 %v744, %v989
    %v1011 = vadd.f32 %v1009, %v853
    %v1012 = vadd.f32 %v1010, %v854
    %1013 = vset.pattern.permute.xlu0 6
    %1014 = vperm.xlu0 %1013, %v659
    %v1015 = vpop.permute.xlu0 %1014
    %1017 = vset.pattern.permute.xlu0 6
    %1018 = vperm.xlu0 %1017, %v660
    %v1019 = vpop.permute.xlu0 %1018
    %v1021 = vmul.f32 %v1011, %v1015
    %v1022 = vmul.f32 %v1012, %v1019
    %v1023 = vsel %vm440, %v1021, 0.0
    %v1024 = vsel %vm440, %v1022, 0.0
    %v1025 = vadd.f32 %v1023, %v1024
    %v1026 = vrot.slane %v1025, 4
    %v1027 = vadd.f32 %v1025, %v1026
    %v1028 = vrot.slane %v1027, 2
    %v1029 = vadd.f32 %v1027, %v1028
    %v1030 = vrot.slane %v1029, 1
    %v1031 = vadd.f32 %v1029, %v1030
    %v1032 = vmul.f32 %v752, %v1011
    %v1033 = vmul.f32 %v754, %v1012
    %v1034 = vadd.f32 %v1032, %v867
    %v1035 = vadd.f32 %v1033, %v868
    %1036 = vset.pattern.permute.xlu0 7
    %1037 = vperm.xlu0 %1036, %v659
    %v1038 = vpop.permute.xlu0 %1037
    %1040 = vset.pattern.permute.xlu0 7
    %1041 = vperm.xlu0 %1040, %v660
    %v1042 = vpop.permute.xlu0 %1041
    %v1044 = vmul.f32 %v1034, %v1038
    %v1045 = vmul.f32 %v1035, %v1042
    %v1046 = vsel %vm440, %v1044, 0.0
    %v1047 = vsel %vm440, %v1045, 0.0
    %v1048 = vadd.f32 %v1046, %v1047
    %v1049 = vrot.slane %v1048, 4
    %v1050 = vadd.f32 %v1048, %v1049
    %v1051 = vrot.slane %v1050, 2
    %v1052 = vadd.f32 %v1050, %v1051
    %v1053 = vrot.slane %v1052, 1
    %v1054 = vadd.f32 %v1052, %v1053
    %v1055 = vsel %vm407, %v893, %v916
    %v1056 = vsel %vm392, %v1055, %v939
    %v1057 = vsel %vm377, %v1056, %v962
    %vm1058 = vcmask 1043456
    %v1059 = vsel %vm1058, %v1057, %v985
    %vm1060 = vcmask 1044480
    %v1061 = vsel %vm1060, %v1059, %v1008
    %vm1062 = vcmask 1045504
    %v1063 = vsel %vm1062, %v1061, %v1031
    %vm1064 = vcmask 1046528
    %v1065 = vsel %vm1064, %v1063, %v1054
    %1066 = vrot.lane.b32.xlu0 %v519, 126
    %v1067 = vpop.permute.xlu0 %1066
    %1069 = vxpose.xlu0.b32.start [1/16] %v1067, 128
    %1070 = vxpose.xlu0.b32.cont [2/16] 0.0, 128
    %1071 = vxpose.xlu0.b32.cont [3/16] 0.0, 128
    %1072 = vxpose.xlu0.b32.cont [4/16] 0.0, 128
    %1073 = vxpose.xlu0.b32.cont [5/16] 0.0, 128
    %1074 = vxpose.xlu0.b32.cont [6/16] 0.0, 128
    %1075 = vxpose.xlu0.b32.cont [7/16] 0.0, 128
    %1076 = vxpose.xlu0.b32.cont [8/16] 0.0, 128
    %1077 = vxpose.xlu0.b32.cont [9/16] 0.0, 128
    %1078 = vxpose.xlu0.b32.cont [10/16] 0.0, 128
    %1079 = vxpose.xlu0.b32.cont [11/16] 0.0, 128
    %1080 = vxpose.xlu0.b32.cont [12/16] 0.0, 128
    %1081 = vxpose.xlu0.b32.cont [13/16] 0.0, 128
    %1082 = vxpose.xlu0.b32.cont [14/16] 0.0, 128
    %1083 = vxpose.xlu0.b32.cont [15/16] 0.0, 128
    %1084 = vxpose.xlu0.b32.end [16/16] 0.0, 128
    %v1085 = vpop.trf.xlu0
    %v1086 = vpop.trf.xlu0
    %v1087 = vpop.trf.xlu0
    %v1088 = vpop.trf.xlu0
    %v1089 = vpop.trf.xlu0
    %v1090 = vpop.trf.xlu0
    %v1091 = vpop.trf.xlu0
    %v1092 = vpop.trf.xlu0
    %v1093 = vpop.trf.xlu0
    %v1094 = vpop.trf.xlu0
    %v1095 = vpop.trf.xlu0
    %v1096 = vpop.trf.xlu0
    %v1097 = vpop.trf.xlu0
    %v1098 = vpop.trf.xlu0
    %v1099 = vpop.trf.xlu0
    %v1100 = vpop.trf.xlu0
    %1101 = vrot.lane.b32.xlu0 %v519, 110
    %v1102 = vpop.permute.xlu0 %1101
    %1104 = vxpose.xlu0.b32.start [1/16] %v1102, 128
    %1105 = vxpose.xlu0.b32.cont [2/16] 0.0, 128
    %1106 = vxpose.xlu0.b32.cont [3/16] 0.0, 128
    %1107 = vxpose.xlu0.b32.cont [4/16] 0.0, 128
    %1108 = vxpose.xlu0.b32.cont [5/16] 0.0, 128
    %1109 = vxpose.xlu0.b32.cont [6/16] 0.0, 128
    %1110 = vxpose.xlu0.b32.cont [7/16] 0.0, 128
    %1111 = vxpose.xlu0.b32.cont [8/16] 0.0, 128
    %1112 = vxpose.xlu0.b32.cont [9/16] 0.0, 128
    %1113 = vxpose.xlu0.b32.cont [10/16] 0.0, 128
    %1114 = vxpose.xlu0.b32.cont [11/16] 0.0, 128
    %1115 = vxpose.xlu0.b32.cont [12/16] 0.0, 128
    %1116 = vxpose.xlu0.b32.cont [13/16] 0.0, 128
    %1117 = vxpose.xlu0.b32.cont [14/16] 0.0, 128
    %1118 = vxpose.xlu0.b32.cont [15/16] 0.0, 128
    %1119 = vxpose.xlu0.b32.end [16/16] 0.0, 128
    %v1120 = vpop.trf.xlu0
    %v1121 = vpop.trf.xlu0
    %v1122 = vpop.trf.xlu0
    %v1123 = vpop.trf.xlu0
    %v1124 = vpop.trf.xlu0
    %v1125 = vpop.trf.xlu0
    %v1126 = vpop.trf.xlu0
    %v1127 = vpop.trf.xlu0
    %v1128 = vpop.trf.xlu0
    %v1129 = vpop.trf.xlu0
    %v1130 = vpop.trf.xlu0
    %v1131 = vpop.trf.xlu0
    %v1132 = vpop.trf.xlu0
    %v1133 = vpop.trf.xlu0
    %v1134 = vpop.trf.xlu0
    %v1135 = vpop.trf.xlu0
    %v1136 = vlaneseq
    %v1137 = vshrl.u32 %v1136, 7
    %v1138 = vsub.s32 0, %v1137
    %v1139 = vrot.slane %v579, %v1138
    %v1140 = vmul.f32 %v586, %v1139
    %v1141 = vmul.f32 %v587, %v1139
    %v1142 = vmul.f32 %v1140, 1.442695
    %v1143 = vpow.pop %v1142
    %v1144 = vmul.f32 %v1141, 1.442695
    %v1145 = vpow.pop %v1144
    %v1146 = vlaneseq
    %v1147 = vshrl.u32 %v1146, 7
    %v1148 = vsub.s32 1, %v1147
    %v1149 = vrot.slane %v579, %v1148
    %v1150 = vmul.f32 %v586, %v1149
    %v1151 = vmul.f32 %v587, %v1149
    %v1152 = vmul.f32 %v1150, 1.442695
    %v1153 = vpow.pop %v1152
    %v1154 = vmul.f32 %v1151, 1.442695
    %v1155 = vpow.pop %v1154
    %v1156 = vlaneseq
    %v1157 = vshrl.u32 %v1156, 7
    %v1158 = vsub.s32 2, %v1157
    %v1159 = vrot.slane %v579, %v1158
    %v1160 = vmul.f32 %v586, %v1159
    %v1161 = vmul.f32 %v587, %v1159
    %v1162 = vmul.f32 %v1160, 1.442695
    %v1163 = vpow.pop %v1162
    %v1164 = vmul.f32 %v1161, 1.442695
    %v1165 = vpow.pop %v1164
    %v1166 = vlaneseq
    %v1167 = vshrl.u32 %v1166, 7
    %v1168 = vsub.s32 3, %v1167
    %v1169 = vrot.slane %v579, %v1168
    %v1170 = vmul.f32 %v586, %v1169
    %v1171 = vmul.f32 %v587, %v1169
    %v1172 = vmul.f32 %v1170, 1.442695
    %v1173 = vpow.pop %v1172
    %v1174 = vmul.f32 %v1171, 1.442695
    %v1175 = vpow.pop %v1174
    %v1176 = vlaneseq
    %v1177 = vshrl.u32 %v1176, 7
    %v1178 = vsub.s32 4, %v1177
    %v1179 = vrot.slane %v579, %v1178
    %v1180 = vmul.f32 %v586, %v1179
    %v1181 = vmul.f32 %v587, %v1179
    %v1182 = vmul.f32 %v1180, 1.442695
    %v1183 = vpow.pop %v1182
    %v1184 = vmul.f32 %v1181, 1.442695
    %v1185 = vpow.pop %v1184
    %v1186 = vlaneseq
    %v1187 = vshrl.u32 %v1186, 7
    %v1188 = vsub.s32 5, %v1187
    %v1189 = vrot.slane %v579, %v1188
    %v1190 = vmul.f32 %v586, %v1189
    %v1191 = vmul.f32 %v587, %v1189
    %v1192 = vmul.f32 %v1190, 1.442695
    %v1193 = vpow.pop %v1192
    %v1194 = vmul.f32 %v1191, 1.442695
    %v1195 = vpow.pop %v1194
    %v1196 = vlaneseq
    %v1197 = vshrl.u32 %v1196, 7
    %v1198 = vsub.s32 6, %v1197
    %v1199 = vrot.slane %v579, %v1198
    %v1200 = vmul.f32 %v586, %v1199
    %v1201 = vmul.f32 %v587, %v1199
    %v1202 = vmul.f32 %v1200, 1.442695
    %v1203 = vpow.pop %v1202
    %v1204 = vmul.f32 %v1201, 1.442695
    %v1205 = vpow.pop %v1204
    %v1206 = vlaneseq
    %v1207 = vshrl.u32 %v1206, 7
    %v1208 = vsub.s32 7, %v1207
    %v1209 = vrot.slane %v579, %v1208
    %v1210 = vmul.f32 %v586, %v1209
    %v1211 = vmul.f32 %v587, %v1209
    %v1212 = vmul.f32 %v1210, 1.442695
    %v1213 = vpow.pop %v1212
    %v1214 = vmul.f32 %v1211, 1.442695
    %v1215 = vpow.pop %v1214
    %v1216 = vlaneseq
    %v1217 = vshrl.u32 %v1216, 7
    %v1218 = vsub.s32 0, %v1217
    %v1219 = vrot.slane %v604, %v1218
    %1221 = vset.pattern.permute.xlu0 0
    %1222 = vperm.xlu0 %1221, %v1085
    %v1223 = vpop.permute.xlu0 %1222
    %1226 = vset.pattern.permute.xlu0 0
    %1227 = vperm.xlu0 %1226, %v1086
    %v1228 = vpop.permute.xlu0 %1227
    %v1230 = vmul.f32 %v1219, %v1223
    %v1231 = vmul.f32 %v1219, %v1228
    %v1232 = vlaneseq
    %v1233 = vshrl.u32 %v1232, 7
    %v1234 = vsub.s32 1, %v1233
    %v1235 = vrot.slane %v604, %v1234
    %1236 = vset.pattern.permute.xlu0 1
    %1237 = vperm.xlu0 %1236, %v1085
    %v1238 = vpop.permute.xlu0 %1237
    %1240 = vset.pattern.permute.xlu0 1
    %1241 = vperm.xlu0 %1240, %v1086
    %v1242 = vpop.permute.xlu0 %1241
    %v1244 = vmul.f32 %v1235, %v1238
    %v1245 = vmul.f32 %v1235, %v1242
    %v1246 = vlaneseq
    %v1247 = vshrl.u32 %v1246, 7
    %v1248 = vsub.s32 2, %v1247
    %v1249 = vrot.slane %v604, %v1248
    %1250 = vset.pattern.permute.xlu0 2
    %1251 = vperm.xlu0 %1250, %v1085
    %v1252 = vpop.permute.xlu0 %1251
    %1254 = vset.pattern.permute.xlu0 2
    %1255 = vperm.xlu0 %1254, %v1086
    %v1256 = vpop.permute.xlu0 %1255
    %v1258 = vmul.f32 %v1249, %v1252
    %v1259 = vmul.f32 %v1249, %v1256
    %v1260 = vlaneseq
    %v1261 = vshrl.u32 %v1260, 7
    %v1262 = vsub.s32 3, %v1261
    %v1263 = vrot.slane %v604, %v1262
    %1264 = vset.pattern.permute.xlu0 3
    %1265 = vperm.xlu0 %1264, %v1085
    %v1266 = vpop.permute.xlu0 %1265
    %1268 = vset.pattern.permute.xlu0 3
    %1269 = vperm.xlu0 %1268, %v1086
    %v1270 = vpop.permute.xlu0 %1269
    %v1272 = vmul.f32 %v1263, %v1266
    %v1273 = vmul.f32 %v1263, %v1270
    %v1274 = vlaneseq
    %v1275 = vshrl.u32 %v1274, 7
    %v1276 = vsub.s32 4, %v1275
    %v1277 = vrot.slane %v604, %v1276
    %1278 = vset.pattern.permute.xlu0 4
    %1279 = vperm.xlu0 %1278, %v1085
    %v1280 = vpop.permute.xlu0 %1279
    %1282 = vset.pattern.permute.xlu0 4
    %1283 = vperm.xlu0 %1282, %v1086
    %v1284 = vpop.permute.xlu0 %1283
    %v1286 = vmul.f32 %v1277, %v1280
    %v1287 = vmul.f32 %v1277, %v1284
    %v1288 = vlaneseq
    %v1289 = vshrl.u32 %v1288, 7
    %v1290 = vsub.s32 5, %v1289
    %v1291 = vrot.slane %v604, %v1290
    %1292 = vset.pattern.permute.xlu0 5
    %1293 = vperm.xlu0 %1292, %v1085
    %v1294 = vpop.permute.xlu0 %1293
    %1296 = vset.pattern.permute.xlu0 5
    %1297 = vperm.xlu0 %1296, %v1086
    %v1298 = vpop.permute.xlu0 %1297
    %v1300 = vmul.f32 %v1291, %v1294
    %v1301 = vmul.f32 %v1291, %v1298
    %v1302 = vlaneseq
    %v1303 = vshrl.u32 %v1302, 7
    %v1304 = vsub.s32 6, %v1303
    %v1305 = vrot.slane %v604, %v1304
    %1306 = vset.pattern.permute.xlu0 6
    %1307 = vperm.xlu0 %1306, %v1085
    %v1308 = vpop.permute.xlu0 %1307
    %1310 = vset.pattern.permute.xlu0 6
    %1311 = vperm.xlu0 %1310, %v1086
    %v1312 = vpop.permute.xlu0 %1311
    %v1314 = vmul.f32 %v1305, %v1308
    %v1315 = vmul.f32 %v1305, %v1312
    %v1316 = vlaneseq
    %v1317 = vshrl.u32 %v1316, 7
    %v1318 = vsub.s32 7, %v1317
    %v1319 = vrot.slane %v604, %v1318
    %1320 = vset.pattern.permute.xlu0 7
    %1321 = vperm.xlu0 %1320, %v1085
    %v1322 = vpop.permute.xlu0 %1321
    %1324 = vset.pattern.permute.xlu0 7
    %1325 = vperm.xlu0 %1324, %v1086
    %v1326 = vpop.permute.xlu0 %1325
    %v1328 = vmul.f32 %v1319, %v1322
    %v1329 = vmul.f32 %v1319, %v1326
    %v1330 = vmul.f32 %v1143, 0.0
    %v1331 = vmul.f32 %v1145, 0.0
    %v1332 = vadd.f32 %v1330, %v1230
    %v1333 = vadd.f32 %v1331, %v1231
    %1335 = vset.pattern.permute.xlu0 0
    %1336 = vperm.xlu0 %1335, %v1120
    %v1337 = vpop.permute.xlu0 %1336
    %1340 = vset.pattern.permute.xlu0 0
    %1341 = vperm.xlu0 %1340, %v1121
    %v1342 = vpop.permute.xlu0 %1341
    %v1344 = vmul.f32 %v1332, %v1337
    %v1345 = vmul.f32 %v1333, %v1342
    %v1346 = vsel %vm440, %v1344, 0.0
    %v1347 = vsel %vm440, %v1345, 0.0
    %v1348 = vadd.f32 %v1346, %v1347
    %v1349 = vrot.slane %v1348, 4
    %v1350 = vadd.f32 %v1348, %v1349
    %v1351 = vrot.slane %v1350, 2
    %v1352 = vadd.f32 %v1350, %v1351
    %v1353 = vrot.slane %v1352, 1
    %v1354 = vadd.f32 %v1352, %v1353
    %v1355 = vmul.f32 %v1153, %v1332
    %v1356 = vmul.f32 %v1155, %v1333
    %v1357 = vadd.f32 %v1355, %v1244
    %v1358 = vadd.f32 %v1356, %v1245
    %1359 = vset.pattern.permute.xlu0 1
    %1360 = vperm.xlu0 %1359, %v1120
    %v1361 = vpop.permute.xlu0 %1360
    %1363 = vset.pattern.permute.xlu0 1
    %1364 = vperm.xlu0 %1363, %v1121
    %v1365 = vpop.permute.xlu0 %1364
    %v1367 = vmul.f32 %v1357, %v1361
    %v1368 = vmul.f32 %v1358, %v1365
    %v1369 = vsel %vm440, %v1367, 0.0
    %v1370 = vsel %vm440, %v1368, 0.0
    %v1371 = vadd.f32 %v1369, %v1370
    %v1372 = vrot.slane %v1371, 4
    %v1373 = vadd.f32 %v1371, %v1372
    %v1374 = vrot.slane %v1373, 2
    %v1375 = vadd.f32 %v1373, %v1374
    %v1376 = vrot.slane %v1375, 1
    %v1377 = vadd.f32 %v1375, %v1376
    %v1378 = vmul.f32 %v1163, %v1357
    %v1379 = vmul.f32 %v1165, %v1358
    %v1380 = vadd.f32 %v1378, %v1258
    %v1381 = vadd.f32 %v1379, %v1259
    %1382 = vset.pattern.permute.xlu0 2
    %1383 = vperm.xlu0 %1382, %v1120
    %v1384 = vpop.permute.xlu0 %1383
    %1386 = vset.pattern.permute.xlu0 2
    %1387 = vperm.xlu0 %1386, %v1121
    %v1388 = vpop.permute.xlu0 %1387
    %v1390 = vmul.f32 %v1380, %v1384
    %v1391 = vmul.f32 %v1381, %v1388
    %v1392 = vsel %vm440, %v1390, 0.0
    %v1393 = vsel %vm440, %v1391, 0.0
    %v1394 = vadd.f32 %v1392, %v1393
    %v1395 = vrot.slane %v1394, 4
    %v1396 = vadd.f32 %v1394, %v1395
    %v1397 = vrot.slane %v1396, 2
    %v1398 = vadd.f32 %v1396, %v1397
    %v1399 = vrot.slane %v1398, 1
    %v1400 = vadd.f32 %v1398, %v1399
    %v1401 = vmul.f32 %v1173, %v1380
    %v1402 = vmul.f32 %v1175, %v1381
    %v1403 = vadd.f32 %v1401, %v1272
    %v1404 = vadd.f32 %v1402, %v1273
    %1405 = vset.pattern.permute.xlu0 3
    %1406 = vperm.xlu0 %1405, %v1120
    %v1407 = vpop.permute.xlu0 %1406
    %1409 = vset.pattern.permute.xlu0 3
    %1410 = vperm.xlu0 %1409, %v1121
    %v1411 = vpop.permute.xlu0 %1410
    %v1413 = vmul.f32 %v1403, %v1407
    %v1414 = vmul.f32 %v1404, %v1411
    %v1415 = vsel %vm440, %v1413, 0.0
    %v1416 = vsel %vm440, %v1414, 0.0
    %v1417 = vadd.f32 %v1415, %v1416
    %v1418 = vrot.slane %v1417, 4
    %v1419 = vadd.f32 %v1417, %v1418
    %v1420 = vrot.slane %v1419, 2
    %v1421 = vadd.f32 %v1419, %v1420
    %v1422 = vrot.slane %v1421, 1
    %v1423 = vadd.f32 %v1421, %v1422
    %v1424 = vmul.f32 %v1183, %v1403
    %v1425 = vmul.f32 %v1185, %v1404
    %v1426 = vadd.f32 %v1424, %v1286
    %v1427 = vadd.f32 %v1425, %v1287
    %1428 = vset.pattern.permute.xlu0 4
    %1429 = vperm.xlu0 %1428, %v1120
    %v1430 = vpop.permute.xlu0 %1429
    %1432 = vset.pattern.permute.xlu0 4
    %1433 = vperm.xlu0 %1432, %v1121
    %v1434 = vpop.permute.xlu0 %1433
    %v1436 = vmul.f32 %v1426, %v1430
    %v1437 = vmul.f32 %v1427, %v1434
    %v1438 = vsel %vm440, %v1436, 0.0
    %v1439 = vsel %vm440, %v1437, 0.0
    %v1440 = vadd.f32 %v1438, %v1439
    %v1441 = vrot.slane %v1440, 4
    %v1442 = vadd.f32 %v1440, %v1441
    %v1443 = vrot.slane %v1442, 2
    %v1444 = vadd.f32 %v1442, %v1443
    %v1445 = vrot.slane %v1444, 1
    %v1446 = vadd.f32 %v1444, %v1445
    %v1447 = vmul.f32 %v1193, %v1426
    %v1448 = vmul.f32 %v1195, %v1427
    %v1449 = vadd.f32 %v1447, %v1300
    %v1450 = vadd.f32 %v1448, %v1301
    %1451 = vset.pattern.permute.xlu0 5
    %1452 = vperm.xlu0 %1451, %v1120
    %v1453 = vpop.permute.xlu0 %1452
    %1455 = vset.pattern.permute.xlu0 5
    %1456 = vperm.xlu0 %1455, %v1121
    %v1457 = vpop.permute.xlu0 %1456
    %v1459 = vmul.f32 %v1449, %v1453
    %v1460 = vmul.f32 %v1450, %v1457
    %v1461 = vsel %vm440, %v1459, 0.0
    %v1462 = vsel %vm440, %v1460, 0.0
    %v1463 = vadd.f32 %v1461, %v1462
    %v1464 = vrot.slane %v1463, 4
    %v1465 = vadd.f32 %v1463, %v1464
    %v1466 = vrot.slane %v1465, 2
    %v1467 = vadd.f32 %v1465, %v1466
    %v1468 = vrot.slane %v1467, 1
    %v1469 = vadd.f32 %v1467, %v1468
    %v1470 = vmul.f32 %v1203, %v1449
    %v1471 = vmul.f32 %v1205, %v1450
    %v1472 = vadd.f32 %v1470, %v1314
    %v1473 = vadd.f32 %v1471, %v1315
    %1474 = vset.pattern.permute.xlu0 6
    %1475 = vperm.xlu0 %1474, %v1120
    %v1476 = vpop.permute.xlu0 %1475
    %1478 = vset.pattern.permute.xlu0 6
    %1479 = vperm.xlu0 %1478, %v1121
    %v1480 = vpop.permute.xlu0 %1479
    %v1482 = vmul.f32 %v1472, %v1476
    %v1483 = vmul.f32 %v1473, %v1480
    %v1484 = vsel %vm440, %v1482, 0.0
    %v1485 = vsel %vm440, %v1483, 0.0
    %v1486 = vadd.f32 %v1484, %v1485
    %v1487 = vrot.slane %v1486, 4
    %v1488 = vadd.f32 %v1486, %v1487
    %v1489 = vrot.slane %v1488, 2
    %v1490 = vadd.f32 %v1488, %v1489
    %v1491 = vrot.slane %v1490, 1
    %v1492 = vadd.f32 %v1490, %v1491
    %v1493 = vmul.f32 %v1213, %v1472
    %v1494 = vmul.f32 %v1215, %v1473
    %v1495 = vadd.f32 %v1493, %v1328
    %v1496 = vadd.f32 %v1494, %v1329
    %1497 = vset.pattern.permute.xlu0 7
    %1498 = vperm.xlu0 %1497, %v1120
    %v1499 = vpop.permute.xlu0 %1498
    %1501 = vset.pattern.permute.xlu0 7
    %1502 = vperm.xlu0 %1501, %v1121
    %v1503 = vpop.permute.xlu0 %1502
    %v1505 = vmul.f32 %v1495, %v1499
    %v1506 = vmul.f32 %v1496, %v1503
    %v1507 = vsel %vm440, %v1505, 0.0
    %v1508 = vsel %vm440, %v1506, 0.0
    %v1509 = vadd.f32 %v1507, %v1508
    %v1510 = vrot.slane %v1509, 4
    %v1511 = vadd.f32 %v1509, %v1510
    %v1512 = vrot.slane %v1511, 2
    %v1513 = vadd.f32 %v1511, %v1512
    %v1514 = vrot.slane %v1513, 1
    %v1515 = vadd.f32 %v1513, %v1514
    %v1516 = vsel %vm407, %v1354, %v1377
    %v1517 = vsel %vm392, %v1516, %v1400
    %v1518 = vsel %vm377, %v1517, %v1423
    %v1519 = vsel %vm1058, %v1518, %v1446
    %v1520 = vsel %vm1060, %v1519, %v1469
    %v1521 = vsel %vm1062, %v1520, %v1492
    %v1522 = vsel %vm1064, %v1521, %v1515
    %v1523 = vlaneseq
    %v1524 = vshrl.u32 %v1523, 7
    %v1525 = vsub.s32 0, %v1524
    %v1526 = vrot.slane %v588, %v1525
    %v1527 = vmul.f32 %v1526, %v430
    %v1528 = vmul.f32 %v1526, %v431
    %v1529 = vadd.f32 %v1065, %v1527
    %v1530 = vadd.f32 %v1522, %v1528
    %1533 = vrot.lane.b32.xlu0 %v601, 64
    %v1534 = vpop.permute.xlu0 %1533
    %1535 = vrot.lane.b32.xlu0 %v602, 64
    %v1536 = vpop.permute.xlu0 %1535
    %v1539 = vmul.f32 %v1529, %v1534
    %v1540 = vmul.f32 %v1530, %v1536
    %v1541 = vld [vmem:[%s13] sm:$0xff]
    %v1542 = vld [vmem:[%s13 + $0x8] sm:$0xff]
    %v1543 = vld [vmem:[%s13 + $0x10] sm:$0xff]
    %v1544 = vld [vmem:[%s13 + $0x18] sm:$0xff]
    %v1545 = vld [vmem:[%s13 + $0x20] sm:$0xff]
    %v1546 = vld [vmem:[%s13 + $0x28] sm:$0xff]
    %v1547 = vld [vmem:[%s13 + $0x30] sm:$0xff]
    %v1548 = vld [vmem:[%s13 + $0x38] sm:$0xff]
    %v1550 = vsel %vm440, %v1539, 0
    %v1553 = vsel %vm440, %v1540, 0
    %1555 = vmatprep.subr.mxu0 0.0
    %1556 = vmatpush1.msra.mxu0 0.0
    %1557 = vmatprep.subr.mxu0 0.0
    %1558 = vmatpush1.msra.mxu0 0.0
    %1559 = vmatprep.subr.mxu0 0.0
    %1560 = vmatpush1.msra.mxu0 0.0
    %1561 = vmatprep.subr.mxu0 0.0
    %1562 = vmatpush1.msra.mxu0 0.0
    %1563 = vmatprep.subr.mxu0 0.0
    %1564 = vmatpush1.msra.mxu0 0.0
    %1565 = vmatprep.subr.mxu0 0.0
    %1566 = vmatpush1.msra.mxu0 0.0
    %1567 = vmatprep.subr.mxu0 0.0
    %1568 = vmatpush1.msra.mxu0 0.0
    %1569 = vmatprep.subr.mxu0 0.0
    %1570 = vmatpush1.msra.mxu0 0.0
    %1571 = vmatprep.subr.mxu0 0.0
    %1572 = vmatpush1.msra.mxu0 %v1548
    %1573 = vmatprep.subr.mxu0 0.0
    %1574 = vmatpush1.msra.mxu0 %v1547
    %1575 = vmatprep.subr.mxu0 0.0
    %1576 = vmatpush1.msra.mxu0 %v1546
    %1577 = vmatprep.subr.mxu0 0.0
    %1578 = vmatpush1.msra.mxu0 %v1545
    %1579 = vmatprep.subr.mxu0 0.0
    %1580 = vmatpush1.msra.mxu0 %v1544
    %1581 = vmatprep.subr.mxu0 0.0
    %1582 = vmatpush1.msra.mxu0 %v1543
    %1583 = vmatprep.subr.mxu0 0.0
    %1584 = vmatpush1.msra.mxu0 %v1542
    %1585 = vmatprep.subr.mxu0 0.0
    %1586 = vmatpush1.msra.mxu0 %v1541
    %1587 = vmatprep.subr.mxu0 0.0
    %1588 = vmatpush2.msra.mxu0 0.0
    %1589 = vmatprep.subr.mxu0 0.0
    %1590 = vmatpush2.msra.mxu0 0.0
    %1591 = vmatprep.subr.mxu0 0.0
    %1592 = vmatpush2.msra.mxu0 0.0
    %1593 = vmatprep.subr.mxu0 0.0
    %1594 = vmatpush2.msra.mxu0 0.0
    %1595 = vmatprep.subr.mxu0 0.0
    %1596 = vmatpush2.msra.mxu0 0.0
    %1597 = vmatprep.subr.mxu0 0.0
    %1598 = vmatpush2.msra.mxu0 0.0
    %1599 = vmatprep.subr.mxu0 0.0
    %1600 = vmatpush2.msra.mxu0 0.0
    %1601 = vmatprep.subr.mxu0 0.0
    %1602 = vmatpush2.msra.mxu0 0.0
    %1603 = vmatprep.subr.mxu0 0.0
    %1604 = vmatpush2.msra.mxu0 0.0
    %1605 = vmatprep.subr.mxu0 0.0
    %1606 = vmatpush2.msra.mxu0 0.0
    %1607 = vmatprep.subr.mxu0 0.0
    %1608 = vmatpush2.msra.mxu0 0.0
    %1609 = vmatprep.subr.mxu0 0.0
    %1610 = vmatpush2.msra.mxu0 0.0
    %1611 = vmatprep.subr.mxu0 0.0
    %1612 = vmatpush2.msra.mxu0 0.0
    %1613 = vmatprep.subr.mxu0 0.0
    %1614 = vmatpush2.msra.mxu0 0.0
    %1615 = vmatprep.subr.mxu0 0.0
    %1616 = vmatpush2.msra.mxu0 0.0
    %1617 = vmatprep.subr.mxu0 0.0
    %1618 = vmatpush2.msra.mxu0 0.0
    %1619 = vmatprep.mubr.f32.mxu0 0.0
    %1620 = vmatmul.mubr.f32.gmra.mxu0 %v1550
    %v1621 = vpop.f32.mrf.mxu0
    %v1622 = vadd.f32 0.0, %v1621
    %v1623 = vpop.f32.mrf.mxu0
    %1624 = vmatprep.mubr.f32.mxu0 0.0
    %1625 = vmatmul.mubr.f32.gmra.mxu0 %v1553
    %v1626 = vpop.f32.mrf.mxu0
    %v1627 = vadd.f32 0.0, %v1626
    %v1628 = vpop.f32.mrf.mxu0
    %1629 = vdwg.mxu0
    %v1630 = vadd.f32 %v228, %v1622
    %v1631 = vadd.f32 %v230, %v1627
    %v1632 = vld [vmem:[%s1 + $0x10] sm:$0xff]
    %v1633 = vld [vmem:[%s1 + $0x18] sm:$0xff]
    %v1634 = vadd.f32 %v1632, 1e-20
    %v1635 = vadd.f32 %v1633, 1e-20
    %v1636 = vlog2.pop %v1634
    %v1637 = vmul.f32 %v1636, 0.6931472
    %v1638 = vlog2.pop %v1635
    %v1639 = vmul.f32 %v1638, 0.6931472
    %v1640 = vsub.f32 0.0, %v1637
    %v1641 = vsub.f32 0.0, %v1639
    %v1642 = vadd.f32 %v1640, 1e-20
    %v1643 = vadd.f32 %v1641, 1e-20
    %v1644 = vlog2.pop %v1642
    %v1645 = vmul.f32 %v1644, 0.6931472
    %v1646 = vlog2.pop %v1643
    %v1647 = vmul.f32 %v1646, 0.6931472
    %v1648 = vsub.f32 0.0, %v1645
    %v1649 = vsub.f32 0.0, %v1647
    %v1650 = vadd.f32 %v1630, %v1648
    %v1651 = vadd.f32 %v1631, %v1649
    %v1652 = vsel %vm208, %v1650, -inf
    %1653 = vmax.xlane.f32.xlu0 %v1652
    %v1654 = vpop.xlane.xlu0 %1653
    %v1655 = vsel %vm208, %v1651, -inf
    %1656 = vmax.xlane.f32.xlu0 %v1655
    %v1657 = vpop.xlane.xlu0 %1656
    %v1658 = vsub.f32 %v1650, %v1654
    %v1659 = vsub.f32 %v1651, %v1657
    %v1660 = vmul.f32 %v1658, 1.442695
    %v1661 = vpow.pop %v1660
    %v1662 = vmul.f32 %v1659, 1.442695
    %v1663 = vpow.pop %v1662
    %v1664 = vsel %vm208, %v1661, 0.0
    %1665 = vadd.xlane.f32.xlu0 %v1664
    %v1666 = vpop.xlane.xlu0 %1665
    %v1667 = vsel %vm208, %v1663, 0.0
    %1668 = vadd.xlane.f32.xlu0 %v1667
    %v1669 = vpop.xlane.xlu0 %1668
    %v1670 = vrcp.pop %v1666
    %v1671 = vmul.f32 %v1661, %v1670
    %v1672 = vrcp.pop %v1669
    %v1673 = vmul.f32 %v1663, %v1672
    %v1674 = vsel %vm208, %v1671, 0.0
    %1675 = vadd.xlane.f32.xlu0 %v1674
    %v1676 = vpop.xlane.xlu0 %1675
    %v1677 = vsel %vm208, %v1673, 0.0
    %1678 = vadd.xlane.f32.xlu0 %v1677
    %v1679 = vpop.xlane.xlu0 %1678
    %v1680 = vmul.f32 %v1676, %v237
    %v1681 = vmul.f32 %v1679, %v237
    %v1682 = vsub.f32 %v1671, %v1680
    %v1683 = vsub.f32 %v1673, %v1681
    %v1684 = vmul.f32 %v1682, %v1682
    %v1685 = vmul.f32 %v1683, %v1683
    %v1686 = vsel %vm208, %v1684, 0.0
    %1687 = vadd.xlane.f32.xlu0 %v1686
    %v1688 = vpop.xlane.xlu0 %1687
    %v1689 = vsel %vm208, %v1685, 0.0
    %1690 = vadd.xlane.f32.xlu0 %v1689
    %v1691 = vpop.xlane.xlu0 %1690
    %v1692 = vmul.f32 %v1688, %v237
    %v1693 = vmul.f32 %v1691, %v237
    %v1694 = vadd.f32 %v1692, 1e-05
    %v1695 = vadd.f32 %v1693, 1e-05
    %v1696 = vrsqrt.pop %v1694
    %v1697 = vrsqrt.pop %v1695
    %v1698 = vmul.f32 %v1682, %v1696
    %v1699 = vmul.f32 %v1683, %v1697
    %v1700 = vld [vmem:[%s3 + $0x1] sm:$0x1]
    %v1701 = vlaneseq
    %v1702 = vshrl.u32 %v1701, 7
    %v1703 = vsub.s32 0, %v1702
    %v1704 = vrot.slane %v1700, %v1703
    %v1705 = vmul.f32 %v1698, %v1704
    %v1706 = vmul.f32 %v1699, %v1704
    %v1707 = vld [vmem:[%s4 + $0x1] sm:$0x1]
    %v1708 = vlaneseq
    %v1709 = vshrl.u32 %v1708, 7
    %v1710 = vsub.s32 0, %v1709
    %v1711 = vrot.slane %v1707, %v1710
    %v1712 = vadd.f32 %v1705, %v1711
    %v1713 = vadd.f32 %v1706, %v1711
    %s1714 = scalar_lea.vmem %s5, 32
    %v1715 = vld [vmem:[%s1714] sm:$0xff]
    %v1716 = vld [vmem:[%s1714 + $0x8] sm:$0xff]
    %v1717 = vld [vmem:[%s1714 + $0x10] sm:$0xff]
    %v1718 = vld [vmem:[%s1714 + $0x18] sm:$0xff]
    %v1720 = vsel %vm208, %v1712, 0
    %v1723 = vsel %vm208, %v1713, 0
    %1725 = vmatprep.subr.mxu0 0.0
    %1726 = vmatpush1.msra.mxu0 0.0
    %1727 = vmatprep.subr.mxu0 0.0
    %1728 = vmatpush1.msra.mxu0 0.0
    %1729 = vmatprep.subr.mxu0 0.0
    %1730 = vmatpush1.msra.mxu0 0.0
    %1731 = vmatprep.subr.mxu0 0.0
    %1732 = vmatpush1.msra.mxu0 0.0
    %1733 = vmatprep.subr.mxu0 0.0
    %1734 = vmatpush1.msra.mxu0 0.0
    %1735 = vmatprep.subr.mxu0 0.0
    %1736 = vmatpush1.msra.mxu0 0.0
    %1737 = vmatprep.subr.mxu0 0.0
    %1738 = vmatpush1.msra.mxu0 0.0
    %1739 = vmatprep.subr.mxu0 0.0
    %1740 = vmatpush1.msra.mxu0 0.0
    %1741 = vmatprep.subr.mxu0 0.0
    %1742 = vmatpush1.msra.mxu0 0.0
    %1743 = vmatprep.subr.mxu0 0.0
    %1744 = vmatpush1.msra.mxu0 0.0
    %1745 = vmatprep.subr.mxu0 0.0
    %1746 = vmatpush1.msra.mxu0 0.0
    %1747 = vmatprep.subr.mxu0 0.0
    %1748 = vmatpush1.msra.mxu0 0.0
    %1749 = vmatprep.subr.mxu0 0.0
    %1750 = vmatpush1.msra.mxu0 %v1718
    %1751 = vmatprep.subr.mxu0 0.0
    %1752 = vmatpush1.msra.mxu0 %v1717
    %1753 = vmatprep.subr.mxu0 0.0
    %1754 = vmatpush1.msra.mxu0 %v1716
    %1755 = vmatprep.subr.mxu0 0.0
    %1756 = vmatpush1.msra.mxu0 %v1715
    %1757 = vmatprep.subr.mxu0 0.0
    %1758 = vmatpush2.msra.mxu0 0.0
    %1759 = vmatprep.subr.mxu0 0.0
    %1760 = vmatpush2.msra.mxu0 0.0
    %1761 = vmatprep.subr.mxu0 0.0
    %1762 = vmatpush2.msra.mxu0 0.0
    %1763 = vmatprep.subr.mxu0 0.0
    %1764 = vmatpush2.msra.mxu0 0.0
    %1765 = vmatprep.subr.mxu0 0.0
    %1766 = vmatpush2.msra.mxu0 0.0
    %1767 = vmatprep.subr.mxu0 0.0
    %1768 = vmatpush2.msra.mxu0 0.0
    %1769 = vmatprep.subr.mxu0 0.0
    %1770 = vmatpush2.msra.mxu0 0.0
    %1771 = vmatprep.subr.mxu0 0.0
    %1772 = vmatpush2.msra.mxu0 0.0
    %1773 = vmatprep.subr.mxu0 0.0
    %1774 = vmatpush2.msra.mxu0 0.0
    %1775 = vmatprep.subr.mxu0 0.0
    %1776 = vmatpush2.msra.mxu0 0.0
    %1777 = vmatprep.subr.mxu0 0.0
    %1778 = vmatpush2.msra.mxu0 0.0
    %1779 = vmatprep.subr.mxu0 0.0
    %1780 = vmatpush2.msra.mxu0 0.0
    %1781 = vmatprep.subr.mxu0 0.0
    %1782 = vmatpush2.msra.mxu0 0.0
    %1783 = vmatprep.subr.mxu0 0.0
    %1784 = vmatpush2.msra.mxu0 0.0
    %1785 = vmatprep.subr.mxu0 0.0
    %1786 = vmatpush2.msra.mxu0 0.0
    %1787 = vmatprep.subr.mxu0 0.0
    %1788 = vmatpush2.msra.mxu0 0.0
    %1789 = vmatprep.mubr.f32.mxu0 0.0
    %1790 = vmatmul.mubr.f32.gmra.mxu0 %v1720
    %v1791 = vpop.f32.mrf.mxu0
    %v1792 = vadd.f32 0.0, %v1791
    %v1793 = vpop.f32.mrf.mxu0
    %1794 = vmatprep.mubr.f32.mxu0 0.0
    %1795 = vmatmul.mubr.f32.gmra.mxu0 %v1723
    %v1796 = vpop.f32.mrf.mxu0
    %v1797 = vadd.f32 0.0, %v1796
    %v1798 = vpop.f32.mrf.mxu0
    %1799 = vdwg.mxu0
    %s1800 = scalar_lea.vmem %s6, 4
    %v1801 = vld [vmem:[%s1800] sm:$0xf]
    %v1802 = vld [vmem:[%s7 + $0x1] sm:$0x1]
    %v1803 = vlaneseq
    %v1804 = vshrl.u32 %v1803, 7
    %v1805 = vsub.s32 3, %v1804
    %v1806 = vrot.slane %v1801, %v1805
    %v1807 = vmul.f32 %v1806, %v1792
    %v1808 = vmul.f32 %v1806, %v1797
    %v1809 = vlaneseq
    %v1810 = vshrl.u32 %v1809, 7
    %v1811 = vsub.s32 0, %v1810
    %v1812 = vrot.slane %v1802, %v1811
    %v1813 = vadd.f32 %v1812, %v1807
    %v1814 = vadd.f32 %v1812, %v1808
    %v1816 = vrot.slane %v1792, 5
    %v1819 = vrot.slane %v1797, 5
    %v1821 = vsel %vm377, 0.0, %v1816
    %v1822 = vsel %vm377, 0.0, %v1819
    %v1823 = vlaneseq
    %v1824 = vshrl.u32 %v1823, 7
    %v1825 = vsub.s32 0, %v1824
    %v1826 = vrot.slane %v1801, %v1825
    %v1827 = vmul.f32 %v1826, %v1821
    %v1828 = vmul.f32 %v1826, %v1822
    %v1829 = vadd.f32 %v1813, %v1827
    %v1830 = vadd.f32 %v1814, %v1828
    %v1831 = vrot.slane %v1792, 6
    %v1833 = vrot.slane %v1797, 6
    %v1835 = vsel %vm392, 0.0, %v1831
    %v1836 = vsel %vm392, 0.0, %v1833
    %v1837 = vlaneseq
    %v1838 = vshrl.u32 %v1837, 7
    %v1839 = vsub.s32 1, %v1838
    %v1840 = vrot.slane %v1801, %v1839
    %v1841 = vmul.f32 %v1840, %v1835
    %v1842 = vmul.f32 %v1840, %v1836
    %v1843 = vadd.f32 %v1829, %v1841
    %v1844 = vadd.f32 %v1830, %v1842
    %v1845 = vrot.slane %v1792, 7
    %v1847 = vrot.slane %v1797, 7
    %v1849 = vsel %vm407, 0.0, %v1845
    %v1850 = vsel %vm407, 0.0, %v1847
    %v1851 = vlaneseq
    %v1852 = vshrl.u32 %v1851, 7
    %v1853 = vsub.s32 2, %v1852
    %v1854 = vrot.slane %v1801, %v1853
    %v1855 = vmul.f32 %v1854, %v1849
    %v1856 = vmul.f32 %v1854, %v1850
    %v1857 = vadd.f32 %v1843, %v1855
    %v1858 = vadd.f32 %v1844, %v1856
    %v1859 = vsub.f32 0.0, %v1857
    %v1860 = vsub.f32 0.0, %v1858
    %v1861 = vmul.f32 %v1859, 1.442695
    %v1862 = vpow.pop %v1861
    %v1863 = vmul.f32 %v1860, 1.442695
    %v1864 = vpow.pop %v1863
    %v1865 = vadd.f32 %v1862, 1.0
    %v1866 = vadd.f32 %v1864, 1.0
    %v1867 = vrcp.pop %v1865
    %v1868 = vmul.f32 1.0, %v1867
    %v1869 = vrcp.pop %v1866
    %v1870 = vmul.f32 1.0, %v1869
    %v1871 = vmul.f32 %v1857, %v1868
    %v1872 = vmul.f32 %v1858, %v1870
    %s1873 = scalar_lea.vmem %s8, 64
    %v1874 = vld [vmem:[%s1873] sm:$0xff]
    %v1875 = vld [vmem:[%s1873 + $0x8] sm:$0xff]
    %v1876 = vld [vmem:[%s1873 + $0x10] sm:$0xff]
    %v1877 = vld [vmem:[%s1873 + $0x18] sm:$0xff]
    %v1878 = vld [vmem:[%s1873 + $0x20] sm:$0xff]
    %v1879 = vld [vmem:[%s1873 + $0x28] sm:$0xff]
    %v1880 = vld [vmem:[%s1873 + $0x30] sm:$0xff]
    %v1881 = vld [vmem:[%s1873 + $0x38] sm:$0xff]
    %v1883 = vsel %vm440, %v1871, 0
    %v1886 = vsel %vm440, %v1872, 0
    %1888 = vmatprep.subr.mxu0 0.0
    %1889 = vmatpush1.msra.mxu0 0.0
    %1890 = vmatprep.subr.mxu0 0.0
    %1891 = vmatpush1.msra.mxu0 0.0
    %1892 = vmatprep.subr.mxu0 0.0
    %1893 = vmatpush1.msra.mxu0 0.0
    %1894 = vmatprep.subr.mxu0 0.0
    %1895 = vmatpush1.msra.mxu0 0.0
    %1896 = vmatprep.subr.mxu0 0.0
    %1897 = vmatpush1.msra.mxu0 0.0
    %1898 = vmatprep.subr.mxu0 0.0
    %1899 = vmatpush1.msra.mxu0 0.0
    %1900 = vmatprep.subr.mxu0 0.0
    %1901 = vmatpush1.msra.mxu0 0.0
    %1902 = vmatprep.subr.mxu0 0.0
    %1903 = vmatpush1.msra.mxu0 0.0
    %1904 = vmatprep.subr.mxu0 0.0
    %1905 = vmatpush1.msra.mxu0 %v1881
    %1906 = vmatprep.subr.mxu0 0.0
    %1907 = vmatpush1.msra.mxu0 %v1880
    %1908 = vmatprep.subr.mxu0 0.0
    %1909 = vmatpush1.msra.mxu0 %v1879
    %1910 = vmatprep.subr.mxu0 0.0
    %1911 = vmatpush1.msra.mxu0 %v1878
    %1912 = vmatprep.subr.mxu0 0.0
    %1913 = vmatpush1.msra.mxu0 %v1877
    %1914 = vmatprep.subr.mxu0 0.0
    %1915 = vmatpush1.msra.mxu0 %v1876
    %1916 = vmatprep.subr.mxu0 0.0
    %1917 = vmatpush1.msra.mxu0 %v1875
    %1918 = vmatprep.subr.mxu0 0.0
    %1919 = vmatpush1.msra.mxu0 %v1874
    %1920 = vmatprep.subr.mxu0 0.0
    %1921 = vmatpush2.msra.mxu0 0.0
    %1922 = vmatprep.subr.mxu0 0.0
    %1923 = vmatpush2.msra.mxu0 0.0
    %1924 = vmatprep.subr.mxu0 0.0
    %1925 = vmatpush2.msra.mxu0 0.0
    %1926 = vmatprep.subr.mxu0 0.0
    %1927 = vmatpush2.msra.mxu0 0.0
    %1928 = vmatprep.subr.mxu0 0.0
    %1929 = vmatpush2.msra.mxu0 0.0
    %1930 = vmatprep.subr.mxu0 0.0
    %1931 = vmatpush2.msra.mxu0 0.0
    %1932 = vmatprep.subr.mxu0 0.0
    %1933 = vmatpush2.msra.mxu0 0.0
    %1934 = vmatprep.subr.mxu0 0.0
    %1935 = vmatpush2.msra.mxu0 0.0
    %1936 = vmatprep.subr.mxu0 0.0
    %1937 = vmatpush2.msra.mxu0 0.0
    %1938 = vmatprep.subr.mxu0 0.0
    %1939 = vmatpush2.msra.mxu0 0.0
    %1940 = vmatprep.subr.mxu0 0.0
    %1941 = vmatpush2.msra.mxu0 0.0
    %1942 = vmatprep.subr.mxu0 0.0
    %1943 = vmatpush2.msra.mxu0 0.0
    %1944 = vmatprep.subr.mxu0 0.0
    %1945 = vmatpush2.msra.mxu0 0.0
    %1946 = vmatprep.subr.mxu0 0.0
    %1947 = vmatpush2.msra.mxu0 0.0
    %1948 = vmatprep.subr.mxu0 0.0
    %1949 = vmatpush2.msra.mxu0 0.0
    %1950 = vmatprep.subr.mxu0 0.0
    %1951 = vmatpush2.msra.mxu0 0.0
    %1952 = vmatprep.mubr.f32.mxu0 0.0
    %1953 = vmatmul.mubr.f32.gmra.mxu0 %v1883
    %v1954 = vpop.f32.mrf.mxu0
    %v1955 = vadd.f32 0.0, %v1954
    %v1956 = vpop.f32.mrf.mxu0
    %1957 = vmatprep.mubr.f32.mxu0 0.0
    %1958 = vmatmul.mubr.f32.gmra.mxu0 %v1886
    %v1959 = vpop.f32.mrf.mxu0
    %v1960 = vadd.f32 0.0, %v1959
    %v1961 = vpop.f32.mrf.mxu0
    %1962 = vdwg.mxu0
    %s1963 = scalar_lea.vmem %s9, 2
    %v1964 = vld [vmem:[%s1963] sm:$0x3]
    %v1965 = vld [vmem:[%s10 + $0x1] sm:$0x1]
    %1967 = vset.pattern.permute.xlu0 0
    %1968 = vperm.xlu0 %1967, %v1955
    %v1969 = vpop.permute.xlu0 %1968
    %1972 = vset.pattern.permute.xlu0 0
    %1973 = vperm.xlu0 %1972, %v1960
    %v1974 = vpop.permute.xlu0 %1973
    %v1976 = vlaneseq
    %v1977 = vshrl.u32 %v1976, 7
    %v1978 = vsub.s32 0, %v1977
    %v1979 = vrot.slane %v1964, %v1978
    %v1980 = vmul.f32 %v1969, %v1979
    %v1981 = vmul.f32 %v1974, %v1979
    %v1982 = vlaneseq
    %v1983 = vshrl.u32 %v1982, 7
    %v1984 = vsub.s32 0, %v1983
    %v1985 = vrot.slane %v1965, %v1984
    %v1986 = vadd.f32 %v1985, %v1980
    %v1987 = vadd.f32 %v1985, %v1981
    %1988 = vset.pattern.permute.xlu0 1
    %1989 = vperm.xlu0 %1988, %v1955
    %v1990 = vpop.permute.xlu0 %1989
    %1992 = vset.pattern.permute.xlu0 1
    %1993 = vperm.xlu0 %1992, %v1960
    %v1994 = vpop.permute.xlu0 %1993
    %v1996 = vlaneseq
    %v1997 = vshrl.u32 %v1996, 7
    %v1998 = vsub.s32 1, %v1997
    %v1999 = vrot.slane %v1964, %v1998
    %v2000 = vmul.f32 %v1990, %v1999
    %v2001 = vmul.f32 %v1994, %v1999
    %v2002 = vadd.f32 %v1986, %v2000
    %v2003 = vadd.f32 %v1987, %v2001
    %v2004 = vand.u32 2147483647, %v2002
    %v2005 = vand.u32 2147483647, %v2003
    %v2006 = vsub.f32 0.0, %v2004
    %v2007 = vsub.f32 0.0, %v2005
    %v2008 = vmul.f32 %v2006, 1.442695
    %v2009 = vpow.pop %v2008
    %v2010 = vmul.f32 %v2007, 1.442695
    %v2011 = vpow.pop %v2010
    %v2012 = vadd.f32 %v2009, 1.0
    %v2013 = vadd.f32 %v2011, 1.0
    %v2014 = vlog2.pop %v2012
    %v2015 = vmul.f32 %v2014, 0.6931472
    %v2016 = vlog2.pop %v2013
    %v2017 = vmul.f32 %v2016, 0.6931472
    %v2018 = vmax.f32 %v2002, 0.0
    %v2019 = vmax.f32 %v2003, 0.0
    %v2020 = vadd.f32 %v2015, %v2018
    %v2021 = vadd.f32 %v2017, %v2019
    %s2022 = scalar_lea.vmem %s11, 16
    %v2023 = vld [vmem:[%s2022] sm:$0xff]
    %v2024 = vld [vmem:[%s2022 + $0x8] sm:$0xff]
    %v2025 = vmul.f32 %v2023, 1.442695
    %v2026 = vpow.pop %v2025
    %v2027 = vmul.f32 %v2024, 1.442695
    %v2028 = vpow.pop %v2027
    %v2029 = vsub.f32 0.0, %v2026
    %v2030 = vsub.f32 0.0, %v2028
    %v2031 = vld [vmem:[%s12 + $0x1] sm:$0x1]
    %v2032 = vsub.f32 0.0, %v1792
    %v2033 = vsub.f32 0.0, %v1797
    %v2034 = vmul.f32 %v2032, 1.442695
    %v2035 = vpow.pop %v2034
    %v2036 = vmul.f32 %v2033, 1.442695
    %v2037 = vpow.pop %v2036
    %v2038 = vadd.f32 %v2035, 1.0
    %v2039 = vadd.f32 %v2037, 1.0
    %v2040 = vrcp.pop %v2038
    %v2041 = vmul.f32 1.0, %v2040
    %v2042 = vrcp.pop %v2039
    %v2043 = vmul.f32 1.0, %v2042
    %v2044 = vmul.f32 %v1792, %v2041
    %v2045 = vmul.f32 %v1797, %v2043
    %v2046 = vmul.f32 %v2020, %v1871
    %v2047 = vmul.f32 %v2021, %v1872
    %2048 = vrot.lane.b32.xlu0 %v1955, 126
    %v2049 = vpop.permute.xlu0 %2048
    %2051 = vxpose.xlu0.b32.start [1/16] %v2049, 128
    %2052 = vxpose.xlu0.b32.cont [2/16] 0.0, 128
    %2053 = vxpose.xlu0.b32.cont [3/16] 0.0, 128
    %2054 = vxpose.xlu0.b32.cont [4/16] 0.0, 128
    %2055 = vxpose.xlu0.b32.cont [5/16] 0.0, 128
    %2056 = vxpose.xlu0.b32.cont [6/16] 0.0, 128
    %2057 = vxpose.xlu0.b32.cont [7/16] 0.0, 128
    %2058 = vxpose.xlu0.b32.cont [8/16] 0.0, 128
    %2059 = vxpose.xlu0.b32.cont [9/16] 0.0, 128
    %2060 = vxpose.xlu0.b32.cont [10/16] 0.0, 128
    %2061 = vxpose.xlu0.b32.cont [11/16] 0.0, 128
    %2062 = vxpose.xlu0.b32.cont [12/16] 0.0, 128
    %2063 = vxpose.xlu0.b32.cont [13/16] 0.0, 128
    %2064 = vxpose.xlu0.b32.cont [14/16] 0.0, 128
    %2065 = vxpose.xlu0.b32.cont [15/16] 0.0, 128
    %2066 = vxpose.xlu0.b32.end [16/16] 0.0, 128
    %v2067 = vpop.trf.xlu0
    %v2068 = vpop.trf.xlu0
    %v2069 = vpop.trf.xlu0
    %v2070 = vpop.trf.xlu0
    %v2071 = vpop.trf.xlu0
    %v2072 = vpop.trf.xlu0
    %v2073 = vpop.trf.xlu0
    %v2074 = vpop.trf.xlu0
    %v2075 = vpop.trf.xlu0
    %v2076 = vpop.trf.xlu0
    %v2077 = vpop.trf.xlu0
    %v2078 = vpop.trf.xlu0
    %v2079 = vpop.trf.xlu0
    %v2080 = vpop.trf.xlu0
    %v2081 = vpop.trf.xlu0
    %v2082 = vpop.trf.xlu0
    %2083 = vrot.lane.b32.xlu0 %v1955, 110
    %v2084 = vpop.permute.xlu0 %2083
    %2086 = vxpose.xlu0.b32.start [1/16] %v2084, 128
    %2087 = vxpose.xlu0.b32.cont [2/16] 0.0, 128
    %2088 = vxpose.xlu0.b32.cont [3/16] 0.0, 128
    %2089 = vxpose.xlu0.b32.cont [4/16] 0.0, 128
    %2090 = vxpose.xlu0.b32.cont [5/16] 0.0, 128
    %2091 = vxpose.xlu0.b32.cont [6/16] 0.0, 128
    %2092 = vxpose.xlu0.b32.cont [7/16] 0.0, 128
    %2093 = vxpose.xlu0.b32.cont [8/16] 0.0, 128
    %2094 = vxpose.xlu0.b32.cont [9/16] 0.0, 128
    %2095 = vxpose.xlu0.b32.cont [10/16] 0.0, 128
    %2096 = vxpose.xlu0.b32.cont [11/16] 0.0, 128
    %2097 = vxpose.xlu0.b32.cont [12/16] 0.0, 128
    %2098 = vxpose.xlu0.b32.cont [13/16] 0.0, 128
    %2099 = vxpose.xlu0.b32.cont [14/16] 0.0, 128
    %2100 = vxpose.xlu0.b32.cont [15/16] 0.0, 128
    %2101 = vxpose.xlu0.b32.end [16/16] 0.0, 128
    %v2102 = vpop.trf.xlu0
    %v2103 = vpop.trf.xlu0
    %v2104 = vpop.trf.xlu0
    %v2105 = vpop.trf.xlu0
    %v2106 = vpop.trf.xlu0
    %v2107 = vpop.trf.xlu0
    %v2108 = vpop.trf.xlu0
    %v2109 = vpop.trf.xlu0
    %v2110 = vpop.trf.xlu0
    %v2111 = vpop.trf.xlu0
    %v2112 = vpop.trf.xlu0
    %v2113 = vpop.trf.xlu0
    %v2114 = vpop.trf.xlu0
    %v2115 = vpop.trf.xlu0
    %v2116 = vpop.trf.xlu0
    %v2117 = vpop.trf.xlu0
    %v2118 = vlaneseq
    %v2119 = vshrl.u32 %v2118, 7
    %v2120 = vsub.s32 0, %v2119
    %v2121 = vrot.slane %v2020, %v2120
    %v2122 = vmul.f32 %v2029, %v2121
    %v2123 = vmul.f32 %v2030, %v2121
    %v2124 = vmul.f32 %v2122, 1.442695
    %v2125 = vpow.pop %v2124
    %v2126 = vmul.f32 %v2123, 1.442695
    %v2127 = vpow.pop %v2126
    %v2128 = vlaneseq
    %v2129 = vshrl.u32 %v2128, 7
    %v2130 = vsub.s32 1, %v2129
    %v2131 = vrot.slane %v2020, %v2130
    %v2132 = vmul.f32 %v2029, %v2131
    %v2133 = vmul.f32 %v2030, %v2131
    %v2134 = vmul.f32 %v2132, 1.442695
    %v2135 = vpow.pop %v2134
    %v2136 = vmul.f32 %v2133, 1.442695
    %v2137 = vpow.pop %v2136
    %v2138 = vlaneseq
    %v2139 = vshrl.u32 %v2138, 7
    %v2140 = vsub.s32 2, %v2139
    %v2141 = vrot.slane %v2020, %v2140
    %v2142 = vmul.f32 %v2029, %v2141
    %v2143 = vmul.f32 %v2030, %v2141
    %v2144 = vmul.f32 %v2142, 1.442695
    %v2145 = vpow.pop %v2144
    %v2146 = vmul.f32 %v2143, 1.442695
    %v2147 = vpow.pop %v2146
    %v2148 = vlaneseq
    %v2149 = vshrl.u32 %v2148, 7
    %v2150 = vsub.s32 3, %v2149
    %v2151 = vrot.slane %v2020, %v2150
    %v2152 = vmul.f32 %v2029, %v2151
    %v2153 = vmul.f32 %v2030, %v2151
    %v2154 = vmul.f32 %v2152, 1.442695
    %v2155 = vpow.pop %v2154
    %v2156 = vmul.f32 %v2153, 1.442695
    %v2157 = vpow.pop %v2156
    %v2158 = vlaneseq
    %v2159 = vshrl.u32 %v2158, 7
    %v2160 = vsub.s32 4, %v2159
    %v2161 = vrot.slane %v2020, %v2160
    %v2162 = vmul.f32 %v2029, %v2161
    %v2163 = vmul.f32 %v2030, %v2161
    %v2164 = vmul.f32 %v2162, 1.442695
    %v2165 = vpow.pop %v2164
    %v2166 = vmul.f32 %v2163, 1.442695
    %v2167 = vpow.pop %v2166
    %v2168 = vlaneseq
    %v2169 = vshrl.u32 %v2168, 7
    %v2170 = vsub.s32 5, %v2169
    %v2171 = vrot.slane %v2020, %v2170
    %v2172 = vmul.f32 %v2029, %v2171
    %v2173 = vmul.f32 %v2030, %v2171
    %v2174 = vmul.f32 %v2172, 1.442695
    %v2175 = vpow.pop %v2174
    %v2176 = vmul.f32 %v2173, 1.442695
    %v2177 = vpow.pop %v2176
    %v2178 = vlaneseq
    %v2179 = vshrl.u32 %v2178, 7
    %v2180 = vsub.s32 6, %v2179
    %v2181 = vrot.slane %v2020, %v2180
    %v2182 = vmul.f32 %v2029, %v2181
    %v2183 = vmul.f32 %v2030, %v2181
    %v2184 = vmul.f32 %v2182, 1.442695
    %v2185 = vpow.pop %v2184
    %v2186 = vmul.f32 %v2183, 1.442695
    %v2187 = vpow.pop %v2186
    %v2188 = vlaneseq
    %v2189 = vshrl.u32 %v2188, 7
    %v2190 = vsub.s32 7, %v2189
    %v2191 = vrot.slane %v2020, %v2190
    %v2192 = vmul.f32 %v2029, %v2191
    %v2193 = vmul.f32 %v2030, %v2191
    %v2194 = vmul.f32 %v2192, 1.442695
    %v2195 = vpow.pop %v2194
    %v2196 = vmul.f32 %v2193, 1.442695
    %v2197 = vpow.pop %v2196
    %v2198 = vlaneseq
    %v2199 = vshrl.u32 %v2198, 7
    %v2200 = vsub.s32 0, %v2199
    %v2201 = vrot.slane %v2046, %v2200
    %2203 = vset.pattern.permute.xlu0 0
    %2204 = vperm.xlu0 %2203, %v2067
    %v2205 = vpop.permute.xlu0 %2204
    %2208 = vset.pattern.permute.xlu0 0
    %2209 = vperm.xlu0 %2208, %v2068
    %v2210 = vpop.permute.xlu0 %2209
    %v2212 = vmul.f32 %v2201, %v2205
    %v2213 = vmul.f32 %v2201, %v2210
    %v2214 = vlaneseq
    %v2215 = vshrl.u32 %v2214, 7
    %v2216 = vsub.s32 1, %v2215
    %v2217 = vrot.slane %v2046, %v2216
    %2218 = vset.pattern.permute.xlu0 1
    %2219 = vperm.xlu0 %2218, %v2067
    %v2220 = vpop.permute.xlu0 %2219
    %2222 = vset.pattern.permute.xlu0 1
    %2223 = vperm.xlu0 %2222, %v2068
    %v2224 = vpop.permute.xlu0 %2223
    %v2226 = vmul.f32 %v2217, %v2220
    %v2227 = vmul.f32 %v2217, %v2224
    %v2228 = vlaneseq
    %v2229 = vshrl.u32 %v2228, 7
    %v2230 = vsub.s32 2, %v2229
    %v2231 = vrot.slane %v2046, %v2230
    %2232 = vset.pattern.permute.xlu0 2
    %2233 = vperm.xlu0 %2232, %v2067
    %v2234 = vpop.permute.xlu0 %2233
    %2236 = vset.pattern.permute.xlu0 2
    %2237 = vperm.xlu0 %2236, %v2068
    %v2238 = vpop.permute.xlu0 %2237
    %v2240 = vmul.f32 %v2231, %v2234
    %v2241 = vmul.f32 %v2231, %v2238
    %v2242 = vlaneseq
    %v2243 = vshrl.u32 %v2242, 7
    %v2244 = vsub.s32 3, %v2243
    %v2245 = vrot.slane %v2046, %v2244
    %2246 = vset.pattern.permute.xlu0 3
    %2247 = vperm.xlu0 %2246, %v2067
    %v2248 = vpop.permute.xlu0 %2247
    %2250 = vset.pattern.permute.xlu0 3
    %2251 = vperm.xlu0 %2250, %v2068
    %v2252 = vpop.permute.xlu0 %2251
    %v2254 = vmul.f32 %v2245, %v2248
    %v2255 = vmul.f32 %v2245, %v2252
    %v2256 = vlaneseq
    %v2257 = vshrl.u32 %v2256, 7
    %v2258 = vsub.s32 4, %v2257
    %v2259 = vrot.slane %v2046, %v2258
    %2260 = vset.pattern.permute.xlu0 4
    %2261 = vperm.xlu0 %2260, %v2067
    %v2262 = vpop.permute.xlu0 %2261
    %2264 = vset.pattern.permute.xlu0 4
    %2265 = vperm.xlu0 %2264, %v2068
    %v2266 = vpop.permute.xlu0 %2265
    %v2268 = vmul.f32 %v2259, %v2262
    %v2269 = vmul.f32 %v2259, %v2266
    %v2270 = vlaneseq
    %v2271 = vshrl.u32 %v2270, 7
    %v2272 = vsub.s32 5, %v2271
    %v2273 = vrot.slane %v2046, %v2272
    %2274 = vset.pattern.permute.xlu0 5
    %2275 = vperm.xlu0 %2274, %v2067
    %v2276 = vpop.permute.xlu0 %2275
    %2278 = vset.pattern.permute.xlu0 5
    %2279 = vperm.xlu0 %2278, %v2068
    %v2280 = vpop.permute.xlu0 %2279
    %v2282 = vmul.f32 %v2273, %v2276
    %v2283 = vmul.f32 %v2273, %v2280
    %v2284 = vlaneseq
    %v2285 = vshrl.u32 %v2284, 7
    %v2286 = vsub.s32 6, %v2285
    %v2287 = vrot.slane %v2046, %v2286
    %2288 = vset.pattern.permute.xlu0 6
    %2289 = vperm.xlu0 %2288, %v2067
    %v2290 = vpop.permute.xlu0 %2289
    %2292 = vset.pattern.permute.xlu0 6
    %2293 = vperm.xlu0 %2292, %v2068
    %v2294 = vpop.permute.xlu0 %2293
    %v2296 = vmul.f32 %v2287, %v2290
    %v2297 = vmul.f32 %v2287, %v2294
    %v2298 = vlaneseq
    %v2299 = vshrl.u32 %v2298, 7
    %v2300 = vsub.s32 7, %v2299
    %v2301 = vrot.slane %v2046, %v2300
    %2302 = vset.pattern.permute.xlu0 7
    %2303 = vperm.xlu0 %2302, %v2067
    %v2304 = vpop.permute.xlu0 %2303
    %2306 = vset.pattern.permute.xlu0 7
    %2307 = vperm.xlu0 %2306, %v2068
    %v2308 = vpop.permute.xlu0 %2307
    %v2310 = vmul.f32 %v2301, %v2304
    %v2311 = vmul.f32 %v2301, %v2308
    %v2312 = vmul.f32 %v2125, 0.0
    %v2313 = vmul.f32 %v2127, 0.0
    %v2314 = vadd.f32 %v2312, %v2212
    %v2315 = vadd.f32 %v2313, %v2213
    %2317 = vset.pattern.permute.xlu0 0
    %2318 = vperm.xlu0 %2317, %v2102
    %v2319 = vpop.permute.xlu0 %2318
    %2322 = vset.pattern.permute.xlu0 0
    %2323 = vperm.xlu0 %2322, %v2103
    %v2324 = vpop.permute.xlu0 %2323
    %v2326 = vmul.f32 %v2314, %v2319
    %v2327 = vmul.f32 %v2315, %v2324
    %v2328 = vsel %vm440, %v2326, 0.0
    %v2329 = vsel %vm440, %v2327, 0.0
    %v2330 = vadd.f32 %v2328, %v2329
    %v2331 = vrot.slane %v2330, 4
    %v2332 = vadd.f32 %v2330, %v2331
    %v2333 = vrot.slane %v2332, 2
    %v2334 = vadd.f32 %v2332, %v2333
    %v2335 = vrot.slane %v2334, 1
    %v2336 = vadd.f32 %v2334, %v2335
    %v2337 = vmul.f32 %v2135, %v2314
    %v2338 = vmul.f32 %v2137, %v2315
    %v2339 = vadd.f32 %v2337, %v2226
    %v2340 = vadd.f32 %v2338, %v2227
    %2341 = vset.pattern.permute.xlu0 1
    %2342 = vperm.xlu0 %2341, %v2102
    %v2343 = vpop.permute.xlu0 %2342
    %2345 = vset.pattern.permute.xlu0 1
    %2346 = vperm.xlu0 %2345, %v2103
    %v2347 = vpop.permute.xlu0 %2346
    %v2349 = vmul.f32 %v2339, %v2343
    %v2350 = vmul.f32 %v2340, %v2347
    %v2351 = vsel %vm440, %v2349, 0.0
    %v2352 = vsel %vm440, %v2350, 0.0
    %v2353 = vadd.f32 %v2351, %v2352
    %v2354 = vrot.slane %v2353, 4
    %v2355 = vadd.f32 %v2353, %v2354
    %v2356 = vrot.slane %v2355, 2
    %v2357 = vadd.f32 %v2355, %v2356
    %v2358 = vrot.slane %v2357, 1
    %v2359 = vadd.f32 %v2357, %v2358
    %v2360 = vmul.f32 %v2145, %v2339
    %v2361 = vmul.f32 %v2147, %v2340
    %v2362 = vadd.f32 %v2360, %v2240
    %v2363 = vadd.f32 %v2361, %v2241
    %2364 = vset.pattern.permute.xlu0 2
    %2365 = vperm.xlu0 %2364, %v2102
    %v2366 = vpop.permute.xlu0 %2365
    %2368 = vset.pattern.permute.xlu0 2
    %2369 = vperm.xlu0 %2368, %v2103
    %v2370 = vpop.permute.xlu0 %2369
    %v2372 = vmul.f32 %v2362, %v2366
    %v2373 = vmul.f32 %v2363, %v2370
    %v2374 = vsel %vm440, %v2372, 0.0
    %v2375 = vsel %vm440, %v2373, 0.0
    %v2376 = vadd.f32 %v2374, %v2375
    %v2377 = vrot.slane %v2376, 4
    %v2378 = vadd.f32 %v2376, %v2377
    %v2379 = vrot.slane %v2378, 2
    %v2380 = vadd.f32 %v2378, %v2379
    %v2381 = vrot.slane %v2380, 1
    %v2382 = vadd.f32 %v2380, %v2381
    %v2383 = vmul.f32 %v2155, %v2362
    %v2384 = vmul.f32 %v2157, %v2363
    %v2385 = vadd.f32 %v2383, %v2254
    %v2386 = vadd.f32 %v2384, %v2255
    %2387 = vset.pattern.permute.xlu0 3
    %2388 = vperm.xlu0 %2387, %v2102
    %v2389 = vpop.permute.xlu0 %2388
    %2391 = vset.pattern.permute.xlu0 3
    %2392 = vperm.xlu0 %2391, %v2103
    %v2393 = vpop.permute.xlu0 %2392
    %v2395 = vmul.f32 %v2385, %v2389
    %v2396 = vmul.f32 %v2386, %v2393
    %v2397 = vsel %vm440, %v2395, 0.0
    %v2398 = vsel %vm440, %v2396, 0.0
    %v2399 = vadd.f32 %v2397, %v2398
    %v2400 = vrot.slane %v2399, 4
    %v2401 = vadd.f32 %v2399, %v2400
    %v2402 = vrot.slane %v2401, 2
    %v2403 = vadd.f32 %v2401, %v2402
    %v2404 = vrot.slane %v2403, 1
    %v2405 = vadd.f32 %v2403, %v2404
    %v2406 = vmul.f32 %v2165, %v2385
    %v2407 = vmul.f32 %v2167, %v2386
    %v2408 = vadd.f32 %v2406, %v2268
    %v2409 = vadd.f32 %v2407, %v2269
    %2410 = vset.pattern.permute.xlu0 4
    %2411 = vperm.xlu0 %2410, %v2102
    %v2412 = vpop.permute.xlu0 %2411
    %2414 = vset.pattern.permute.xlu0 4
    %2415 = vperm.xlu0 %2414, %v2103
    %v2416 = vpop.permute.xlu0 %2415
    %v2418 = vmul.f32 %v2408, %v2412
    %v2419 = vmul.f32 %v2409, %v2416
    %v2420 = vsel %vm440, %v2418, 0.0
    %v2421 = vsel %vm440, %v2419, 0.0
    %v2422 = vadd.f32 %v2420, %v2421
    %v2423 = vrot.slane %v2422, 4
    %v2424 = vadd.f32 %v2422, %v2423
    %v2425 = vrot.slane %v2424, 2
    %v2426 = vadd.f32 %v2424, %v2425
    %v2427 = vrot.slane %v2426, 1
    %v2428 = vadd.f32 %v2426, %v2427
    %v2429 = vmul.f32 %v2175, %v2408
    %v2430 = vmul.f32 %v2177, %v2409
    %v2431 = vadd.f32 %v2429, %v2282
    %v2432 = vadd.f32 %v2430, %v2283
    %2433 = vset.pattern.permute.xlu0 5
    %2434 = vperm.xlu0 %2433, %v2102
    %v2435 = vpop.permute.xlu0 %2434
    %2437 = vset.pattern.permute.xlu0 5
    %2438 = vperm.xlu0 %2437, %v2103
    %v2439 = vpop.permute.xlu0 %2438
    %v2441 = vmul.f32 %v2431, %v2435
    %v2442 = vmul.f32 %v2432, %v2439
    %v2443 = vsel %vm440, %v2441, 0.0
    %v2444 = vsel %vm440, %v2442, 0.0
    %v2445 = vadd.f32 %v2443, %v2444
    %v2446 = vrot.slane %v2445, 4
    %v2447 = vadd.f32 %v2445, %v2446
    %v2448 = vrot.slane %v2447, 2
    %v2449 = vadd.f32 %v2447, %v2448
    %v2450 = vrot.slane %v2449, 1
    %v2451 = vadd.f32 %v2449, %v2450
    %v2452 = vmul.f32 %v2185, %v2431
    %v2453 = vmul.f32 %v2187, %v2432
    %v2454 = vadd.f32 %v2452, %v2296
    %v2455 = vadd.f32 %v2453, %v2297
    %2456 = vset.pattern.permute.xlu0 6
    %2457 = vperm.xlu0 %2456, %v2102
    %v2458 = vpop.permute.xlu0 %2457
    %2460 = vset.pattern.permute.xlu0 6
    %2461 = vperm.xlu0 %2460, %v2103
    %v2462 = vpop.permute.xlu0 %2461
    %v2464 = vmul.f32 %v2454, %v2458
    %v2465 = vmul.f32 %v2455, %v2462
    %v2466 = vsel %vm440, %v2464, 0.0
    %v2467 = vsel %vm440, %v2465, 0.0
    %v2468 = vadd.f32 %v2466, %v2467
    %v2469 = vrot.slane %v2468, 4
    %v2470 = vadd.f32 %v2468, %v2469
    %v2471 = vrot.slane %v2470, 2
    %v2472 = vadd.f32 %v2470, %v2471
    %v2473 = vrot.slane %v2472, 1
    %v2474 = vadd.f32 %v2472, %v2473
    %v2475 = vmul.f32 %v2195, %v2454
    %v2476 = vmul.f32 %v2197, %v2455
    %v2477 = vadd.f32 %v2475, %v2310
    %v2478 = vadd.f32 %v2476, %v2311
    %2479 = vset.pattern.permute.xlu0 7
    %2480 = vperm.xlu0 %2479, %v2102
    %v2481 = vpop.permute.xlu0 %2480
    %2483 = vset.pattern.permute.xlu0 7
    %2484 = vperm.xlu0 %2483, %v2103
    %v2485 = vpop.permute.xlu0 %2484
    %v2487 = vmul.f32 %v2477, %v2481
    %v2488 = vmul.f32 %v2478, %v2485
    %v2489 = vsel %vm440, %v2487, 0.0
    %v2490 = vsel %vm440, %v2488, 0.0
    %v2491 = vadd.f32 %v2489, %v2490
    %v2492 = vrot.slane %v2491, 4
    %v2493 = vadd.f32 %v2491, %v2492
    %v2494 = vrot.slane %v2493, 2
    %v2495 = vadd.f32 %v2493, %v2494
    %v2496 = vrot.slane %v2495, 1
    %v2497 = vadd.f32 %v2495, %v2496
    %v2498 = vsel %vm407, %v2336, %v2359
    %v2499 = vsel %vm392, %v2498, %v2382
    %v2500 = vsel %vm377, %v2499, %v2405
    %v2501 = vsel %vm1058, %v2500, %v2428
    %v2502 = vsel %vm1060, %v2501, %v2451
    %v2503 = vsel %vm1062, %v2502, %v2474
    %v2504 = vsel %vm1064, %v2503, %v2497
    %2505 = vrot.lane.b32.xlu0 %v1960, 126
    %v2506 = vpop.permute.xlu0 %2505
    %2508 = vxpose.xlu0.b32.start [1/16] %v2506, 128
    %2509 = vxpose.xlu0.b32.cont [2/16] 0.0, 128
    %2510 = vxpose.xlu0.b32.cont [3/16] 0.0, 128
    %2511 = vxpose.xlu0.b32.cont [4/16] 0.0, 128
    %2512 = vxpose.xlu0.b32.cont [5/16] 0.0, 128
    %2513 = vxpose.xlu0.b32.cont [6/16] 0.0, 128
    %2514 = vxpose.xlu0.b32.cont [7/16] 0.0, 128
    %2515 = vxpose.xlu0.b32.cont [8/16] 0.0, 128
    %2516 = vxpose.xlu0.b32.cont [9/16] 0.0, 128
    %2517 = vxpose.xlu0.b32.cont [10/16] 0.0, 128
    %2518 = vxpose.xlu0.b32.cont [11/16] 0.0, 128
    %2519 = vxpose.xlu0.b32.cont [12/16] 0.0, 128
    %2520 = vxpose.xlu0.b32.cont [13/16] 0.0, 128
    %2521 = vxpose.xlu0.b32.cont [14/16] 0.0, 128
    %2522 = vxpose.xlu0.b32.cont [15/16] 0.0, 128
    %2523 = vxpose.xlu0.b32.end [16/16] 0.0, 128
    %v2524 = vpop.trf.xlu0
    %v2525 = vpop.trf.xlu0
    %v2526 = vpop.trf.xlu0
    %v2527 = vpop.trf.xlu0
    %v2528 = vpop.trf.xlu0
    %v2529 = vpop.trf.xlu0
    %v2530 = vpop.trf.xlu0
    %v2531 = vpop.trf.xlu0
    %v2532 = vpop.trf.xlu0
    %v2533 = vpop.trf.xlu0
    %v2534 = vpop.trf.xlu0
    %v2535 = vpop.trf.xlu0
    %v2536 = vpop.trf.xlu0
    %v2537 = vpop.trf.xlu0
    %v2538 = vpop.trf.xlu0
    %v2539 = vpop.trf.xlu0
    %2540 = vrot.lane.b32.xlu0 %v1960, 110
    %v2541 = vpop.permute.xlu0 %2540
    %2543 = vxpose.xlu0.b32.start [1/16] %v2541, 128
    %2544 = vxpose.xlu0.b32.cont [2/16] 0.0, 128
    %2545 = vxpose.xlu0.b32.cont [3/16] 0.0, 128
    %2546 = vxpose.xlu0.b32.cont [4/16] 0.0, 128
    %2547 = vxpose.xlu0.b32.cont [5/16] 0.0, 128
    %2548 = vxpose.xlu0.b32.cont [6/16] 0.0, 128
    %2549 = vxpose.xlu0.b32.cont [7/16] 0.0, 128
    %2550 = vxpose.xlu0.b32.cont [8/16] 0.0, 128
    %2551 = vxpose.xlu0.b32.cont [9/16] 0.0, 128
    %2552 = vxpose.xlu0.b32.cont [10/16] 0.0, 128
    %2553 = vxpose.xlu0.b32.cont [11/16] 0.0, 128
    %2554 = vxpose.xlu0.b32.cont [12/16] 0.0, 128
    %2555 = vxpose.xlu0.b32.cont [13/16] 0.0, 128
    %2556 = vxpose.xlu0.b32.cont [14/16] 0.0, 128
    %2557 = vxpose.xlu0.b32.cont [15/16] 0.0, 128
    %2558 = vxpose.xlu0.b32.end [16/16] 0.0, 128
    %v2559 = vpop.trf.xlu0
    %v2560 = vpop.trf.xlu0
    %v2561 = vpop.trf.xlu0
    %v2562 = vpop.trf.xlu0
    %v2563 = vpop.trf.xlu0
    %v2564 = vpop.trf.xlu0
    %v2565 = vpop.trf.xlu0
    %v2566 = vpop.trf.xlu0
    %v2567 = vpop.trf.xlu0
    %v2568 = vpop.trf.xlu0
    %v2569 = vpop.trf.xlu0
    %v2570 = vpop.trf.xlu0
    %v2571 = vpop.trf.xlu0
    %v2572 = vpop.trf.xlu0
    %v2573 = vpop.trf.xlu0
    %v2574 = vpop.trf.xlu0
    %v2575 = vlaneseq
    %v2576 = vshrl.u32 %v2575, 7
    %v2577 = vsub.s32 0, %v2576
    %v2578 = vrot.slane %v2021, %v2577
    %v2579 = vmul.f32 %v2029, %v2578
    %v2580 = vmul.f32 %v2030, %v2578
    %v2581 = vmul.f32 %v2579, 1.442695
    %v2582 = vpow.pop %v2581
    %v2583 = vmul.f32 %v2580, 1.442695
    %v2584 = vpow.pop %v2583
    %v2585 = vlaneseq
    %v2586 = vshrl.u32 %v2585, 7
    %v2587 = vsub.s32 1, %v2586
    %v2588 = vrot.slane %v2021, %v2587
    %v2589 = vmul.f32 %v2029, %v2588
    %v2590 = vmul.f32 %v2030, %v2588
    %v2591 = vmul.f32 %v2589, 1.442695
    %v2592 = vpow.pop %v2591
    %v2593 = vmul.f32 %v2590, 1.442695
    %v2594 = vpow.pop %v2593
    %v2595 = vlaneseq
    %v2596 = vshrl.u32 %v2595, 7
    %v2597 = vsub.s32 2, %v2596
    %v2598 = vrot.slane %v2021, %v2597
    %v2599 = vmul.f32 %v2029, %v2598
    %v2600 = vmul.f32 %v2030, %v2598
    %v2601 = vmul.f32 %v2599, 1.442695
    %v2602 = vpow.pop %v2601
    %v2603 = vmul.f32 %v2600, 1.442695
    %v2604 = vpow.pop %v2603
    %v2605 = vlaneseq
    %v2606 = vshrl.u32 %v2605, 7
    %v2607 = vsub.s32 3, %v2606
    %v2608 = vrot.slane %v2021, %v2607
    %v2609 = vmul.f32 %v2029, %v2608
    %v2610 = vmul.f32 %v2030, %v2608
    %v2611 = vmul.f32 %v2609, 1.442695
    %v2612 = vpow.pop %v2611
    %v2613 = vmul.f32 %v2610, 1.442695
    %v2614 = vpow.pop %v2613
    %v2615 = vlaneseq
    %v2616 = vshrl.u32 %v2615, 7
    %v2617 = vsub.s32 4, %v2616
    %v2618 = vrot.slane %v2021, %v2617
    %v2619 = vmul.f32 %v2029, %v2618
    %v2620 = vmul.f32 %v2030, %v2618
    %v2621 = vmul.f32 %v2619, 1.442695
    %v2622 = vpow.pop %v2621
    %v2623 = vmul.f32 %v2620, 1.442695
    %v2624 = vpow.pop %v2623
    %v2625 = vlaneseq
    %v2626 = vshrl.u32 %v2625, 7
    %v2627 = vsub.s32 5, %v2626
    %v2628 = vrot.slane %v2021, %v2627
    %v2629 = vmul.f32 %v2029, %v2628
    %v2630 = vmul.f32 %v2030, %v2628
    %v2631 = vmul.f32 %v2629, 1.442695
    %v2632 = vpow.pop %v2631
    %v2633 = vmul.f32 %v2630, 1.442695
    %v2634 = vpow.pop %v2633
    %v2635 = vlaneseq
    %v2636 = vshrl.u32 %v2635, 7
    %v2637 = vsub.s32 6, %v2636
    %v2638 = vrot.slane %v2021, %v2637
    %v2639 = vmul.f32 %v2029, %v2638
    %v2640 = vmul.f32 %v2030, %v2638
    %v2641 = vmul.f32 %v2639, 1.442695
    %v2642 = vpow.pop %v2641
    %v2643 = vmul.f32 %v2640, 1.442695
    %v2644 = vpow.pop %v2643
    %v2645 = vlaneseq
    %v2646 = vshrl.u32 %v2645, 7
    %v2647 = vsub.s32 7, %v2646
    %v2648 = vrot.slane %v2021, %v2647
    %v2649 = vmul.f32 %v2029, %v2648
    %v2650 = vmul.f32 %v2030, %v2648
    %v2651 = vmul.f32 %v2649, 1.442695
    %v2652 = vpow.pop %v2651
    %v2653 = vmul.f32 %v2650, 1.442695
    %v2654 = vpow.pop %v2653
    %v2655 = vlaneseq
    %v2656 = vshrl.u32 %v2655, 7
    %v2657 = vsub.s32 0, %v2656
    %v2658 = vrot.slane %v2047, %v2657
    %2660 = vset.pattern.permute.xlu0 0
    %2661 = vperm.xlu0 %2660, %v2524
    %v2662 = vpop.permute.xlu0 %2661
    %2665 = vset.pattern.permute.xlu0 0
    %2666 = vperm.xlu0 %2665, %v2525
    %v2667 = vpop.permute.xlu0 %2666
    %v2669 = vmul.f32 %v2658, %v2662
    %v2670 = vmul.f32 %v2658, %v2667
    %v2671 = vlaneseq
    %v2672 = vshrl.u32 %v2671, 7
    %v2673 = vsub.s32 1, %v2672
    %v2674 = vrot.slane %v2047, %v2673
    %2675 = vset.pattern.permute.xlu0 1
    %2676 = vperm.xlu0 %2675, %v2524
    %v2677 = vpop.permute.xlu0 %2676
    %2679 = vset.pattern.permute.xlu0 1
    %2680 = vperm.xlu0 %2679, %v2525
    %v2681 = vpop.permute.xlu0 %2680
    %v2683 = vmul.f32 %v2674, %v2677
    %v2684 = vmul.f32 %v2674, %v2681
    %v2685 = vlaneseq
    %v2686 = vshrl.u32 %v2685, 7
    %v2687 = vsub.s32 2, %v2686
    %v2688 = vrot.slane %v2047, %v2687
    %2689 = vset.pattern.permute.xlu0 2
    %2690 = vperm.xlu0 %2689, %v2524
    %v2691 = vpop.permute.xlu0 %2690
    %2693 = vset.pattern.permute.xlu0 2
    %2694 = vperm.xlu0 %2693, %v2525
    %v2695 = vpop.permute.xlu0 %2694
    %v2697 = vmul.f32 %v2688, %v2691
    %v2698 = vmul.f32 %v2688, %v2695
    %v2699 = vlaneseq
    %v2700 = vshrl.u32 %v2699, 7
    %v2701 = vsub.s32 3, %v2700
    %v2702 = vrot.slane %v2047, %v2701
    %2703 = vset.pattern.permute.xlu0 3
    %2704 = vperm.xlu0 %2703, %v2524
    %v2705 = vpop.permute.xlu0 %2704
    %2707 = vset.pattern.permute.xlu0 3
    %2708 = vperm.xlu0 %2707, %v2525
    %v2709 = vpop.permute.xlu0 %2708
    %v2711 = vmul.f32 %v2702, %v2705
    %v2712 = vmul.f32 %v2702, %v2709
    %v2713 = vlaneseq
    %v2714 = vshrl.u32 %v2713, 7
    %v2715 = vsub.s32 4, %v2714
    %v2716 = vrot.slane %v2047, %v2715
    %2717 = vset.pattern.permute.xlu0 4
    %2718 = vperm.xlu0 %2717, %v2524
    %v2719 = vpop.permute.xlu0 %2718
    %2721 = vset.pattern.permute.xlu0 4
    %2722 = vperm.xlu0 %2721, %v2525
    %v2723 = vpop.permute.xlu0 %2722
    %v2725 = vmul.f32 %v2716, %v2719
    %v2726 = vmul.f32 %v2716, %v2723
    %v2727 = vlaneseq
    %v2728 = vshrl.u32 %v2727, 7
    %v2729 = vsub.s32 5, %v2728
    %v2730 = vrot.slane %v2047, %v2729
    %2731 = vset.pattern.permute.xlu0 5
    %2732 = vperm.xlu0 %2731, %v2524
    %v2733 = vpop.permute.xlu0 %2732
    %2735 = vset.pattern.permute.xlu0 5
    %2736 = vperm.xlu0 %2735, %v2525
    %v2737 = vpop.permute.xlu0 %2736
    %v2739 = vmul.f32 %v2730, %v2733
    %v2740 = vmul.f32 %v2730, %v2737
    %v2741 = vlaneseq
    %v2742 = vshrl.u32 %v2741, 7
    %v2743 = vsub.s32 6, %v2742
    %v2744 = vrot.slane %v2047, %v2743
    %2745 = vset.pattern.permute.xlu0 6
    %2746 = vperm.xlu0 %2745, %v2524
    %v2747 = vpop.permute.xlu0 %2746
    %2749 = vset.pattern.permute.xlu0 6
    %2750 = vperm.xlu0 %2749, %v2525
    %v2751 = vpop.permute.xlu0 %2750
    %v2753 = vmul.f32 %v2744, %v2747
    %v2754 = vmul.f32 %v2744, %v2751
    %v2755 = vlaneseq
    %v2756 = vshrl.u32 %v2755, 7
    %v2757 = vsub.s32 7, %v2756
    %v2758 = vrot.slane %v2047, %v2757
    %2759 = vset.pattern.permute.xlu0 7
    %2760 = vperm.xlu0 %2759, %v2524
    %v2761 = vpop.permute.xlu0 %2760
    %2763 = vset.pattern.permute.xlu0 7
    %2764 = vperm.xlu0 %2763, %v2525
    %v2765 = vpop.permute.xlu0 %2764
    %v2767 = vmul.f32 %v2758, %v2761
    %v2768 = vmul.f32 %v2758, %v2765
    %v2769 = vmul.f32 %v2582, 0.0
    %v2770 = vmul.f32 %v2584, 0.0
    %v2771 = vadd.f32 %v2769, %v2669
    %v2772 = vadd.f32 %v2770, %v2670
    %2774 = vset.pattern.permute.xlu0 0
    %2775 = vperm.xlu0 %2774, %v2559
    %v2776 = vpop.permute.xlu0 %2775
    %2779 = vset.pattern.permute.xlu0 0
    %2780 = vperm.xlu0 %2779, %v2560
    %v2781 = vpop.permute.xlu0 %2780
    %v2783 = vmul.f32 %v2771, %v2776
    %v2784 = vmul.f32 %v2772, %v2781
    %v2785 = vsel %vm440, %v2783, 0.0
    %v2786 = vsel %vm440, %v2784, 0.0
    %v2787 = vadd.f32 %v2785, %v2786
    %v2788 = vrot.slane %v2787, 4
    %v2789 = vadd.f32 %v2787, %v2788
    %v2790 = vrot.slane %v2789, 2
    %v2791 = vadd.f32 %v2789, %v2790
    %v2792 = vrot.slane %v2791, 1
    %v2793 = vadd.f32 %v2791, %v2792
    %v2794 = vmul.f32 %v2592, %v2771
    %v2795 = vmul.f32 %v2594, %v2772
    %v2796 = vadd.f32 %v2794, %v2683
    %v2797 = vadd.f32 %v2795, %v2684
    %2798 = vset.pattern.permute.xlu0 1
    %2799 = vperm.xlu0 %2798, %v2559
    %v2800 = vpop.permute.xlu0 %2799
    %2802 = vset.pattern.permute.xlu0 1
    %2803 = vperm.xlu0 %2802, %v2560
    %v2804 = vpop.permute.xlu0 %2803
    %v2806 = vmul.f32 %v2796, %v2800
    %v2807 = vmul.f32 %v2797, %v2804
    %v2808 = vsel %vm440, %v2806, 0.0
    %v2809 = vsel %vm440, %v2807, 0.0
    %v2810 = vadd.f32 %v2808, %v2809
    %v2811 = vrot.slane %v2810, 4
    %v2812 = vadd.f32 %v2810, %v2811
    %v2813 = vrot.slane %v2812, 2
    %v2814 = vadd.f32 %v2812, %v2813
    %v2815 = vrot.slane %v2814, 1
    %v2816 = vadd.f32 %v2814, %v2815
    %v2817 = vmul.f32 %v2602, %v2796
    %v2818 = vmul.f32 %v2604, %v2797
    %v2819 = vadd.f32 %v2817, %v2697
    %v2820 = vadd.f32 %v2818, %v2698
    %2821 = vset.pattern.permute.xlu0 2
    %2822 = vperm.xlu0 %2821, %v2559
    %v2823 = vpop.permute.xlu0 %2822
    %2825 = vset.pattern.permute.xlu0 2
    %2826 = vperm.xlu0 %2825, %v2560
    %v2827 = vpop.permute.xlu0 %2826
    %v2829 = vmul.f32 %v2819, %v2823
    %v2830 = vmul.f32 %v2820, %v2827
    %v2831 = vsel %vm440, %v2829, 0.0
    %v2832 = vsel %vm440, %v2830, 0.0
    %v2833 = vadd.f32 %v2831, %v2832
    %v2834 = vrot.slane %v2833, 4
    %v2835 = vadd.f32 %v2833, %v2834
    %v2836 = vrot.slane %v2835, 2
    %v2837 = vadd.f32 %v2835, %v2836
    %v2838 = vrot.slane %v2837, 1
    %v2839 = vadd.f32 %v2837, %v2838
    %v2840 = vmul.f32 %v2612, %v2819
    %v2841 = vmul.f32 %v2614, %v2820
    %v2842 = vadd.f32 %v2840, %v2711
    %v2843 = vadd.f32 %v2841, %v2712
    %2844 = vset.pattern.permute.xlu0 3
    %2845 = vperm.xlu0 %2844, %v2559
    %v2846 = vpop.permute.xlu0 %2845
    %2848 = vset.pattern.permute.xlu0 3
    %2849 = vperm.xlu0 %2848, %v2560
    %v2850 = vpop.permute.xlu0 %2849
    %v2852 = vmul.f32 %v2842, %v2846
    %v2853 = vmul.f32 %v2843, %v2850
    %v2854 = vsel %vm440, %v2852, 0.0
    %v2855 = vsel %vm440, %v2853, 0.0
    %v2856 = vadd.f32 %v2854, %v2855
    %v2857 = vrot.slane %v2856, 4
    %v2858 = vadd.f32 %v2856, %v2857
    %v2859 = vrot.slane %v2858, 2
    %v2860 = vadd.f32 %v2858, %v2859
    %v2861 = vrot.slane %v2860, 1
    %v2862 = vadd.f32 %v2860, %v2861
    %v2863 = vmul.f32 %v2622, %v2842
    %v2864 = vmul.f32 %v2624, %v2843
    %v2865 = vadd.f32 %v2863, %v2725
    %v2866 = vadd.f32 %v2864, %v2726
    %2867 = vset.pattern.permute.xlu0 4
    %2868 = vperm.xlu0 %2867, %v2559
    %v2869 = vpop.permute.xlu0 %2868
    %2871 = vset.pattern.permute.xlu0 4
    %2872 = vperm.xlu0 %2871, %v2560
    %v2873 = vpop.permute.xlu0 %2872
    %v2875 = vmul.f32 %v2865, %v2869
    %v2876 = vmul.f32 %v2866, %v2873
    %v2877 = vsel %vm440, %v2875, 0.0
    %v2878 = vsel %vm440, %v2876, 0.0
    %v2879 = vadd.f32 %v2877, %v2878
    %v2880 = vrot.slane %v2879, 4
    %v2881 = vadd.f32 %v2879, %v2880
    %v2882 = vrot.slane %v2881, 2
    %v2883 = vadd.f32 %v2881, %v2882
    %v2884 = vrot.slane %v2883, 1
    %v2885 = vadd.f32 %v2883, %v2884
    %v2886 = vmul.f32 %v2632, %v2865
    %v2887 = vmul.f32 %v2634, %v2866
    %v2888 = vadd.f32 %v2886, %v2739
    %v2889 = vadd.f32 %v2887, %v2740
    %2890 = vset.pattern.permute.xlu0 5
    %2891 = vperm.xlu0 %2890, %v2559
    %v2892 = vpop.permute.xlu0 %2891
    %2894 = vset.pattern.permute.xlu0 5
    %2895 = vperm.xlu0 %2894, %v2560
    %v2896 = vpop.permute.xlu0 %2895
    %v2898 = vmul.f32 %v2888, %v2892
    %v2899 = vmul.f32 %v2889, %v2896
    %v2900 = vsel %vm440, %v2898, 0.0
    %v2901 = vsel %vm440, %v2899, 0.0
    %v2902 = vadd.f32 %v2900, %v2901
    %v2903 = vrot.slane %v2902, 4
    %v2904 = vadd.f32 %v2902, %v2903
    %v2905 = vrot.slane %v2904, 2
    %v2906 = vadd.f32 %v2904, %v2905
    %v2907 = vrot.slane %v2906, 1
    %v2908 = vadd.f32 %v2906, %v2907
    %v2909 = vmul.f32 %v2642, %v2888
    %v2910 = vmul.f32 %v2644, %v2889
    %v2911 = vadd.f32 %v2909, %v2753
    %v2912 = vadd.f32 %v2910, %v2754
    %2913 = vset.pattern.permute.xlu0 6
    %2914 = vperm.xlu0 %2913, %v2559
    %v2915 = vpop.permute.xlu0 %2914
    %2917 = vset.pattern.permute.xlu0 6
    %2918 = vperm.xlu0 %2917, %v2560
    %v2919 = vpop.permute.xlu0 %2918
    %v2921 = vmul.f32 %v2911, %v2915
    %v2922 = vmul.f32 %v2912, %v2919
    %v2923 = vsel %vm440, %v2921, 0.0
    %v2924 = vsel %vm440, %v2922, 0.0
    %v2925 = vadd.f32 %v2923, %v2924
    %v2926 = vrot.slane %v2925, 4
    %v2927 = vadd.f32 %v2925, %v2926
    %v2928 = vrot.slane %v2927, 2
    %v2929 = vadd.f32 %v2927, %v2928
    %v2930 = vrot.slane %v2929, 1
    %v2931 = vadd.f32 %v2929, %v2930
    %v2932 = vmul.f32 %v2652, %v2911
    %v2933 = vmul.f32 %v2654, %v2912
    %v2934 = vadd.f32 %v2932, %v2767
    %v2935 = vadd.f32 %v2933, %v2768
    %2936 = vset.pattern.permute.xlu0 7
    %2937 = vperm.xlu0 %2936, %v2559
    %v2938 = vpop.permute.xlu0 %2937
    %2940 = vset.pattern.permute.xlu0 7
    %2941 = vperm.xlu0 %2940, %v2560
    %v2942 = vpop.permute.xlu0 %2941
    %v2944 = vmul.f32 %v2934, %v2938
    %v2945 = vmul.f32 %v2935, %v2942
    %v2946 = vsel %vm440, %v2944, 0.0
    %v2947 = vsel %vm440, %v2945, 0.0
    %v2948 = vadd.f32 %v2946, %v2947
    %v2949 = vrot.slane %v2948, 4
    %v2950 = vadd.f32 %v2948, %v2949
    %v2951 = vrot.slane %v2950, 2
    %v2952 = vadd.f32 %v2950, %v2951
    %v2953 = vrot.slane %v2952, 1
    %v2954 = vadd.f32 %v2952, %v2953
    %v2955 = vsel %vm407, %v2793, %v2816
    %v2956 = vsel %vm392, %v2955, %v2839
    %v2957 = vsel %vm377, %v2956, %v2862
    %v2958 = vsel %vm1058, %v2957, %v2885
    %v2959 = vsel %vm1060, %v2958, %v2908
    %v2960 = vsel %vm1062, %v2959, %v2931
    %v2961 = vsel %vm1064, %v2960, %v2954
    %v2962 = vlaneseq
    %v2963 = vshrl.u32 %v2962, 7
    %v2964 = vsub.s32 0, %v2963
    %v2965 = vrot.slane %v2031, %v2964
    %v2966 = vmul.f32 %v2965, %v1871
    %v2967 = vmul.f32 %v2965, %v1872
    %v2968 = vadd.f32 %v2504, %v2966
    %v2969 = vadd.f32 %v2961, %v2967
    %2972 = vrot.lane.b32.xlu0 %v2044, 64
    %v2973 = vpop.permute.xlu0 %2972
    %2974 = vrot.lane.b32.xlu0 %v2045, 64
    %v2975 = vpop.permute.xlu0 %2974
    %v2978 = vmul.f32 %v2968, %v2973
    %v2979 = vmul.f32 %v2969, %v2975
    %s2980 = scalar_lea.vmem %s13, 64
    %v2981 = vld [vmem:[%s2980] sm:$0xff]
    %v2982 = vld [vmem:[%s2980 + $0x8] sm:$0xff]
    %v2983 = vld [vmem:[%s2980 + $0x10] sm:$0xff]
    %v2984 = vld [vmem:[%s2980 + $0x18] sm:$0xff]
    %v2985 = vld [vmem:[%s2980 + $0x20] sm:$0xff]
    %v2986 = vld [vmem:[%s2980 + $0x28] sm:$0xff]
    %v2987 = vld [vmem:[%s2980 + $0x30] sm:$0xff]
    %v2988 = vld [vmem:[%s2980 + $0x38] sm:$0xff]
    %v2990 = vsel %vm440, %v2978, 0
    %v2993 = vsel %vm440, %v2979, 0
    %2995 = vmatprep.subr.mxu0 0.0
    %2996 = vmatpush1.msra.mxu0 0.0
    %2997 = vmatprep.subr.mxu0 0.0
    %2998 = vmatpush1.msra.mxu0 0.0
    %2999 = vmatprep.subr.mxu0 0.0
    %3000 = vmatpush1.msra.mxu0 0.0
    %3001 = vmatprep.subr.mxu0 0.0
    %3002 = vmatpush1.msra.mxu0 0.0
    %3003 = vmatprep.subr.mxu0 0.0
    %3004 = vmatpush1.msra.mxu0 0.0
    %3005 = vmatprep.subr.mxu0 0.0
    %3006 = vmatpush1.msra.mxu0 0.0
    %3007 = vmatprep.subr.mxu0 0.0
    %3008 = vmatpush1.msra.mxu0 0.0
    %3009 = vmatprep.subr.mxu0 0.0
    %3010 = vmatpush1.msra.mxu0 0.0
    %3011 = vmatprep.subr.mxu0 0.0
    %3012 = vmatpush1.msra.mxu0 %v2988
    %3013 = vmatprep.subr.mxu0 0.0
    %3014 = vmatpush1.msra.mxu0 %v2987
    %3015 = vmatprep.subr.mxu0 0.0
    %3016 = vmatpush1.msra.mxu0 %v2986
    %3017 = vmatprep.subr.mxu0 0.0
    %3018 = vmatpush1.msra.mxu0 %v2985
    %3019 = vmatprep.subr.mxu0 0.0
    %3020 = vmatpush1.msra.mxu0 %v2984
    %3021 = vmatprep.subr.mxu0 0.0
    %3022 = vmatpush1.msra.mxu0 %v2983
    %3023 = vmatprep.subr.mxu0 0.0
    %3024 = vmatpush1.msra.mxu0 %v2982
    %3025 = vmatprep.subr.mxu0 0.0
    %3026 = vmatpush1.msra.mxu0 %v2981
    %3027 = vmatprep.subr.mxu0 0.0
    %3028 = vmatpush2.msra.mxu0 0.0
    %3029 = vmatprep.subr.mxu0 0.0
    %3030 = vmatpush2.msra.mxu0 0.0
    %3031 = vmatprep.subr.mxu0 0.0
    %3032 = vmatpush2.msra.mxu0 0.0
    %3033 = vmatprep.subr.mxu0 0.0
    %3034 = vmatpush2.msra.mxu0 0.0
    %3035 = vmatprep.subr.mxu0 0.0
    %3036 = vmatpush2.msra.mxu0 0.0
    %3037 = vmatprep.subr.mxu0 0.0
    %3038 = vmatpush2.msra.mxu0 0.0
    %3039 = vmatprep.subr.mxu0 0.0
    %3040 = vmatpush2.msra.mxu0 0.0
    %3041 = vmatprep.subr.mxu0 0.0
    %3042 = vmatpush2.msra.mxu0 0.0
    %3043 = vmatprep.subr.mxu0 0.0
    %3044 = vmatpush2.msra.mxu0 0.0
    %3045 = vmatprep.subr.mxu0 0.0
    %3046 = vmatpush2.msra.mxu0 0.0
    %3047 = vmatprep.subr.mxu0 0.0
    %3048 = vmatpush2.msra.mxu0 0.0
    %3049 = vmatprep.subr.mxu0 0.0
    %3050 = vmatpush2.msra.mxu0 0.0
    %3051 = vmatprep.subr.mxu0 0.0
    %3052 = vmatpush2.msra.mxu0 0.0
    %3053 = vmatprep.subr.mxu0 0.0
    %3054 = vmatpush2.msra.mxu0 0.0
    %3055 = vmatprep.subr.mxu0 0.0
    %3056 = vmatpush2.msra.mxu0 0.0
    %3057 = vmatprep.subr.mxu0 0.0
    %3058 = vmatpush2.msra.mxu0 0.0
    %3059 = vmatprep.mubr.f32.mxu0 0.0
    %3060 = vmatmul.mubr.f32.gmra.mxu0 %v2990
    %v3061 = vpop.f32.mrf.mxu0
    %v3062 = vadd.f32 0.0, %v3061
    %v3063 = vpop.f32.mrf.mxu0
    %3064 = vmatprep.mubr.f32.mxu0 0.0
    %3065 = vmatmul.mubr.f32.gmra.mxu0 %v2993
    %v3066 = vpop.f32.mrf.mxu0
    %v3067 = vadd.f32 0.0, %v3066
    %v3068 = vpop.f32.mrf.mxu0
    %3069 = vdwg.mxu0
    %v3070 = vadd.f32 %v1671, %v3062
    %v3071 = vadd.f32 %v1673, %v3067
    %v3072 = vld [vmem:[%s14] sm:$0xff]
    %v3073 = vld [vmem:[%s14 + $0x8] sm:$0xff]
    %v3074 = vld [vmem:[%s14 + $0x10] sm:$0xff]
    %v3075 = vld [vmem:[%s14 + $0x18] sm:$0xff]
    %v3076 = vld [vmem:[%s15] sm:$0x1]
    %v3078 = vlaneseq
    %v3079 = vshrl.u32 %v3078, 7
    %v3080 = vsub.s32 0, %v3079
    %v3081 = vrot.slane %v3076, %v3080
    %v3084 = vsel %vm208, %v3070, 0
    %v3087 = vsel %vm208, %v3071, 0
    %3089 = vmatprep.subr.mxu0 0.0
    %3090 = vmatpush1.msra.mxu0 0.0
    %3091 = vmatprep.subr.mxu0 0.0
    %3092 = vmatpush1.msra.mxu0 0.0
    %3093 = vmatprep.subr.mxu0 0.0
    %3094 = vmatpush1.msra.mxu0 0.0
    %3095 = vmatprep.subr.mxu0 0.0
    %3096 = vmatpush1.msra.mxu0 0.0
    %3097 = vmatprep.subr.mxu0 0.0
    %3098 = vmatpush1.msra.mxu0 0.0
    %3099 = vmatprep.subr.mxu0 0.0
    %3100 = vmatpush1.msra.mxu0 0.0
    %3101 = vmatprep.subr.mxu0 0.0
    %3102 = vmatpush1.msra.mxu0 0.0
    %3103 = vmatprep.subr.mxu0 0.0
    %3104 = vmatpush1.msra.mxu0 0.0
    %3105 = vmatprep.subr.mxu0 0.0
    %3106 = vmatpush1.msra.mxu0 0.0
    %3107 = vmatprep.subr.mxu0 0.0
    %3108 = vmatpush1.msra.mxu0 0.0
    %3109 = vmatprep.subr.mxu0 0.0
    %3110 = vmatpush1.msra.mxu0 0.0
    %3111 = vmatprep.subr.mxu0 0.0
    %3112 = vmatpush1.msra.mxu0 0.0
    %3113 = vmatprep.subr.mxu0 0.0
    %3114 = vmatpush1.msra.mxu0 %v3075
    %3115 = vmatprep.subr.mxu0 0.0
    %3116 = vmatpush1.msra.mxu0 %v3074
    %3117 = vmatprep.subr.mxu0 0.0
    %3118 = vmatpush1.msra.mxu0 %v3073
    %3119 = vmatprep.subr.mxu0 0.0
    %3120 = vmatpush1.msra.mxu0 %v3072
    %3121 = vmatprep.subr.mxu0 0.0
    %3122 = vmatpush2.msra.mxu0 0.0
    %3123 = vmatprep.subr.mxu0 0.0
    %3124 = vmatpush2.msra.mxu0 0.0
    %3125 = vmatprep.subr.mxu0 0.0
    %3126 = vmatpush2.msra.mxu0 0.0
    %3127 = vmatprep.subr.mxu0 0.0
    %3128 = vmatpush2.msra.mxu0 0.0
    %3129 = vmatprep.subr.mxu0 0.0
    %3130 = vmatpush2.msra.mxu0 0.0
    %3131 = vmatprep.subr.mxu0 0.0
    %3132 = vmatpush2.msra.mxu0 0.0
    %3133 = vmatprep.subr.mxu0 0.0
    %3134 = vmatpush2.msra.mxu0 0.0
    %3135 = vmatprep.subr.mxu0 0.0
    %3136 = vmatpush2.msra.mxu0 0.0
    %3137 = vmatprep.subr.mxu0 0.0
    %3138 = vmatpush2.msra.mxu0 0.0
    %3139 = vmatprep.subr.mxu0 0.0
    %3140 = vmatpush2.msra.mxu0 0.0
    %3141 = vmatprep.subr.mxu0 0.0
    %3142 = vmatpush2.msra.mxu0 0.0
    %3143 = vmatprep.subr.mxu0 0.0
    %3144 = vmatpush2.msra.mxu0 0.0
    %3145 = vmatprep.subr.mxu0 0.0
    %3146 = vmatpush2.msra.mxu0 0.0
    %3147 = vmatprep.subr.mxu0 0.0
    %3148 = vmatpush2.msra.mxu0 0.0
    %3149 = vmatprep.subr.mxu0 0.0
    %3150 = vmatpush2.msra.mxu0 0.0
    %3151 = vmatprep.subr.mxu0 0.0
    %3152 = vmatpush2.msra.mxu0 0.0
    %3153 = vmatprep.mubr.f32.mxu0 0.0
    %3154 = vmatmul.mubr.f32.gmra.mxu0 %v3084
    %v3155 = vpop.f32.mrf.mxu0
    %v3156 = vadd.f32 %v3081, %v3155
    %v3157 = vpop.f32.mrf.mxu0
    %3158 = vmatprep.mubr.f32.mxu0 0.0
    %3159 = vmatmul.mubr.f32.gmra.mxu0 %v3087
    %v3160 = vpop.f32.mrf.mxu0
    %v3161 = vadd.f32 %v3081, %v3160
    %v3162 = vpop.f32.mrf.mxu0
    %3163 = vdwg.mxu0
    %v3164 = vmax.f32 %v3156, 0.0
    %v3165 = vmax.f32 %v3161, 0.0
    %v3166 = vld [vmem:[%s16] sm:$0xff]
    %v3167 = vld [vmem:[%s16 + $0x8] sm:$0xff]
    %v3168 = vld [vmem:[%s16 + $0x10] sm:$0xff]
    %v3169 = vld [vmem:[%s16 + $0x18] sm:$0xff]
    %v3170 = vld [vmem:[%s16 + $0x20] sm:$0xff]
    %v3171 = vld [vmem:[%s16 + $0x28] sm:$0xff]
    %v3172 = vld [vmem:[%s16 + $0x30] sm:$0xff]
    %v3173 = vld [vmem:[%s16 + $0x38] sm:$0xff]
    %v3174 = vld [vmem:[%s16 + $0x40] sm:$0xff]
    %v3175 = vld [vmem:[%s16 + $0x48] sm:$0xff]
    %v3176 = vld [vmem:[%s16 + $0x50] sm:$0xff]
    %v3177 = vld [vmem:[%s16 + $0x58] sm:$0xff]
    %v3178 = vld [vmem:[%s16 + $0x60] sm:$0xff]
    %v3179 = vld [vmem:[%s16 + $0x68] sm:$0xff]
    %v3180 = vld [vmem:[%s16 + $0x70] sm:$0xff]
    %v3181 = vld [vmem:[%s16 + $0x78] sm:$0xff]
    %v3182 = vld [vmem:[%s17] sm:$0x3]
    %v3184 = vlaneseq
    %v3185 = vshrl.u32 %v3184, 7
    %v3186 = vsub.s32 0, %v3185
    %v3187 = vrot.slane %v3182, %v3186
    %v3188 = vlaneseq
    %v3189 = vshrl.u32 %v3188, 7
    %v3190 = vsub.s32 1, %v3189
    %v3191 = vrot.slane %v3182, %v3190
    %v3195 = vsel %vm440, %v3164, 0
    %v3198 = vsel %vm440, %v3165, 0
    %3200 = vmatprep.subr.mxu0 0.0
    %3201 = vmatpush1.msra.mxu0 0.0
    %3202 = vmatprep.subr.mxu0 0.0
    %3203 = vmatpush1.msra.mxu0 0.0
    %3204 = vmatprep.subr.mxu0 0.0
    %3205 = vmatpush1.msra.mxu0 0.0
    %3206 = vmatprep.subr.mxu0 0.0
    %3207 = vmatpush1.msra.mxu0 0.0
    %3208 = vmatprep.subr.mxu0 0.0
    %3209 = vmatpush1.msra.mxu0 0.0
    %3210 = vmatprep.subr.mxu0 0.0
    %3211 = vmatpush1.msra.mxu0 0.0
    %3212 = vmatprep.subr.mxu0 0.0
    %3213 = vmatpush1.msra.mxu0 0.0
    %3214 = vmatprep.subr.mxu0 0.0
    %3215 = vmatpush1.msra.mxu0 0.0
    %3216 = vmatprep.subr.mxu0 %v3181
    %3217 = vmatpush1.msra.mxu0 %v3180
    %3218 = vmatprep.subr.mxu0 %v3179
    %3219 = vmatpush1.msra.mxu0 %v3178
    %3220 = vmatprep.subr.mxu0 %v3177
    %3221 = vmatpush1.msra.mxu0 %v3176
    %3222 = vmatprep.subr.mxu0 %v3175
    %3223 = vmatpush1.msra.mxu0 %v3174
    %3224 = vmatprep.subr.mxu0 %v3173
    %3225 = vmatpush1.msra.mxu0 %v3172
    %3226 = vmatprep.subr.mxu0 %v3171
    %3227 = vmatpush1.msra.mxu0 %v3170
    %3228 = vmatprep.subr.mxu0 %v3169
    %3229 = vmatpush1.msra.mxu0 %v3168
    %3230 = vmatprep.subr.mxu0 %v3167
    %3231 = vmatpush1.msra.mxu0 %v3166
    %3232 = vmatprep.subr.mxu0 0.0
    %3233 = vmatpush2.msra.mxu0 0.0
    %3234 = vmatprep.subr.mxu0 0.0
    %3235 = vmatpush2.msra.mxu0 0.0
    %3236 = vmatprep.subr.mxu0 0.0
    %3237 = vmatpush2.msra.mxu0 0.0
    %3238 = vmatprep.subr.mxu0 0.0
    %3239 = vmatpush2.msra.mxu0 0.0
    %3240 = vmatprep.subr.mxu0 0.0
    %3241 = vmatpush2.msra.mxu0 0.0
    %3242 = vmatprep.subr.mxu0 0.0
    %3243 = vmatpush2.msra.mxu0 0.0
    %3244 = vmatprep.subr.mxu0 0.0
    %3245 = vmatpush2.msra.mxu0 0.0
    %3246 = vmatprep.subr.mxu0 0.0
    %3247 = vmatpush2.msra.mxu0 0.0
    %3248 = vmatprep.subr.mxu0 0.0
    %3249 = vmatpush2.msra.mxu0 0.0
    %3250 = vmatprep.subr.mxu0 0.0
    %3251 = vmatpush2.msra.mxu0 0.0
    %3252 = vmatprep.subr.mxu0 0.0
    %3253 = vmatpush2.msra.mxu0 0.0
    %3254 = vmatprep.subr.mxu0 0.0
    %3255 = vmatpush2.msra.mxu0 0.0
    %3256 = vmatprep.subr.mxu0 0.0
    %3257 = vmatpush2.msra.mxu0 0.0
    %3258 = vmatprep.subr.mxu0 0.0
    %3259 = vmatpush2.msra.mxu0 0.0
    %3260 = vmatprep.subr.mxu0 0.0
    %3261 = vmatpush2.msra.mxu0 0.0
    %3262 = vmatprep.subr.mxu0 0.0
    %3263 = vmatpush2.msra.mxu0 0.0
    %3264 = vmatprep.mubr.f32.mxu0 0.0
    %3265 = vmatmul.mubr.f32.gmra.mxu0 %v3195
    %v3266 = vpop.f32.mrf.mxu0
    %v3267 = vadd.f32 %v3187, %v3266
    %v3268 = vpop.f32.mrf.mxu0
    %v3269 = vadd.f32 %v3191, %v3268
    %3270 = vmatprep.mubr.f32.mxu0 0.0
    %3271 = vmatmul.mubr.f32.gmra.mxu0 %v3198
    %v3272 = vpop.f32.mrf.mxu0
    %v3273 = vadd.f32 %v3187, %v3272
    %v3274 = vpop.f32.mrf.mxu0
    %v3275 = vadd.f32 %v3191, %v3274
    %3276 = vdwg.mxu0
    %3277 = vst [vmem:[#allocation2] sm:$0xff] %v3267
    %3278 = vst [vmem:[#allocation2 + $0x8] sm:$0xff] %v3269
    %3279 = vst [vmem:[#allocation2 + $0x10] sm:$0xff] %v3273
    %3280 = vst [vmem:[#allocation2 + $0x18] sm:$0xff] %v3275
    // Predicated region
    $region74: #{transformer_model_forward.1} parent=1 // pred_check
      _
    $region75: #{transformer_model_forward.1} parent=1 // pred_check_branch
      %3282 = sbr.rel (0) target = $region77
    $region76: #{transformer_model_forward.1} parent=1 // pred_region
      %s3284 = ssub.s32 512, 512
      %3285 = vsyncadd [#allocation3], %s3284
      %s3286 = sshll.u32 [#allocation2], 4
      %s3287 = int_to_ptr.vmem [resolvable:$true] %s3286
      %3292 = dma.vmem_to_hbm [thread:$0]  %s3287, 512, %s18, [#allocation3], 256, 256, 16
    $region77: #{transformer_model_forward.1} parent=1 // pred_fallthru
      _
    // Predicated region
    $region78: #{transformer_model_forward.1} parent=1 // pred_check
      _
    $region79: #{transformer_model_forward.1} parent=1 // pred_check_branch
      %3294 = sbr.rel (0) target = $region81
    $region80: #{transformer_model_forward.1} parent=1 // pred_region
      %3295 = dma.done [#allocation3], 512
    $region81: #{transformer_model_forward.1} parent=1 // pred_fallthru
      _
    %3296 = vsyncpa [#allocation3], 1

</llo_original>
